<compile_context>
chip_gen: v7x
topology: tpu7x:2x2x1
jax: 0.10.0
libtpu: 0.0.40
codegen_flags: <defaults>
</compile_context>

<pallas_src>
import functools

import jax
import jax.numpy as jnp
from jax import lax
from jax.experimental import pallas as pl
from jax.experimental.pallas import tpu as pltpu


def _attention_kernel(x_ref, wq_ref, wk_ref, wv_ref, ahat_ref, wo_ref, bout_ref,
                      o_ref, *, heads, dim_head, scale):
    bt, n, dim = x_ref.shape

    # (bt, n, dim) -> (bt*n, dim): leading-dim collapse; native dtype feeds the MXU.
    x2 = x_ref[...].reshape(bt * n, dim)

    # Hoist the A_hat broadcast out of the head loop (JAX does not CSE broadcasts).
    ahat_b = jnp.broadcast_to(
        ahat_ref[...].astype(jnp.float32)[None, :, :], (bt, n, n))

    # Running f32 accumulator for the merged-head output projection (bias folded in).
    y = jnp.broadcast_to(bout_ref[...].astype(jnp.float32), (bt * n, dim))

    for h in range(heads):                            # static unroll (heads is small)
        wq_h = wq_ref[h]                              # (dim_head, dim), PyTorch layout
        wk_h = wk_ref[h]
        wv_h = wv_ref[h]
        wo_h = wo_ref[h]                              # (dim, dim_head)

        # Per-head projections: contract the trailing 'in' dims (trans_b style),
        # f32 accumulation on the MXU. No lane-dimension slicing anywhere.
        q_h = lax.dot_general(x2, wq_h, (((1,), (1,)), ((), ())),
                              preferred_element_type=jnp.float32)
        k_h = lax.dot_general(x2, wk_h, (((1,), (1,)), ((), ())),
                              preferred_element_type=jnp.float32)
        v_h = lax.dot_general(x2, wv_h, (((1,), (1,)), ((), ())),
                              preferred_element_type=jnp.float32)

        # bf16 operands for the attention matmuls (scale folded into q).
        q_h = (q_h * scale).reshape(bt, n, dim_head).astype(jnp.bfloat16)
        k_h = k_h.reshape(bt, n, dim_head).astype(jnp.bfloat16)
        v_h = v_h.reshape(bt, n, dim_head).astype(jnp.bfloat16)

        # Scores + softmax (statistics stay in f32).
        dots = jnp.einsum('bnd,bmd->bnm', q_h, k_h,
                          preferred_element_type=jnp.float32)          # (bt, n, n)
        m = jnp.max(dots, axis=-1, keepdims=True)
        e = jnp.exp(dots - m)
        denom = jnp.sum(e, axis=-1, keepdims=True)
        attn = e * pl.reciprocal(denom, approx=True) + ahat_b           # (bt, n, n)

        out_h = jnp.einsum('bnm,bmd->bnd', attn.astype(jnp.bfloat16), v_h,
                           preferred_element_type=jnp.float32)          # (bt, n, d)

        # Head merge as an MXU accumulate against the per-head output weight.
        y = y + lax.dot_general(
            out_h.reshape(bt * n, dim_head).astype(wo_h.dtype), wo_h,
            (((1,), (1,)), ((), ())), preferred_element_type=jnp.float32)

    o_ref[...] = y.reshape(bt, n, dim).astype(o_ref.dtype)


def _normalized_adjacency(adj):
    """A_hat = D^-1/2 (ceil(adj) + I) D^-1/2  — tiny n x n glue, computed once."""
    n = adj.shape[0]
    A = jnp.ceil(adj) + jnp.eye(n, dtype=adj.dtype)
    d_inv_sqrt = jnp.sum(A, axis=1) ** -0.5
    D_hat = jnp.diag(d_inv_sqrt)
    return D_hat @ (A @ D_hat)


def _pick_batch_tile(B, n):
    """~2048 token rows per grid step, at least 2 grid steps (megacore/pipeline),
    and prefer bt*n to be a multiple of 256 (v6e/v7x MXU width)."""
    max_bt = max(1, 2048 // max(n, 1))
    if B >= 2:
        max_bt = min(max_bt, B // 2)          # keep >= 2 grid steps
    max_bt = max(1, min(max_bt, B))
    divisors = [d for d in range(1, max_bt + 1) if B % d == 0]
    aligned = [d for d in divisors if (d * n) % 256 == 0]
    pool = aligned if aligned else divisors
    return max(pool)


def _vmem_limit_bytes():
    """Generation-aware scoped-VMEM limit: 3/4 of physical capacity
    (~48 MiB on v7x, ~96 MiB on v5e/v6e)."""
    cap = 64 * 1024 * 1024                    # conservative fallback
    try:
        info = pltpu.get_tpu_info()
        cap = int(getattr(info, "vmem_capacity_bytes", cap)) or cap
    except Exception:
        pass
    return (cap * 3) // 4


def _imap2(i):
    return (0, 0)


def _imap3(i):
    return (0, 0, 0)


def attention_forward(x, adj, w_qkv, w_out, b_out, *, heads, dim_head, bt=None):
    """x: (B, n, dim); adj: (n, n);
    w_qkv: (3*heads*dim_head, dim)  (PyTorch nn.Linear layout, bias=False)
    w_out: (dim, heads*dim_head);   b_out: (dim,)."""
    B, n, dim = x.shape
    inner = heads * dim_head
    assert w_qkv.shape == (3 * inner, dim)
    assert w_out.shape == (dim, inner)
    scale = float(dim_head) ** -0.5

    if bt is None:
        bt = _pick_batch_tile(B, n)
    assert B % bt == 0, "batch must be divisible by the batch tile"

    # Per-head weight slices prepared once in the wrapper so the kernel only indexes
    # the leading (head) axis and never slices inside the 128-lane dimension.
    wq = w_qkv[:inner].reshape(heads, dim_head, dim)
    wk = w_qkv[inner:2 * inner].reshape(heads, dim_head, dim)
    wv = w_qkv[2 * inner:].reshape(heads, dim_head, dim)
    wo = w_out.reshape(dim, heads, dim_head).transpose(1, 0, 2)   # (heads, dim, dim_head)

    a_hat = _normalized_adjacency(adj).astype(jnp.float32)
    b_out2 = b_out.reshape(1, dim)

    kernel = functools.partial(_attention_kernel, heads=heads,
                               dim_head=dim_head, scale=scale)

    def run(single_buffer_residents):
        def resident(shape):
            imap = _imap3 if len(shape) == 3 else _imap2
            if single_buffer_residents:
                return pl.BlockSpec(shape, imap, pipeline_mode=pl.Buffered(1))
            return pl.BlockSpec(shape, imap)

        return pl.pallas_call(
            kernel,
            out_shape=jax.ShapeDtypeStruct((B, n, dim), x.dtype),
            grid_spec=pltpu.PrefetchScalarGridSpec(
                num_scalar_prefetch=0,
                grid=(B // bt,),
                in_specs=[
                    pl.BlockSpec((bt, n, dim), lambda i: (i, 0, 0)),   # x tile
                    resident((heads, dim_head, dim)),                  # Wq (resident)
                    resident((heads, dim_head, dim)),                  # Wk (resident)
                    resident((heads, dim_head, dim)),                  # Wv (resident)
                    resident((n, n)),                                  # A_hat (resident)
                    resident((heads, dim, dim_head)),                  # Wo (resident)
                    resident((1, dim)),                                # b_out (resident)
                ],
                out_specs=pl.BlockSpec((bt, n, dim), lambda i: (i, 0, 0)),
            ),
            compiler_params=pltpu.CompilerParams(
                dimension_semantics=("parallel",),
                vmem_limit_bytes=_vmem_limit_bytes(),
            ),
        )(x, wq, wk, wv, a_hat, wo, b_out2)

    try:
        return run(True)
    except Exception:
        # pl.Buffered(1) single-buffering unavailable -> default double-buffered specs.
        return run(False)


if __name__ == "__main__":
    # Small shapes consistent with the module (project_out=True since heads*dim_head mapping).
    batch, n, dim = 2, 16, 128
    heads, dim_head = 4, 32                  # inner_dim = 128
    inner = heads * dim_head

    key = jax.random.PRNGKey(0)
    kx, kadj, kqkv, kwo, kbo = jax.random.split(key, 5)

    x = jax.random.normal(kx, (batch, n, dim), dtype=jnp.float32)
    adj = jax.random.uniform(kadj, (n, n), dtype=jnp.float32)     # graph adjacency weights

    lim_qkv = 1.0 / (dim ** 0.5)
    lim_out = 1.0 / (inner ** 0.5)
    w_qkv = jax.random.uniform(kqkv, (3 * inner, dim), jnp.float32, -lim_qkv, lim_qkv)
    w_out = jax.random.uniform(kwo, (dim, inner), jnp.float32, -lim_out, lim_out)
    b_out = jax.random.uniform(kbo, (dim,), jnp.float32, -lim_out, lim_out)

    y = attention_forward(x, adj, w_qkv, w_out, b_out, heads=heads, dim_head=dim_head)
    jax.block_until_ready(y)

    # Pure-JAX reference of the same math (PyTorch semantics).
    qkv = x @ w_qkv.T
    q, k, v = jnp.split(qkv, 3, axis=-1)

    def split_heads(t):
        return t.reshape(batch, n, heads, dim_head).transpose(0, 2, 1, 3)

    q, k, v = map(split_heads, (q, k, v))
    dots = jnp.einsum('bhnd,bhmd->bhnm', q, k) * (dim_head ** -0.5)
    attn = jax.nn.softmax(dots, axis=-1)
    A = jnp.ceil(adj) + jnp.eye(n, dtype=jnp.float32)
    d_is = jnp.sum(A, axis=1) ** -0.5
    D_hat = jnp.diag(d_is)
    A_hat = D_hat @ (A @ D_hat)
    attn = attn + A_hat[None, None]
    out = jnp.einsum('bhnm,bhmd->bhnd', attn, v)
    out = out.transpose(0, 2, 1, 3).reshape(batch, n, inner)
    ref = out @ w_out.T + b_out

    assert y.shape == x.shape
    # bf16 MXU operands in the attention matmuls -> relaxed tolerance (expected,
    # per the performance review; not a correctness bug).
    err = float(jnp.max(jnp.abs(y - ref)))
    assert jnp.allclose(y, ref, atol=3e-2, rtol=3e-2), err
    print("KERNEL_OK")
</pallas_src>

<mosaic_0001>
module attributes {stable_mosaic.version = 11 : i64} {
  func.func @_attention_kernel(%arg0: i32, %arg1: memref<1x16x128xf32, #tpu.memory_space<vmem>>, %arg2: memref<4x32x128xf32, #tpu.memory_space<vmem>>, %arg3: memref<4x32x128xf32, #tpu.memory_space<vmem>>, %arg4: memref<4x32x128xf32, #tpu.memory_space<vmem>>, %arg5: memref<16x16xf32, #tpu.memory_space<vmem>>, %arg6: memref<4x128x32xf32, #tpu.memory_space<vmem>>, %arg7: memref<1x128xf32, #tpu.memory_space<vmem>>, %arg8: memref<1x16x128xf32, #tpu.memory_space<vmem>>) attributes {dimension_semantics = [#tpu.dimension_semantics<parallel>], iteration_bounds = array<i64: 2>, scalar_prefetch = 0 : i64, scratch_operands = 0 : i64, tpu.core_type = #tpu.core_type<tc>, window_params = [{transform_indices = @transform_0, window_bounds = array<i64: 1, 16, 128>}, {pipeline_mode = #tpu.pipeline_mode<synchronous>, transform_indices = @transform_1, window_bounds = array<i64: 4, 32, 128>}, {pipeline_mode = #tpu.pipeline_mode<synchronous>, transform_indices = @transform_2, window_bounds = array<i64: 4, 32, 128>}, {pipeline_mode = #tpu.pipeline_mode<synchronous>, transform_indices = @transform_3, window_bounds = array<i64: 4, 32, 128>}, {pipeline_mode = #tpu.pipeline_mode<synchronous>, transform_indices = @transform_4, window_bounds = array<i64: 16, 16>}, {pipeline_mode = #tpu.pipeline_mode<synchronous>, transform_indices = @transform_5, window_bounds = array<i64: 4, 128, 32>}, {pipeline_mode = #tpu.pipeline_mode<synchronous>, transform_indices = @transform_6, window_bounds = array<i64: 1, 128>}, {transform_indices = @transform_7, window_bounds = array<i64: 1, 16, 128>}]} {
    %c0 = arith.constant 0 : index
    %c0_0 = arith.constant 0 : index
    %c0_1 = arith.constant 0 : index
    %0 = vector.load %arg1[%c0, %c0_0, %c0_1] : memref<1x16x128xf32, #tpu.memory_space<vmem>>, vector<1x16x128xf32>
    %1 = vector.shape_cast %0 : vector<1x16x128xf32> to vector<16x128xf32>
    %c0_2 = arith.constant 0 : index
    %c0_3 = arith.constant 0 : index
    %2 = vector.load %arg5[%c0_2, %c0_3] : memref<16x16xf32, #tpu.memory_space<vmem>>, vector<16x16xf32>
    %3 = vector.shape_cast %2 : vector<16x16xf32> to vector<1x16x16xf32>
    %c0_4 = arith.constant 0 : index
    %c0_5 = arith.constant 0 : index
    %4 = vector.load %arg7[%c0_4, %c0_5] : memref<1x128xf32, #tpu.memory_space<vmem>>, vector<1x128xf32>
    %5 = vector.shape_cast %4 : vector<1x128xf32> to vector<1x128xf32>
    %6 = vector.broadcast %5 : vector<1x128xf32> to vector<16x128xf32>
    %c0_6 = arith.constant 0 : index
    %c0_7 = arith.constant 0 : index
    %c0_8 = arith.constant 0 : index
    %7 = vector.load %arg2[%c0_6, %c0_7, %c0_8] : memref<4x32x128xf32, #tpu.memory_space<vmem>>, vector<1x32x128xf32>
    %8 = vector.shape_cast %7 : vector<1x32x128xf32> to vector<32x128xf32>
    %c0_9 = arith.constant 0 : index
    %c0_10 = arith.constant 0 : index
    %c0_11 = arith.constant 0 : index
    %9 = vector.load %arg3[%c0_9, %c0_10, %c0_11] : memref<4x32x128xf32, #tpu.memory_space<vmem>>, vector<1x32x128xf32>
    %10 = vector.shape_cast %9 : vector<1x32x128xf32> to vector<32x128xf32>
    %c0_12 = arith.constant 0 : index
    %c0_13 = arith.constant 0 : index
    %c0_14 = arith.constant 0 : index
    %11 = vector.load %arg4[%c0_12, %c0_13, %c0_14] : memref<4x32x128xf32, #tpu.memory_space<vmem>>, vector<1x32x128xf32>
    %12 = vector.shape_cast %11 : vector<1x32x128xf32> to vector<32x128xf32>
    %c0_15 = arith.constant 0 : index
    %c0_16 = arith.constant 0 : index
    %c0_17 = arith.constant 0 : index
    %13 = vector.load %arg6[%c0_15, %c0_16, %c0_17] : memref<4x128x32xf32, #tpu.memory_space<vmem>>, vector<1x128x32xf32>
    %14 = vector.shape_cast %13 : vector<1x128x32xf32> to vector<128x32xf32>
    %cst = arith.constant dense<0.000000e+00> : vector<16x32xf32>
    %15 = tpu.matmul %1, %8, %cst {dimension_numbers = #tpu.dot_dimension_numbers<[1], [1], [0], [0], [0, 0, 1, 0], [], []>} : vector<16x128xf32>, vector<32x128xf32>, vector<16x32xf32> -> vector<16x32xf32>
    %cst_18 = arith.constant dense<0.000000e+00> : vector<16x32xf32>
    %16 = tpu.matmul %1, %10, %cst_18 {dimension_numbers = #tpu.dot_dimension_numbers<[1], [1], [0], [0], [0, 0, 1, 0], [], []>} : vector<16x128xf32>, vector<32x128xf32>, vector<16x32xf32> -> vector<16x32xf32>
    %cst_19 = arith.constant dense<0.000000e+00> : vector<16x32xf32>
    %17 = tpu.matmul %1, %12, %cst_19 {dimension_numbers = #tpu.dot_dimension_numbers<[1], [1], [0], [0], [0, 0, 1, 0], [], []>} : vector<16x128xf32>, vector<32x128xf32>, vector<16x32xf32> -> vector<16x32xf32>
    %cst_20 = arith.constant 0.176776692 : f32
    %18 = vector.broadcast %cst_20 : f32 to vector<16x32xf32>
    %19 = arith.mulf %15, %18 : vector<16x32xf32>
    %20 = vector.shape_cast %19 : vector<16x32xf32> to vector<1x16x32xf32>
    %21 = arith.truncf %20 : vector<1x16x32xf32> to vector<1x16x32xbf16>
    %22 = vector.shape_cast %16 : vector<16x32xf32> to vector<1x16x32xf32>
    %23 = arith.truncf %22 : vector<1x16x32xf32> to vector<1x16x32xbf16>
    %24 = vector.shape_cast %17 : vector<16x32xf32> to vector<1x16x32xf32>
    %25 = arith.truncf %24 : vector<1x16x32xf32> to vector<1x16x32xbf16>
    "tpu.trace_start"() <{level = 10 : i32, message = "bnd,bmd->bnm"}> : () -> ()
    %cst_21 = arith.constant dense<0.000000e+00> : vector<1x16x16xf32>
    %26 = tpu.matmul %21, %23, %cst_21 {dimension_numbers = #tpu.dot_dimension_numbers<[2], [2], [1], [1], [0, 0, 0, 1, 1, 1], [0], [0]>} : vector<1x16x32xbf16>, vector<1x16x32xbf16>, vector<1x16x16xf32> -> vector<1x16x16xf32>
    "tpu.trace_stop"() : () -> ()
    %cst_22 = arith.constant dense<0xFF800000> : vector<1x16xf32>
    %27 = vector.multi_reduction <maximumf>, %26, %cst_22 [2] : vector<1x16x16xf32> to vector<1x16xf32>
    %28 = vector.shape_cast %27 : vector<1x16xf32> to vector<1x16x1xf32>
    %29 = vector.broadcast %28 : vector<1x16x1xf32> to vector<1x16x16xf32>
    %30 = arith.subf %26, %29 : vector<1x16x16xf32>
    %31 = math.exp %30 : vector<1x16x16xf32>
    %cst_23 = arith.constant dense<0.000000e+00> : vector<1x16xf32>
    %32 = vector.multi_reduction <add>, %31, %cst_23 [2] : vector<1x16x16xf32> to vector<1x16xf32>
    %33 = vector.shape_cast %32 : vector<1x16xf32> to vector<1x16x1xf32>
    %34 = tpu.reciprocal %33 {approx = true} : vector<1x16x1xf32> -> vector<1x16x1xf32>
    %35 = vector.broadcast %34 : vector<1x16x1xf32> to vector<1x16x16xf32>
    %36 = arith.mulf %31, %35 : vector<1x16x16xf32>
    %37 = arith.addf %36, %3 : vector<1x16x16xf32>
    %38 = arith.truncf %37 : vector<1x16x16xf32> to vector<1x16x16xbf16>
    "tpu.trace_start"() <{level = 10 : i32, message = "bnm,bmd->bnd"}> : () -> ()
    %cst_24 = arith.constant dense<0.000000e+00> : vector<1x16x32xf32>
    %39 = tpu.matmul %38, %25, %cst_24 {dimension_numbers = #tpu.dot_dimension_numbers<[2], [1], [1], [2], [0, 0, 0, 1, 1, 2], [0], [0]>} : vector<1x16x16xbf16>, vector<1x16x32xbf16>, vector<1x16x32xf32> -> vector<1x16x32xf32>
    "tpu.trace_stop"() : () -> ()
    %40 = vector.shape_cast %39 : vector<1x16x32xf32> to vector<16x32xf32>
    %cst_25 = arith.constant dense<0.000000e+00> : vector<16x128xf32>
    %41 = tpu.matmul %40, %14, %cst_25 {dimension_numbers = #tpu.dot_dimension_numbers<[1], [1], [0], [0], [0, 0, 1, 0], [], []>} : vector<16x32xf32>, vector<128x32xf32>, vector<16x128xf32> -> vector<16x128xf32>
    %42 = arith.addf %6, %41 : vector<16x128xf32>
    %c1 = arith.constant 1 : index
    %c0_26 = arith.constant 0 : index
    %c0_27 = arith.constant 0 : index
    %43 = vector.load %arg2[%c1, %c0_26, %c0_27] : memref<4x32x128xf32, #tpu.memory_space<vmem>>, vector<1x32x128xf32>
    %44 = vector.shape_cast %43 : vector<1x32x128xf32> to vector<32x128xf32>
    %c1_28 = arith.constant 1 : index
    %c0_29 = arith.constant 0 : index
    %c0_30 = arith.constant 0 : index
    %45 = vector.load %arg3[%c1_28, %c0_29, %c0_30] : memref<4x32x128xf32, #tpu.memory_space<vmem>>, vector<1x32x128xf32>
    %46 = vector.shape_cast %45 : vector<1x32x128xf32> to vector<32x128xf32>
    %c1_31 = arith.constant 1 : index
    %c0_32 = arith.constant 0 : index
    %c0_33 = arith.constant 0 : index
    %47 = vector.load %arg4[%c1_31, %c0_32, %c0_33] : memref<4x32x128xf32, #tpu.memory_space<vmem>>, vector<1x32x128xf32>
    %48 = vector.shape_cast %47 : vector<1x32x128xf32> to vector<32x128xf32>
    %c1_34 = arith.constant 1 : index
    %c0_35 = arith.constant 0 : index
    %c0_36 = arith.constant 0 : index
    %49 = vector.load %arg6[%c1_34, %c0_35, %c0_36] : memref<4x128x32xf32, #tpu.memory_space<vmem>>, vector<1x128x32xf32>
    %50 = vector.shape_cast %49 : vector<1x128x32xf32> to vector<128x32xf32>
    %cst_37 = arith.constant dense<0.000000e+00> : vector<16x32xf32>
    %51 = tpu.matmul %1, %44, %cst_37 {dimension_numbers = #tpu.dot_dimension_numbers<[1], [1], [0], [0], [0, 0, 1, 0], [], []>} : vector<16x128xf32>, vector<32x128xf32>, vector<16x32xf32> -> vector<16x32xf32>
    %cst_38 = arith.constant dense<0.000000e+00> : vector<16x32xf32>
    %52 = tpu.matmul %1, %46, %cst_38 {dimension_numbers = #tpu.dot_dimension_numbers<[1], [1], [0], [0], [0, 0, 1, 0], [], []>} : vector<16x128xf32>, vector<32x128xf32>, vector<16x32xf32> -> vector<16x32xf32>
    %cst_39 = arith.constant dense<0.000000e+00> : vector<16x32xf32>
    %53 = tpu.matmul %1, %48, %cst_39 {dimension_numbers = #tpu.dot_dimension_numbers<[1], [1], [0], [0], [0, 0, 1, 0], [], []>} : vector<16x128xf32>, vector<32x128xf32>, vector<16x32xf32> -> vector<16x32xf32>
    %cst_40 = arith.constant 0.176776692 : f32
    %54 = vector.broadcast %cst_40 : f32 to vector<16x32xf32>
    %55 = arith.mulf %51, %54 : vector<16x32xf32>
    %56 = vector.shape_cast %55 : vector<16x32xf32> to vector<1x16x32xf32>
    %57 = arith.truncf %56 : vector<1x16x32xf32> to vector<1x16x32xbf16>
    %58 = vector.shape_cast %52 : vector<16x32xf32> to vector<1x16x32xf32>
    %59 = arith.truncf %58 : vector<1x16x32xf32> to vector<1x16x32xbf16>
    %60 = vector.shape_cast %53 : vector<16x32xf32> to vector<1x16x32xf32>
    %61 = arith.truncf %60 : vector<1x16x32xf32> to vector<1x16x32xbf16>
    "tpu.trace_start"() <{level = 10 : i32, message = "bnd,bmd->bnm"}> : () -> ()
    %cst_41 = arith.constant dense<0.000000e+00> : vector<1x16x16xf32>
    %62 = tpu.matmul %57, %59, %cst_41 {dimension_numbers = #tpu.dot_dimension_numbers<[2], [2], [1], [1], [0, 0, 0, 1, 1, 1], [0], [0]>} : vector<1x16x32xbf16>, vector<1x16x32xbf16>, vector<1x16x16xf32> -> vector<1x16x16xf32>
    "tpu.trace_stop"() : () -> ()
    %cst_42 = arith.constant dense<0xFF800000> : vector<1x16xf32>
    %63 = vector.multi_reduction <maximumf>, %62, %cst_42 [2] : vector<1x16x16xf32> to vector<1x16xf32>
    %64 = vector.shape_cast %63 : vector<1x16xf32> to vector<1x16x1xf32>
    %65 = vector.broadcast %64 : vector<1x16x1xf32> to vector<1x16x16xf32>
    %66 = arith.subf %62, %65 : vector<1x16x16xf32>
    %67 = math.exp %66 : vector<1x16x16xf32>
    %cst_43 = arith.constant dense<0.000000e+00> : vector<1x16xf32>
    %68 = vector.multi_reduction <add>, %67, %cst_43 [2] : vector<1x16x16xf32> to vector<1x16xf32>
    %69 = vector.shape_cast %68 : vector<1x16xf32> to vector<1x16x1xf32>
    %70 = tpu.reciprocal %69 {approx = true} : vector<1x16x1xf32> -> vector<1x16x1xf32>
    %71 = vector.broadcast %70 : vector<1x16x1xf32> to vector<1x16x16xf32>
    %72 = arith.mulf %67, %71 : vector<1x16x16xf32>
    %73 = arith.addf %72, %3 : vector<1x16x16xf32>
    %74 = arith.truncf %73 : vector<1x16x16xf32> to vector<1x16x16xbf16>
    "tpu.trace_start"() <{level = 10 : i32, message = "bnm,bmd->bnd"}> : () -> ()
    %cst_44 = arith.constant dense<0.000000e+00> : vector<1x16x32xf32>
    %75 = tpu.matmul %74, %61, %cst_44 {dimension_numbers = #tpu.dot_dimension_numbers<[2], [1], [1], [2], [0, 0, 0, 1, 1, 2], [0], [0]>} : vector<1x16x16xbf16>, vector<1x16x32xbf16>, vector<1x16x32xf32> -> vector<1x16x32xf32>
    "tpu.trace_stop"() : () -> ()
    %76 = vector.shape_cast %75 : vector<1x16x32xf32> to vector<16x32xf32>
    %cst_45 = arith.constant dense<0.000000e+00> : vector<16x128xf32>
    %77 = tpu.matmul %76, %50, %cst_45 {dimension_numbers = #tpu.dot_dimension_numbers<[1], [1], [0], [0], [0, 0, 1, 0], [], []>} : vector<16x32xf32>, vector<128x32xf32>, vector<16x128xf32> -> vector<16x128xf32>
    %78 = arith.addf %42, %77 : vector<16x128xf32>
    %c2 = arith.constant 2 : index
    %c0_46 = arith.constant 0 : index
    %c0_47 = arith.constant 0 : index
    %79 = vector.load %arg2[%c2, %c0_46, %c0_47] : memref<4x32x128xf32, #tpu.memory_space<vmem>>, vector<1x32x128xf32>
    %80 = vector.shape_cast %79 : vector<1x32x128xf32> to vector<32x128xf32>
    %c2_48 = arith.constant 2 : index
    %c0_49 = arith.constant 0 : index
    %c0_50 = arith.constant 0 : index
    %81 = vector.load %arg3[%c2_48, %c0_49, %c0_50] : memref<4x32x128xf32, #tpu.memory_space<vmem>>, vector<1x32x128xf32>
    %82 = vector.shape_cast %81 : vector<1x32x128xf32> to vector<32x128xf32>
    %c2_51 = arith.constant 2 : index
    %c0_52 = arith.constant 0 : index
    %c0_53 = arith.constant 0 : index
    %83 = vector.load %arg4[%c2_51, %c0_52, %c0_53] : memref<4x32x128xf32, #tpu.memory_space<vmem>>, vector<1x32x128xf32>
    %84 = vector.shape_cast %83 : vector<1x32x128xf32> to vector<32x128xf32>
    %c2_54 = arith.constant 2 : index
    %c0_55 = arith.constant 0 : index
    %c0_56 = arith.constant 0 : index
    %85 = vector.load %arg6[%c2_54, %c0_55, %c0_56] : memref<4x128x32xf32, #tpu.memory_space<vmem>>, vector<1x128x32xf32>
    %86 = vector.shape_cast %85 : vector<1x128x32xf32> to vector<128x32xf32>
    %cst_57 = arith.constant dense<0.000000e+00> : vector<16x32xf32>
    %87 = tpu.matmul %1, %80, %cst_57 {dimension_numbers = #tpu.dot_dimension_numbers<[1], [1], [0], [0], [0, 0, 1, 0], [], []>} : vector<16x128xf32>, vector<32x128xf32>, vector<16x32xf32> -> vector<16x32xf32>
    %cst_58 = arith.constant dense<0.000000e+00> : vector<16x32xf32>
    %88 = tpu.matmul %1, %82, %cst_58 {dimension_numbers = #tpu.dot_dimension_numbers<[1], [1], [0], [0], [0, 0, 1, 0], [], []>} : vector<16x128xf32>, vector<32x128xf32>, vector<16x32xf32> -> vector<16x32xf32>
    %cst_59 = arith.constant dense<0.000000e+00> : vector<16x32xf32>
    %89 = tpu.matmul %1, %84, %cst_59 {dimension_numbers = #tpu.dot_dimension_numbers<[1], [1], [0], [0], [0, 0, 1, 0], [], []>} : vector<16x128xf32>, vector<32x128xf32>, vector<16x32xf32> -> vector<16x32xf32>
    %cst_60 = arith.constant 0.176776692 : f32
    %90 = vector.broadcast %cst_60 : f32 to vector<16x32xf32>
    %91 = arith.mulf %87, %90 : vector<16x32xf32>
    %92 = vector.shape_cast %91 : vector<16x32xf32> to vector<1x16x32xf32>
    %93 = arith.truncf %92 : vector<1x16x32xf32> to vector<1x16x32xbf16>
    %94 = vector.shape_cast %88 : vector<16x32xf32> to vector<1x16x32xf32>
    %95 = arith.truncf %94 : vector<1x16x32xf32> to vector<1x16x32xbf16>
    %96 = vector.shape_cast %89 : vector<16x32xf32> to vector<1x16x32xf32>
    %97 = arith.truncf %96 : vector<1x16x32xf32> to vector<1x16x32xbf16>
    "tpu.trace_start"() <{level = 10 : i32, message = "bnd,bmd->bnm"}> : () -> ()
    %cst_61 = arith.constant dense<0.000000e+00> : vector<1x16x16xf32>
    %98 = tpu.matmul %93, %95, %cst_61 {dimension_numbers = #tpu.dot_dimension_numbers<[2], [2], [1], [1], [0, 0, 0, 1, 1, 1], [0], [0]>} : vector<1x16x32xbf16>, vector<1x16x32xbf16>, vector<1x16x16xf32> -> vector<1x16x16xf32>
    "tpu.trace_stop"() : () -> ()
    %cst_62 = arith.constant dense<0xFF800000> : vector<1x16xf32>
    %99 = vector.multi_reduction <maximumf>, %98, %cst_62 [2] : vector<1x16x16xf32> to vector<1x16xf32>
    %100 = vector.shape_cast %99 : vector<1x16xf32> to vector<1x16x1xf32>
    %101 = vector.broadcast %100 : vector<1x16x1xf32> to vector<1x16x16xf32>
    %102 = arith.subf %98, %101 : vector<1x16x16xf32>
    %103 = math.exp %102 : vector<1x16x16xf32>
    %cst_63 = arith.constant dense<0.000000e+00> : vector<1x16xf32>
    %104 = vector.multi_reduction <add>, %103, %cst_63 [2] : vector<1x16x16xf32> to vector<1x16xf32>
    %105 = vector.shape_cast %104 : vector<1x16xf32> to vector<1x16x1xf32>
    %106 = tpu.reciprocal %105 {approx = true} : vector<1x16x1xf32> -> vector<1x16x1xf32>
    %107 = vector.broadcast %106 : vector<1x16x1xf32> to vector<1x16x16xf32>
    %108 = arith.mulf %103, %107 : vector<1x16x16xf32>
    %109 = arith.addf %108, %3 : vector<1x16x16xf32>
    %110 = arith.truncf %109 : vector<1x16x16xf32> to vector<1x16x16xbf16>
    "tpu.trace_start"() <{level = 10 : i32, message = "bnm,bmd->bnd"}> : () -> ()
    %cst_64 = arith.constant dense<0.000000e+00> : vector<1x16x32xf32>
    %111 = tpu.matmul %110, %97, %cst_64 {dimension_numbers = #tpu.dot_dimension_numbers<[2], [1], [1], [2], [0, 0, 0, 1, 1, 2], [0], [0]>} : vector<1x16x16xbf16>, vector<1x16x32xbf16>, vector<1x16x32xf32> -> vector<1x16x32xf32>
    "tpu.trace_stop"() : () -> ()
    %112 = vector.shape_cast %111 : vector<1x16x32xf32> to vector<16x32xf32>
    %cst_65 = arith.constant dense<0.000000e+00> : vector<16x128xf32>
    %113 = tpu.matmul %112, %86, %cst_65 {dimension_numbers = #tpu.dot_dimension_numbers<[1], [1], [0], [0], [0, 0, 1, 0], [], []>} : vector<16x32xf32>, vector<128x32xf32>, vector<16x128xf32> -> vector<16x128xf32>
    %114 = arith.addf %78, %113 : vector<16x128xf32>
    %c3 = arith.constant 3 : index
    %c0_66 = arith.constant 0 : index
    %c0_67 = arith.constant 0 : index
    %115 = vector.load %arg2[%c3, %c0_66, %c0_67] : memref<4x32x128xf32, #tpu.memory_space<vmem>>, vector<1x32x128xf32>
    %116 = vector.shape_cast %115 : vector<1x32x128xf32> to vector<32x128xf32>
    %c3_68 = arith.constant 3 : index
    %c0_69 = arith.constant 0 : index
    %c0_70 = arith.constant 0 : index
    %117 = vector.load %arg3[%c3_68, %c0_69, %c0_70] : memref<4x32x128xf32, #tpu.memory_space<vmem>>, vector<1x32x128xf32>
    %118 = vector.shape_cast %117 : vector<1x32x128xf32> to vector<32x128xf32>
    %c3_71 = arith.constant 3 : index
    %c0_72 = arith.constant 0 : index
    %c0_73 = arith.constant 0 : index
    %119 = vector.load %arg4[%c3_71, %c0_72, %c0_73] : memref<4x32x128xf32, #tpu.memory_space<vmem>>, vector<1x32x128xf32>
    %120 = vector.shape_cast %119 : vector<1x32x128xf32> to vector<32x128xf32>
    %c3_74 = arith.constant 3 : index
    %c0_75 = arith.constant 0 : index
    %c0_76 = arith.constant 0 : index
    %121 = vector.load %arg6[%c3_74, %c0_75, %c0_76] : memref<4x128x32xf32, #tpu.memory_space<vmem>>, vector<1x128x32xf32>
    %122 = vector.shape_cast %121 : vector<1x128x32xf32> to vector<128x32xf32>
    %cst_77 = arith.constant dense<0.000000e+00> : vector<16x32xf32>
    %123 = tpu.matmul %1, %116, %cst_77 {dimension_numbers = #tpu.dot_dimension_numbers<[1], [1], [0], [0], [0, 0, 1, 0], [], []>} : vector<16x128xf32>, vector<32x128xf32>, vector<16x32xf32> -> vector<16x32xf32>
    %cst_78 = arith.constant dense<0.000000e+00> : vector<16x32xf32>
    %124 = tpu.matmul %1, %118, %cst_78 {dimension_numbers = #tpu.dot_dimension_numbers<[1], [1], [0], [0], [0, 0, 1, 0], [], []>} : vector<16x128xf32>, vector<32x128xf32>, vector<16x32xf32> -> vector<16x32xf32>
    %cst_79 = arith.constant dense<0.000000e+00> : vector<16x32xf32>
    %125 = tpu.matmul %1, %120, %cst_79 {dimension_numbers = #tpu.dot_dimension_numbers<[1], [1], [0], [0], [0, 0, 1, 0], [], []>} : vector<16x128xf32>, vector<32x128xf32>, vector<16x32xf32> -> vector<16x32xf32>
    %cst_80 = arith.constant 0.176776692 : f32
    %126 = vector.broadcast %cst_80 : f32 to vector<16x32xf32>
    %127 = arith.mulf %123, %126 : vector<16x32xf32>
    %128 = vector.shape_cast %127 : vector<16x32xf32> to vector<1x16x32xf32>
    %129 = arith.truncf %128 : vector<1x16x32xf32> to vector<1x16x32xbf16>
    %130 = vector.shape_cast %124 : vector<16x32xf32> to vector<1x16x32xf32>
    %131 = arith.truncf %130 : vector<1x16x32xf32> to vector<1x16x32xbf16>
    %132 = vector.shape_cast %125 : vector<16x32xf32> to vector<1x16x32xf32>
    %133 = arith.truncf %132 : vector<1x16x32xf32> to vector<1x16x32xbf16>
    "tpu.trace_start"() <{level = 10 : i32, message = "bnd,bmd->bnm"}> : () -> ()
    %cst_81 = arith.constant dense<0.000000e+00> : vector<1x16x16xf32>
    %134 = tpu.matmul %129, %131, %cst_81 {dimension_numbers = #tpu.dot_dimension_numbers<[2], [2], [1], [1], [0, 0, 0, 1, 1, 1], [0], [0]>} : vector<1x16x32xbf16>, vector<1x16x32xbf16>, vector<1x16x16xf32> -> vector<1x16x16xf32>
    "tpu.trace_stop"() : () -> ()
    %cst_82 = arith.constant dense<0xFF800000> : vector<1x16xf32>
    %135 = vector.multi_reduction <maximumf>, %134, %cst_82 [2] : vector<1x16x16xf32> to vector<1x16xf32>
    %136 = vector.shape_cast %135 : vector<1x16xf32> to vector<1x16x1xf32>
    %137 = vector.broadcast %136 : vector<1x16x1xf32> to vector<1x16x16xf32>
    %138 = arith.subf %134, %137 : vector<1x16x16xf32>
    %139 = math.exp %138 : vector<1x16x16xf32>
    %cst_83 = arith.constant dense<0.000000e+00> : vector<1x16xf32>
    %140 = vector.multi_reduction <add>, %139, %cst_83 [2] : vector<1x16x16xf32> to vector<1x16xf32>
    %141 = vector.shape_cast %140 : vector<1x16xf32> to vector<1x16x1xf32>
    %142 = tpu.reciprocal %141 {approx = true} : vector<1x16x1xf32> -> vector<1x16x1xf32>
    %143 = vector.broadcast %142 : vector<1x16x1xf32> to vector<1x16x16xf32>
    %144 = arith.mulf %139, %143 : vector<1x16x16xf32>
    %145 = arith.addf %144, %3 : vector<1x16x16xf32>
    %146 = arith.truncf %145 : vector<1x16x16xf32> to vector<1x16x16xbf16>
    "tpu.trace_start"() <{level = 10 : i32, message = "bnm,bmd->bnd"}> : () -> ()
    %cst_84 = arith.constant dense<0.000000e+00> : vector<1x16x32xf32>
    %147 = tpu.matmul %146, %133, %cst_84 {dimension_numbers = #tpu.dot_dimension_numbers<[2], [1], [1], [2], [0, 0, 0, 1, 1, 2], [0], [0]>} : vector<1x16x16xbf16>, vector<1x16x32xbf16>, vector<1x16x32xf32> -> vector<1x16x32xf32>
    "tpu.trace_stop"() : () -> ()
    %148 = vector.shape_cast %147 : vector<1x16x32xf32> to vector<16x32xf32>
    %cst_85 = arith.constant dense<0.000000e+00> : vector<16x128xf32>
    %149 = tpu.matmul %148, %122, %cst_85 {dimension_numbers = #tpu.dot_dimension_numbers<[1], [1], [0], [0], [0, 0, 1, 0], [], []>} : vector<16x32xf32>, vector<128x32xf32>, vector<16x128xf32> -> vector<16x128xf32>
    %150 = arith.addf %114, %149 : vector<16x128xf32>
    %151 = vector.shape_cast %150 : vector<16x128xf32> to vector<1x16x128xf32>
    %c0_86 = arith.constant 0 : index
    %c0_87 = arith.constant 0 : index
    %c0_88 = arith.constant 0 : index
    %152 = vector.load %arg8[%c0_86, %c0_87, %c0_88] : memref<1x16x128xf32, #tpu.memory_space<vmem>>, vector<1x16x128xf32>
    tpu.vector_store %arg8[%c0_86, %c0_87, %c0_88], %151 {strides = array<i32>} : memref<1x16x128xf32, #tpu.memory_space<vmem>>, vector<1x16x128xf32>,
    return
  }
  func.func @transform_0(%arg0: i32) -> (i32, i32, i32) {
    %c0_i32 = arith.constant 0 : i32
    %c0_i32_0 = arith.constant 0 : i32
    %c0_i32_1 = arith.constant 0 : i32
    return %arg0, %c0_i32, %c0_i32_0 : i32, i32, i32
  }
  func.func @transform_1(%arg0: i32) -> (i32, i32, i32) {
    %c0_i32 = arith.constant 0 : i32
    %c0_i32_0 = arith.constant 0 : i32
    %c0_i32_1 = arith.constant 0 : i32
    %c0_i32_2 = arith.constant 0 : i32
    return %c0_i32, %c0_i32_0, %c0_i32_1 : i32, i32, i32
  }
  func.func @transform_2(%arg0: i32) -> (i32, i32, i32) {
    %c0_i32 = arith.constant 0 : i32
    %c0_i32_0 = arith.constant 0 : i32
    %c0_i32_1 = arith.constant 0 : i32
    %c0_i32_2 = arith.constant 0 : i32
    return %c0_i32, %c0_i32_0, %c0_i32_1 : i32, i32, i32
  }
  func.func @transform_3(%arg0: i32) -> (i32, i32, i32) {
    %c0_i32 = arith.constant 0 : i32
    %c0_i32_0 = arith.constant 0 : i32
    %c0_i32_1 = arith.constant 0 : i32
    %c0_i32_2 = arith.constant 0 : i32
    return %c0_i32, %c0_i32_0, %c0_i32_1 : i32, i32, i32
  }
  func.func @transform_4(%arg0: i32) -> (i32, i32) {
    %c0_i32 = arith.constant 0 : i32
    %c0_i32_0 = arith.constant 0 : i32
    %c0_i32_1 = arith.constant 0 : i32
    return %c0_i32, %c0_i32_0 : i32, i32
  }
  func.func @transform_5(%arg0: i32) -> (i32, i32, i32) {
    %c0_i32 = arith.constant 0 : i32
    %c0_i32_0 = arith.constant 0 : i32
    %c0_i32_1 = arith.constant 0 : i32
    %c0_i32_2 = arith.constant 0 : i32
    return %c0_i32, %c0_i32_0, %c0_i32_1 : i32, i32, i32
  }
  func.func @transform_6(%arg0: i32) -> (i32, i32) {
    %c0_i32 = arith.constant 0 : i32
    %c0_i32_0 = arith.constant 0 : i32
    %c0_i32_1 = arith.constant 0 : i32
    return %c0_i32, %c0_i32_0 : i32, i32
  }
  func.func @transform_7(%arg0: i32) -> (i32, i32, i32) {
    %c0_i32 = arith.constant 0 : i32
    %c0_i32_0 = arith.constant 0 : i32
    %c0_i32_1 = arith.constant 0 : i32
    return %arg0, %c0_i32, %c0_i32_0 : i32, i32, i32
  }
}

module attributes {stable_mosaic.version = 11 : i64} {
  func.func @_attention_kernel(%arg0: i32, %arg1: memref<1x16x128xf32, #tpu.memory_space<vmem>>, %arg2: memref<4x32x128xf32, #tpu.memory_space<vmem>>, %arg3: memref<4x32x128xf32, #tpu.memory_space<vmem>>, %arg4: memref<4x32x128xf32, #tpu.memory_space<vmem>>, %arg5: memref<16x16xf32, #tpu.memory_space<vmem>>, %arg6: memref<4x128x32xf32, #tpu.memory_space<vmem>>, %arg7: memref<1x128xf32, #tpu.memory_space<vmem>>, %arg8: memref<1x16x128xf32, #tpu.memory_space<vmem>>) attributes {dimension_semantics = [#tpu.dimension_semantics<parallel>], iteration_bounds = array<i64: 2>, scalar_prefetch = 0 : i64, scratch_operands = 0 : i64, tpu.core_type = #tpu.core_type<tc>, window_params = [{transform_indices = @transform_0, window_bounds = array<i64: 1, 16, 128>}, {pipeline_mode = #tpu.pipeline_mode<synchronous>, transform_indices = @transform_1, window_bounds = array<i64: 4, 32, 128>}, {pipeline_mode = #tpu.pipeline_mode<synchronous>, transform_indices = @transform_2, window_bounds = array<i64: 4, 32, 128>}, {pipeline_mode = #tpu.pipeline_mode<synchronous>, transform_indices = @transform_3, window_bounds = array<i64: 4, 32, 128>}, {pipeline_mode = #tpu.pipeline_mode<synchronous>, transform_indices = @transform_4, window_bounds = array<i64: 16, 16>}, {pipeline_mode = #tpu.pipeline_mode<synchronous>, transform_indices = @transform_5, window_bounds = array<i64: 4, 128, 32>}, {pipeline_mode = #tpu.pipeline_mode<synchronous>, transform_indices = @transform_6, window_bounds = array<i64: 1, 128>}, {transform_indices = @transform_7, window_bounds = array<i64: 1, 16, 128>}]} {
    %c0 = arith.constant 0 : index
    %c0_0 = arith.constant 0 : index
    %c0_1 = arith.constant 0 : index
    %0 = vector.load %arg1[%c0, %c0_0, %c0_1] : memref<1x16x128xf32, #tpu.memory_space<vmem>>, vector<1x16x128xf32>
    %1 = vector.shape_cast %0 : vector<1x16x128xf32> to vector<16x128xf32>
    %c0_2 = arith.constant 0 : index
    %c0_3 = arith.constant 0 : index
    %2 = vector.load %arg5[%c0_2, %c0_3] : memref<16x16xf32, #tpu.memory_space<vmem>>, vector<16x16xf32>
    %3 = vector.shape_cast %2 : vector<16x16xf32> to vector<1x16x16xf32>
    %c0_4 = arith.constant 0 : index
    %c0_5 = arith.constant 0 : index
    %4 = vector.load %arg7[%c0_4, %c0_5] : memref<1x128xf32, #tpu.memory_space<vmem>>, vector<1x128xf32>
    %5 = vector.shape_cast %4 : vector<1x128xf32> to vector<1x128xf32>
    %6 = vector.broadcast %5 : vector<1x128xf32> to vector<16x128xf32>
    %c0_6 = arith.constant 0 : index
    %c0_7 = arith.constant 0 : index
    %c0_8 = arith.constant 0 : index
    %7 = vector.load %arg2[%c0_6, %c0_7, %c0_8] : memref<4x32x128xf32, #tpu.memory_space<vmem>>, vector<1x32x128xf32>
    %8 = vector.shape_cast %7 : vector<1x32x128xf32> to vector<32x128xf32>
    %c0_9 = arith.constant 0 : index
    %c0_10 = arith.constant 0 : index
    %c0_11 = arith.constant 0 : index
    %9 = vector.load %arg3[%c0_9, %c0_10, %c0_11] : memref<4x32x128xf32, #tpu.memory_space<vmem>>, vector<1x32x128xf32>
    %10 = vector.shape_cast %9 : vector<1x32x128xf32> to vector<32x128xf32>
    %c0_12 = arith.constant 0 : index
    %c0_13 = arith.constant 0 : index
    %c0_14 = arith.constant 0 : index
    %11 = vector.load %arg4[%c0_12, %c0_13, %c0_14] : memref<4x32x128xf32, #tpu.memory_space<vmem>>, vector<1x32x128xf32>
    %12 = vector.shape_cast %11 : vector<1x32x128xf32> to vector<32x128xf32>
    %c0_15 = arith.constant 0 : index
    %c0_16 = arith.constant 0 : index
    %c0_17 = arith.constant 0 : index
    %13 = vector.load %arg6[%c0_15, %c0_16, %c0_17] : memref<4x128x32xf32, #tpu.memory_space<vmem>>, vector<1x128x32xf32>
    %14 = vector.shape_cast %13 : vector<1x128x32xf32> to vector<128x32xf32>
    %cst = arith.constant dense<0.000000e+00> : vector<16x32xf32>
    %15 = tpu.matmul %1, %8, %cst {dimension_numbers = #tpu.dot_dimension_numbers<[1], [1], [0], [0], [0, 0, 1, 0], [], []>} : vector<16x128xf32>, vector<32x128xf32>, vector<16x32xf32> -> vector<16x32xf32>
    %cst_18 = arith.constant dense<0.000000e+00> : vector<16x32xf32>
    %16 = tpu.matmul %1, %10, %cst_18 {dimension_numbers = #tpu.dot_dimension_numbers<[1], [1], [0], [0], [0, 0, 1, 0], [], []>} : vector<16x128xf32>, vector<32x128xf32>, vector<16x32xf32> -> vector<16x32xf32>
    %cst_19 = arith.constant dense<0.000000e+00> : vector<16x32xf32>
    %17 = tpu.matmul %1, %12, %cst_19 {dimension_numbers = #tpu.dot_dimension_numbers<[1], [1], [0], [0], [0, 0, 1, 0], [], []>} : vector<16x128xf32>, vector<32x128xf32>, vector<16x32xf32> -> vector<16x32xf32>
    %cst_20 = arith.constant 0.176776692 : f32
    %18 = vector.broadcast %cst_20 : f32 to vector<16x32xf32>
    %19 = arith.mulf %15, %18 : vector<16x32xf32>
    %20 = vector.shape_cast %19 : vector<16x32xf32> to vector<1x16x32xf32>
    %21 = arith.truncf %20 : vector<1x16x32xf32> to vector<1x16x32xbf16>
    %22 = vector.shape_cast %16 : vector<16x32xf32> to vector<1x16x32xf32>
    %23 = arith.truncf %22 : vector<1x16x32xf32> to vector<1x16x32xbf16>
    %24 = vector.shape_cast %17 : vector<16x32xf32> to vector<1x16x32xf32>
    %25 = arith.truncf %24 : vector<1x16x32xf32> to vector<1x16x32xbf16>
    "tpu.trace_start"() <{level = 10 : i32, message = "bnd,bmd->bnm"}> : () -> ()
    %cst_21 = arith.constant dense<0.000000e+00> : vector<1x16x16xf32>
    %26 = tpu.matmul %21, %23, %cst_21 {dimension_numbers = #tpu.dot_dimension_numbers<[2], [2], [1], [1], [0, 0, 0, 1, 1, 1], [0], [0]>} : vector<1x16x32xbf16>, vector<1x16x32xbf16>, vector<1x16x16xf32> -> vector<1x16x16xf32>
    "tpu.trace_stop"() : () -> ()
    %cst_22 = arith.constant dense<0xFF800000> : vector<1x16xf32>
    %27 = vector.multi_reduction <maximumf>, %26, %cst_22 [2] : vector<1x16x16xf32> to vector<1x16xf32>
    %28 = vector.shape_cast %27 : vector<1x16xf32> to vector<1x16x1xf32>
    %29 = vector.broadcast %28 : vector<1x16x1xf32> to vector<1x16x16xf32>
    %30 = arith.subf %26, %29 : vector<1x16x16xf32>
    %31 = math.exp %30 : vector<1x16x16xf32>
    %cst_23 = arith.constant dense<0.000000e+00> : vector<1x16xf32>
    %32 = vector.multi_reduction <add>, %31, %cst_23 [2] : vector<1x16x16xf32> to vector<1x16xf32>
    %33 = vector.shape_cast %32 : vector<1x16xf32> to vector<1x16x1xf32>
    %34 = tpu.reciprocal %33 {approx = true} : vector<1x16x1xf32> -> vector<1x16x1xf32>
    %35 = vector.broadcast %34 : vector<1x16x1xf32> to vector<1x16x16xf32>
    %36 = arith.mulf %31, %35 : vector<1x16x16xf32>
    %37 = arith.addf %36, %3 : vector<1x16x16xf32>
    %38 = arith.truncf %37 : vector<1x16x16xf32> to vector<1x16x16xbf16>
    "tpu.trace_start"() <{level = 10 : i32, message = "bnm,bmd->bnd"}> : () -> ()
    %cst_24 = arith.constant dense<0.000000e+00> : vector<1x16x32xf32>
    %39 = tpu.matmul %38, %25, %cst_24 {dimension_numbers = #tpu.dot_dimension_numbers<[2], [1], [1], [2], [0, 0, 0, 1, 1, 2], [0], [0]>} : vector<1x16x16xbf16>, vector<1x16x32xbf16>, vector<1x16x32xf32> -> vector<1x16x32xf32>
    "tpu.trace_stop"() : () -> ()
    %40 = vector.shape_cast %39 : vector<1x16x32xf32> to vector<16x32xf32>
    %cst_25 = arith.constant dense<0.000000e+00> : vector<16x128xf32>
    %41 = tpu.matmul %40, %14, %cst_25 {dimension_numbers = #tpu.dot_dimension_numbers<[1], [1], [0], [0], [0, 0, 1, 0], [], []>} : vector<16x32xf32>, vector<128x32xf32>, vector<16x128xf32> -> vector<16x128xf32>
    %42 = arith.addf %6, %41 : vector<16x128xf32>
    %c1 = arith.constant 1 : index
    %c0_26 = arith.constant 0 : index
    %c0_27 = arith.constant 0 : index
    %43 = vector.load %arg2[%c1, %c0_26, %c0_27] : memref<4x32x128xf32, #tpu.memory_space<vmem>>, vector<1x32x128xf32>
    %44 = vector.shape_cast %43 : vector<1x32x128xf32> to vector<32x128xf32>
    %c1_28 = arith.constant 1 : index
    %c0_29 = arith.constant 0 : index
    %c0_30 = arith.constant 0 : index
    %45 = vector.load %arg3[%c1_28, %c0_29, %c0_30] : memref<4x32x128xf32, #tpu.memory_space<vmem>>, vector<1x32x128xf32>
    %46 = vector.shape_cast %45 : vector<1x32x128xf32> to vector<32x128xf32>
    %c1_31 = arith.constant 1 : index
    %c0_32 = arith.constant 0 : index
    %c0_33 = arith.constant 0 : index
    %47 = vector.load %arg4[%c1_31, %c0_32, %c0_33] : memref<4x32x128xf32, #tpu.memory_space<vmem>>, vector<1x32x128xf32>
    %48 = vector.shape_cast %47 : vector<1x32x128xf32> to vector<32x128xf32>
    %c1_34 = arith.constant 1 : index
    %c0_35 = arith.constant 0 : index
    %c0_36 = arith.constant 0 : index
    %49 = vector.load %arg6[%c1_34, %c0_35, %c0_36] : memref<4x128x32xf32, #tpu.memory_space<vmem>>, vector<1x128x32xf32>
    %50 = vector.shape_cast %49 : vector<1x128x32xf32> to vector<128x32xf32>
    %cst_37 = arith.constant dense<0.000000e+00> : vector<16x32xf32>
    %51 = tpu.matmul %1, %44, %cst_37 {dimension_numbers = #tpu.dot_dimension_numbers<[1], [1], [0], [0], [0, 0, 1, 0], [], []>} : vector<16x128xf32>, vector<32x128xf32>, vector<16x32xf32> -> vector<16x32xf32>
    %cst_38 = arith.constant dense<0.000000e+00> : vector<16x32xf32>
    %52 = tpu.matmul %1, %46, %cst_38 {dimension_numbers = #tpu.dot_dimension_numbers<[1], [1], [0], [0], [0, 0, 1, 0], [], []>} : vector<16x128xf32>, vector<32x128xf32>, vector<16x32xf32> -> vector<16x32xf32>
    %cst_39 = arith.constant dense<0.000000e+00> : vector<16x32xf32>
    %53 = tpu.matmul %1, %48, %cst_39 {dimension_numbers = #tpu.dot_dimension_numbers<[1], [1], [0], [0], [0, 0, 1, 0], [], []>} : vector<16x128xf32>, vector<32x128xf32>, vector<16x32xf32> -> vector<16x32xf32>
    %cst_40 = arith.constant 0.176776692 : f32
    %54 = vector.broadcast %cst_40 : f32 to vector<16x32xf32>
    %55 = arith.mulf %51, %54 : vector<16x32xf32>
    %56 = vector.shape_cast %55 : vector<16x32xf32> to vector<1x16x32xf32>
    %57 = arith.truncf %56 : vector<1x16x32xf32> to vector<1x16x32xbf16>
    %58 = vector.shape_cast %52 : vector<16x32xf32> to vector<1x16x32xf32>
    %59 = arith.truncf %58 : vector<1x16x32xf32> to vector<1x16x32xbf16>
    %60 = vector.shape_cast %53 : vector<16x32xf32> to vector<1x16x32xf32>
    %61 = arith.truncf %60 : vector<1x16x32xf32> to vector<1x16x32xbf16>
    "tpu.trace_start"() <{level = 10 : i32, message = "bnd,bmd->bnm"}> : () -> ()
    %cst_41 = arith.constant dense<0.000000e+00> : vector<1x16x16xf32>
    %62 = tpu.matmul %57, %59, %cst_41 {dimension_numbers = #tpu.dot_dimension_numbers<[2], [2], [1], [1], [0, 0, 0, 1, 1, 1], [0], [0]>} : vector<1x16x32xbf16>, vector<1x16x32xbf16>, vector<1x16x16xf32> -> vector<1x16x16xf32>
    "tpu.trace_stop"() : () -> ()
    %cst_42 = arith.constant dense<0xFF800000> : vector<1x16xf32>
    %63 = vector.multi_reduction <maximumf>, %62, %cst_42 [2] : vector<1x16x16xf32> to vector<1x16xf32>
    %64 = vector.shape_cast %63 : vector<1x16xf32> to vector<1x16x1xf32>
    %65 = vector.broadcast %64 : vector<1x16x1xf32> to vector<1x16x16xf32>
    %66 = arith.subf %62, %65 : vector<1x16x16xf32>
    %67 = math.exp %66 : vector<1x16x16xf32>
    %cst_43 = arith.constant dense<0.000000e+00> : vector<1x16xf32>
    %68 = vector.multi_reduction <add>, %67, %cst_43 [2] : vector<1x16x16xf32> to vector<1x16xf32>
    %69 = vector.shape_cast %68 : vector<1x16xf32> to vector<1x16x1xf32>
    %70 = tpu.reciprocal %69 {approx = true} : vector<1x16x1xf32> -> vector<1x16x1xf32>
    %71 = vector.broadcast %70 : vector<1x16x1xf32> to vector<1x16x16xf32>
    %72 = arith.mulf %67, %71 : vector<1x16x16xf32>
    %73 = arith.addf %72, %3 : vector<1x16x16xf32>
    %74 = arith.truncf %73 : vector<1x16x16xf32> to vector<1x16x16xbf16>
    "tpu.trace_start"() <{level = 10 : i32, message = "bnm,bmd->bnd"}> : () -> ()
    %cst_44 = arith.constant dense<0.000000e+00> : vector<1x16x32xf32>
    %75 = tpu.matmul %74, %61, %cst_44 {dimension_numbers = #tpu.dot_dimension_numbers<[2], [1], [1], [2], [0, 0, 0, 1, 1, 2], [0], [0]>} : vector<1x16x16xbf16>, vector<1x16x32xbf16>, vector<1x16x32xf32> -> vector<1x16x32xf32>
    "tpu.trace_stop"() : () -> ()
    %76 = vector.shape_cast %75 : vector<1x16x32xf32> to vector<16x32xf32>
    %cst_45 = arith.constant dense<0.000000e+00> : vector<16x128xf32>
    %77 = tpu.matmul %76, %50, %cst_45 {dimension_numbers = #tpu.dot_dimension_numbers<[1], [1], [0], [0], [0, 0, 1, 0], [], []>} : vector<16x32xf32>, vector<128x32xf32>, vector<16x128xf32> -> vector<16x128xf32>
    %78 = arith.addf %42, %77 : vector<16x128xf32>
    %c2 = arith.constant 2 : index
    %c0_46 = arith.constant 0 : index
    %c0_47 = arith.constant 0 : index
    %79 = vector.load %arg2[%c2, %c0_46, %c0_47] : memref<4x32x128xf32, #tpu.memory_space<vmem>>, vector<1x32x128xf32>
    %80 = vector.shape_cast %79 : vector<1x32x128xf32> to vector<32x128xf32>
    %c2_48 = arith.constant 2 : index
    %c0_49 = arith.constant 0 : index
    %c0_50 = arith.constant 0 : index
    %81 = vector.load %arg3[%c2_48, %c0_49, %c0_50] : memref<4x32x128xf32, #tpu.memory_space<vmem>>, vector<1x32x128xf32>
    %82 = vector.shape_cast %81 : vector<1x32x128xf32> to vector<32x128xf32>
    %c2_51 = arith.constant 2 : index
    %c0_52 = arith.constant 0 : index
    %c0_53 = arith.constant 0 : index
    %83 = vector.load %arg4[%c2_51, %c0_52, %c0_53] : memref<4x32x128xf32, #tpu.memory_space<vmem>>, vector<1x32x128xf32>
    %84 = vector.shape_cast %83 : vector<1x32x128xf32> to vector<32x128xf32>
    %c2_54 = arith.constant 2 : index
    %c0_55 = arith.constant 0 : index
    %c0_56 = arith.constant 0 : index
    %85 = vector.load %arg6[%c2_54, %c0_55, %c0_56] : memref<4x128x32xf32, #tpu.memory_space<vmem>>, vector<1x128x32xf32>
    %86 = vector.shape_cast %85 : vector<1x128x32xf32> to vector<128x32xf32>
    %cst_57 = arith.constant dense<0.000000e+00> : vector<16x32xf32>
    %87 = tpu.matmul %1, %80, %cst_57 {dimension_numbers = #tpu.dot_dimension_numbers<[1], [1], [0], [0], [0, 0, 1, 0], [], []>} : vector<16x128xf32>, vector<32x128xf32>, vector<16x32xf32> -> vector<16x32xf32>
    %cst_58 = arith.constant dense<0.000000e+00> : vector<16x32xf32>
    %88 = tpu.matmul %1, %82, %cst_58 {dimension_numbers = #tpu.dot_dimension_numbers<[1], [1], [0], [0], [0, 0, 1, 0], [], []>} : vector<16x128xf32>, vector<32x128xf32>, vector<16x32xf32> -> vector<16x32xf32>
    %cst_59 = arith.constant dense<0.000000e+00> : vector<16x32xf32>
    %89 = tpu.matmul %1, %84, %cst_59 {dimension_numbers = #tpu.dot_dimension_numbers<[1], [1], [0], [0], [0, 0, 1, 0], [], []>} : vector<16x128xf32>, vector<32x128xf32>, vector<16x32xf32> -> vector<16x32xf32>
    %cst_60 = arith.constant 0.176776692 : f32
    %90 = vector.broadcast %cst_60 : f32 to vector<16x32xf32>
    %91 = arith.mulf %87, %90 : vector<16x32xf32>
    %92 = vector.shape_cast %91 : vector<16x32xf32> to vector<1x16x32xf32>
    %93 = arith.truncf %92 : vector<1x16x32xf32> to vector<1x16x32xbf16>
    %94 = vector.shape_cast %88 : vector<16x32xf32> to vector<1x16x32xf32>
    %95 = arith.truncf %94 : vector<1x16x32xf32> to vector<1x16x32xbf16>
    %96 = vector.shape_cast %89 : vector<16x32xf32> to vector<1x16x32xf32>
    %97 = arith.truncf %96 : vector<1x16x32xf32> to vector<1x16x32xbf16>
    "tpu.trace_start"() <{level = 10 : i32, message = "bnd,bmd->bnm"}> : () -> ()
    %cst_61 = arith.constant dense<0.000000e+00> : vector<1x16x16xf32>
    %98 = tpu.matmul %93, %95, %cst_61 {dimension_numbers = #tpu.dot_dimension_numbers<[2], [2], [1], [1], [0, 0, 0, 1, 1, 1], [0], [0]>} : vector<1x16x32xbf16>, vector<1x16x32xbf16>, vector<1x16x16xf32> -> vector<1x16x16xf32>
    "tpu.trace_stop"() : () -> ()
    %cst_62 = arith.constant dense<0xFF800000> : vector<1x16xf32>
    %99 = vector.multi_reduction <maximumf>, %98, %cst_62 [2] : vector<1x16x16xf32> to vector<1x16xf32>
    %100 = vector.shape_cast %99 : vector<1x16xf32> to vector<1x16x1xf32>
    %101 = vector.broadcast %100 : vector<1x16x1xf32> to vector<1x16x16xf32>
    %102 = arith.subf %98, %101 : vector<1x16x16xf32>
    %103 = math.exp %102 : vector<1x16x16xf32>
    %cst_63 = arith.constant dense<0.000000e+00> : vector<1x16xf32>
    %104 = vector.multi_reduction <add>, %103, %cst_63 [2] : vector<1x16x16xf32> to vector<1x16xf32>
    %105 = vector.shape_cast %104 : vector<1x16xf32> to vector<1x16x1xf32>
    %106 = tpu.reciprocal %105 {approx = true} : vector<1x16x1xf32> -> vector<1x16x1xf32>
    %107 = vector.broadcast %106 : vector<1x16x1xf32> to vector<1x16x16xf32>
    %108 = arith.mulf %103, %107 : vector<1x16x16xf32>
    %109 = arith.addf %108, %3 : vector<1x16x16xf32>
    %110 = arith.truncf %109 : vector<1x16x16xf32> to vector<1x16x16xbf16>
    "tpu.trace_start"() <{level = 10 : i32, message = "bnm,bmd->bnd"}> : () -> ()
    %cst_64 = arith.constant dense<0.000000e+00> : vector<1x16x32xf32>
    %111 = tpu.matmul %110, %97, %cst_64 {dimension_numbers = #tpu.dot_dimension_numbers<[2], [1], [1], [2], [0, 0, 0, 1, 1, 2], [0], [0]>} : vector<1x16x16xbf16>, vector<1x16x32xbf16>, vector<1x16x32xf32> -> vector<1x16x32xf32>
    "tpu.trace_stop"() : () -> ()
    %112 = vector.shape_cast %111 : vector<1x16x32xf32> to vector<16x32xf32>
    %cst_65 = arith.constant dense<0.000000e+00> : vector<16x128xf32>
    %113 = tpu.matmul %112, %86, %cst_65 {dimension_numbers = #tpu.dot_dimension_numbers<[1], [1], [0], [0], [0, 0, 1, 0], [], []>} : vector<16x32xf32>, vector<128x32xf32>, vector<16x128xf32> -> vector<16x128xf32>
    %114 = arith.addf %78, %113 : vector<16x128xf32>
    %c3 = arith.constant 3 : index
    %c0_66 = arith.constant 0 : index
    %c0_67 = arith.constant 0 : index
    %115 = vector.load %arg2[%c3, %c0_66, %c0_67] : memref<4x32x128xf32, #tpu.memory_space<vmem>>, vector<1x32x128xf32>
    %116 = vector.shape_cast %115 : vector<1x32x128xf32> to vector<32x128xf32>
    %c3_68 = arith.constant 3 : index
    %c0_69 = arith.constant 0 : index
    %c0_70 = arith.constant 0 : index
    %117 = vector.load %arg3[%c3_68, %c0_69, %c0_70] : memref<4x32x128xf32, #tpu.memory_space<vmem>>, vector<1x32x128xf32>
    %118 = vector.shape_cast %117 : vector<1x32x128xf32> to vector<32x128xf32>
    %c3_71 = arith.constant 3 : index
    %c0_72 = arith.constant 0 : index
    %c0_73 = arith.constant 0 : index
    %119 = vector.load %arg4[%c3_71, %c0_72, %c0_73] : memref<4x32x128xf32, #tpu.memory_space<vmem>>, vector<1x32x128xf32>
    %120 = vector.shape_cast %119 : vector<1x32x128xf32> to vector<32x128xf32>
    %c3_74 = arith.constant 3 : index
    %c0_75 = arith.constant 0 : index
    %c0_76 = arith.constant 0 : index
    %121 = vector.load %arg6[%c3_74, %c0_75, %c0_76] : memref<4x128x32xf32, #tpu.memory_space<vmem>>, vector<1x128x32xf32>
    %122 = vector.shape_cast %121 : vector<1x128x32xf32> to vector<128x32xf32>
    %cst_77 = arith.constant dense<0.000000e+00> : vector<16x32xf32>
    %123 = tpu.matmul %1, %116, %cst_77 {dimension_numbers = #tpu.dot_dimension_numbers<[1], [1], [0], [0], [0, 0, 1, 0], [], []>} : vector<16x128xf32>, vector<32x128xf32>, vector<16x32xf32> -> vector<16x32xf32>
    %cst_78 = arith.constant dense<0.000000e+00> : vector<16x32xf32>
    %124 = tpu.matmul %1, %118, %cst_78 {dimension_numbers = #tpu.dot_dimension_numbers<[1], [1], [0], [0], [0, 0, 1, 0], [], []>} : vector<16x128xf32>, vector<32x128xf32>, vector<16x32xf32> -> vector<16x32xf32>
    %cst_79 = arith.constant dense<0.000000e+00> : vector<16x32xf32>
    %125 = tpu.matmul %1, %120, %cst_79 {dimension_numbers = #tpu.dot_dimension_numbers<[1], [1], [0], [0], [0, 0, 1, 0], [], []>} : vector<16x128xf32>, vector<32x128xf32>, vector<16x32xf32> -> vector<16x32xf32>
    %cst_80 = arith.constant 0.176776692 : f32
    %126 = vector.broadcast %cst_80 : f32 to vector<16x32xf32>
    %127 = arith.mulf %123, %126 : vector<16x32xf32>
    %128 = vector.shape_cast %127 : vector<16x32xf32> to vector<1x16x32xf32>
    %129 = arith.truncf %128 : vector<1x16x32xf32> to vector<1x16x32xbf16>
    %130 = vector.shape_cast %124 : vector<16x32xf32> to vector<1x16x32xf32>
    %131 = arith.truncf %130 : vector<1x16x32xf32> to vector<1x16x32xbf16>
    %132 = vector.shape_cast %125 : vector<16x32xf32> to vector<1x16x32xf32>
    %133 = arith.truncf %132 : vector<1x16x32xf32> to vector<1x16x32xbf16>
    "tpu.trace_start"() <{level = 10 : i32, message = "bnd,bmd->bnm"}> : () -> ()
    %cst_81 = arith.constant dense<0.000000e+00> : vector<1x16x16xf32>
    %134 = tpu.matmul %129, %131, %cst_81 {dimension_numbers = #tpu.dot_dimension_numbers<[2], [2], [1], [1], [0, 0, 0, 1, 1, 1], [0], [0]>} : vector<1x16x32xbf16>, vector<1x16x32xbf16>, vector<1x16x16xf32> -> vector<1x16x16xf32>
    "tpu.trace_stop"() : () -> ()
    %cst_82 = arith.constant dense<0xFF800000> : vector<1x16xf32>
    %135 = vector.multi_reduction <maximumf>, %134, %cst_82 [2] : vector<1x16x16xf32> to vector<1x16xf32>
    %136 = vector.shape_cast %135 : vector<1x16xf32> to vector<1x16x1xf32>
    %137 = vector.broadcast %136 : vector<1x16x1xf32> to vector<1x16x16xf32>
    %138 = arith.subf %134, %137 : vector<1x16x16xf32>
    %139 = math.exp %138 : vector<1x16x16xf32>
    %cst_83 = arith.constant dense<0.000000e+00> : vector<1x16xf32>
    %140 = vector.multi_reduction <add>, %139, %cst_83 [2] : vector<1x16x16xf32> to vector<1x16xf32>
    %141 = vector.shape_cast %140 : vector<1x16xf32> to vector<1x16x1xf32>
    %142 = tpu.reciprocal %141 {approx = true} : vector<1x16x1xf32> -> vector<1x16x1xf32>
    %143 = vector.broadcast %142 : vector<1x16x1xf32> to vector<1x16x16xf32>
    %144 = arith.mulf %139, %143 : vector<1x16x16xf32>
    %145 = arith.addf %144, %3 : vector<1x16x16xf32>
    %146 = arith.truncf %145 : vector<1x16x16xf32> to vector<1x16x16xbf16>
    "tpu.trace_start"() <{level = 10 : i32, message = "bnm,bmd->bnd"}> : () -> ()
    %cst_84 = arith.constant dense<0.000000e+00> : vector<1x16x32xf32>
    %147 = tpu.matmul %146, %133, %cst_84 {dimension_numbers = #tpu.dot_dimension_numbers<[2], [1], [1], [2], [0, 0, 0, 1, 1, 2], [0], [0]>} : vector<1x16x16xbf16>, vector<1x16x32xbf16>, vector<1x16x32xf32> -> vector<1x16x32xf32>
    "tpu.trace_stop"() : () -> ()
    %148 = vector.shape_cast %147 : vector<1x16x32xf32> to vector<16x32xf32>
    %cst_85 = arith.constant dense<0.000000e+00> : vector<16x128xf32>
    %149 = tpu.matmul %148, %122, %cst_85 {dimension_numbers = #tpu.dot_dimension_numbers<[1], [1], [0], [0], [0, 0, 1, 0], [], []>} : vector<16x32xf32>, vector<128x32xf32>, vector<16x128xf32> -> vector<16x128xf32>
    %150 = arith.addf %114, %149 : vector<16x128xf32>
    %151 = vector.shape_cast %150 : vector<16x128xf32> to vector<1x16x128xf32>
    %c0_86 = arith.constant 0 : index
    %c0_87 = arith.constant 0 : index
    %c0_88 = arith.constant 0 : index
    %152 = vector.load %arg8[%c0_86, %c0_87, %c0_88] : memref<1x16x128xf32, #tpu.memory_space<vmem>>, vector<1x16x128xf32>
    tpu.vector_store %arg8[%c0_86, %c0_87, %c0_88], %151 {strides = array<i32>} : memref<1x16x128xf32, #tpu.memory_space<vmem>>, vector<1x16x128xf32>,
    return
  }
  func.func @transform_0(%arg0: i32) -> (i32, i32, i32) {
    %c0_i32 = arith.constant 0 : i32
    %c0_i32_0 = arith.constant 0 : i32
    %c0_i32_1 = arith.constant 0 : i32
    return %arg0, %c0_i32, %c0_i32_0 : i32, i32, i32
  }
  func.func @transform_1(%arg0: i32) -> (i32, i32, i32) {
    %c0_i32 = arith.constant 0 : i32
    %c0_i32_0 = arith.constant 0 : i32
    %c0_i32_1 = arith.constant 0 : i32
    %c0_i32_2 = arith.constant 0 : i32
    return %c0_i32, %c0_i32_0, %c0_i32_1 : i32, i32, i32
  }
  func.func @transform_2(%arg0: i32) -> (i32, i32, i32) {
    %c0_i32 = arith.constant 0 : i32
    %c0_i32_0 = arith.constant 0 : i32
    %c0_i32_1 = arith.constant 0 : i32
    %c0_i32_2 = arith.constant 0 : i32
    return %c0_i32, %c0_i32_0, %c0_i32_1 : i32, i32, i32
  }
  func.func @transform_3(%arg0: i32) -> (i32, i32, i32) {
    %c0_i32 = arith.constant 0 : i32
    %c0_i32_0 = arith.constant 0 : i32
    %c0_i32_1 = arith.constant 0 : i32
    %c0_i32_2 = arith.constant 0 : i32
    return %c0_i32, %c0_i32_0, %c0_i32_1 : i32, i32, i32
  }
  func.func @transform_4(%arg0: i32) -> (i32, i32) {
    %c0_i32 = arith.constant 0 : i32
    %c0_i32_0 = arith.constant 0 : i32
    %c0_i32_1 = arith.constant 0 : i32
    return %c0_i32, %c0_i32_0 : i32, i32
  }
  func.func @transform_5(%arg0: i32) -> (i32, i32, i32) {
    %c0_i32 = arith.constant 0 : i32
    %c0_i32_0 = arith.constant 0 : i32
    %c0_i32_1 = arith.constant 0 : i32
    %c0_i32_2 = arith.constant 0 : i32
    return %c0_i32, %c0_i32_0, %c0_i32_1 : i32, i32, i32
  }
  func.func @transform_6(%arg0: i32) -> (i32, i32) {
    %c0_i32 = arith.constant 0 : i32
    %c0_i32_0 = arith.constant 0 : i32
    %c0_i32_1 = arith.constant 0 : i32
    return %c0_i32, %c0_i32_0 : i32, i32
  }
  func.func @transform_7(%arg0: i32) -> (i32, i32, i32) {
    %c0_i32 = arith.constant 0 : i32
    %c0_i32_0 = arith.constant 0 : i32
    %c0_i32_1 = arith.constant 0 : i32
    return %arg0, %c0_i32, %c0_i32_0 : i32, i32, i32
  }
}

</mosaic_0001>

<llo_original>
// kernel: tpu_custom_call.1
$region0: #{tpu_custom_call.1}
  #allocation0 [shape = 'u32[]', space=smem, size = 0x4, offset = 0x4, fixed_abs, tag = 'smem constant byte address 0x4 - core index']
  #allocation1 [shape = 'u32[144,128]{1,0:T(1,128)}', space=vmem, size = 0x12000, scoped, tag = 'internal scratch']
  %s0 = inlined_call_operand.vmem [shape: f32[2,16,128], index: 0, kind: input, shape index: {}]
  %s1 = inlined_call_operand.vmem [shape: f32[4,32,128], index: 1, kind: input, shape index: {}]
  %s2 = inlined_call_operand.vmem [shape: f32[4,32,128], index: 2, kind: input, shape index: {}]
  %s3 = inlined_call_operand.vmem [shape: f32[4,32,128], index: 3, kind: input, shape index: {}]
  %s4 = inlined_call_operand.vmem [shape: f32[16,16], index: 4, kind: input, shape index: {}]
  %s5 = inlined_call_operand.vmem [shape: f32[4,128,32], index: 5, kind: input, shape index: {}]
  %s6 = inlined_call_operand.vmem [shape: f32[1,128], index: 6, kind: input, shape index: {}]
  %s7 = inlined_call_operand.hbm [shape: f32[2,16,128], index: 7, kind: output, shape index: {}]
  %s8 = sld [smem:[#allocation0]]
  $region61: #{tpu_custom_call.1} parent=0
    _
  %s10 = ssub.s32 1, %s8
  %s11 = scalar_select 0, %s10, %s8
  $region1: #{tpu_custom_call.1} parent=0
    #allocation2 [shape = 'u8[16384]{0}', space=vmem, size = 0x4000, scoped, tag = 'output window, operand 0']
    #allocation3 [shape = 's32[2]{0}', space=sflag, size = 0x8, scoped, tag = 'scoped memory for tpu_custom_call.1']
    %12 = vsyncpa [#allocation3], 0
    %s13 = scalar_lea.sflag [#allocation3], 1
    %14 = vsyncpa %s13, 0
    loop: start=0, step=1, limit=4
    $region2: #{tpu_custom_call.1} parent=1 // loop_pre_header
      _
    $region3: #{tpu_custom_call.1} parent=1 // loop_header
      %s16 = sphi 0, %s20
      %p17 = scmp.ge.s32.totalorder %s16, 4
      %s26 = sphi 0, %s28
      %s29 = sphi 0, %s26
      %s30 = sphi 0, %s29
      %s46 = sphi 0, %s30
      %s50 = sphi 0, %s50
      %s52 = sphi 0, %s50
      %s53 = sphi 0, %s52
      %s67 = sphi 0, %s53
      %s71 = sphi 0, %s71
      %s73 = sphi 0, %s71
      %s74 = sphi 0, %s73
      %s88 = sphi 0, %s74
      %s92 = sphi 0, %s92
      %s94 = sphi 0, %s92
      %s95 = sphi 0, %s94
      %s109 = sphi 0, %s95
      %s113 = sphi 0, %s113
      %s115 = sphi 0, %s113
      %s116 = sphi 0, %s115
      %s130 = sphi 0, %s116
      %s134 = sphi 0, %s134
      %s136 = sphi 0, %s134
      %s137 = sphi 0, %s136
      %s151 = sphi 0, %s137
      %s155 = sphi 0, %s155
      %s157 = sphi 0, %s155
      %s158 = sphi 0, %s157
      %s172 = sphi 0, %s158
      %s178 = sphi 0, %s180
      %s181 = sphi 0, %s178
      %s182 = sphi 0, %s181
      %s198 = sphi 0, %s182
    $region4: #{tpu_custom_call.1} parent=1 // loop_header_branch
      %19 = sbr.rel (%p17) target = $region8
    $region5: #{tpu_custom_call.1} parent=1 // loop_body
      %s21 = ssub.s32 %s16, 1
      %s22 = ssub.s32 %s16, 2
      %s23 = sadd.s32 %s16, 1
      %s24 = ssub.s32 %s16, %s23
      %p25 = scmp.eq.s32.totalorder %s24, 0
      %s27 = sadd.s32 %s26, 1
      %s28 = scalar_select %p25, %s26, %s27
      %p31 = pneg %p25
      %p32 = scmp.eq.s32.totalorder %s16, 1
      %p33 = por %p31, %p32
      %p34 = scmp.ne.s32.totalorder %s26, %s29
      %p35 = scmp.eq.s32.totalorder %s16, 0
      %p36 = por %p34, %p35
      %p37 = scmp.ne.s32.totalorder %s26, %s29
      %p38 = scmp.eq.s32.totalorder %s21, 1
      %p39 = por %p37, %p38
      %p40 = scmp.ne.s32.totalorder %s29, %s30
      %p41 = scmp.eq.s32.totalorder %s21, 0
      %p42 = por %p40, %p41
      %p43 = scmp.ne.s32.totalorder %s29, %s30
      %p44 = scmp.eq.s32.totalorder %s22, 1
      %p45 = por %p43, %p44
      %p47 = scmp.ne.s32.totalorder %s30, %s46
      %p48 = scmp.eq.s32.totalorder %s22, 0
      %p49 = por %p47, %p48
      %s51 = sadd.s32 %s50, 1
      %p54 = scmp.eq.s32.totalorder %s16, 1
      %p55 = scmp.ne.s32.totalorder %s50, %s52
      %p56 = scmp.eq.s32.totalorder %s16, 0
      %p57 = por %p55, %p56
      %p58 = scmp.ne.s32.totalorder %s50, %s52
      %p59 = scmp.eq.s32.totalorder %s21, 1
      %p60 = por %p58, %p59
      %p61 = scmp.ne.s32.totalorder %s52, %s53
      %p62 = scmp.eq.s32.totalorder %s21, 0
      %p63 = por %p61, %p62
      %p64 = scmp.ne.s32.totalorder %s52, %s53
      %p65 = scmp.eq.s32.totalorder %s22, 1
      %p66 = por %p64, %p65
      %p68 = scmp.ne.s32.totalorder %s53, %s67
      %p69 = scmp.eq.s32.totalorder %s22, 0
      %p70 = por %p68, %p69
      %s72 = sadd.s32 %s71, 1
      %p75 = scmp.eq.s32.totalorder %s16, 1
      %p76 = scmp.ne.s32.totalorder %s71, %s73
      %p77 = scmp.eq.s32.totalorder %s16, 0
      %p78 = por %p76, %p77
      %p79 = scmp.ne.s32.totalorder %s71, %s73
      %p80 = scmp.eq.s32.totalorder %s21, 1
      %p81 = por %p79, %p80
      %p82 = scmp.ne.s32.totalorder %s73, %s74
      %p83 = scmp.eq.s32.totalorder %s21, 0
      %p84 = por %p82, %p83
      %p85 = scmp.ne.s32.totalorder %s73, %s74
      %p86 = scmp.eq.s32.totalorder %s22, 1
      %p87 = por %p85, %p86
      %p89 = scmp.ne.s32.totalorder %s74, %s88
      %p90 = scmp.eq.s32.totalorder %s22, 0
      %p91 = por %p89, %p90
      %s93 = sadd.s32 %s92, 1
      %p96 = scmp.eq.s32.totalorder %s16, 1
      %p97 = scmp.ne.s32.totalorder %s92, %s94
      %p98 = scmp.eq.s32.totalorder %s16, 0
      %p99 = por %p97, %p98
      %p100 = scmp.ne.s32.totalorder %s92, %s94
      %p101 = scmp.eq.s32.totalorder %s21, 1
      %p102 = por %p100, %p101
      %p103 = scmp.ne.s32.totalorder %s94, %s95
      %p104 = scmp.eq.s32.totalorder %s21, 0
      %p105 = por %p103, %p104
      %p106 = scmp.ne.s32.totalorder %s94, %s95
      %p107 = scmp.eq.s32.totalorder %s22, 1
      %p108 = por %p106, %p107
      %p110 = scmp.ne.s32.totalorder %s95, %s109
      %p111 = scmp.eq.s32.totalorder %s22, 0
      %p112 = por %p110, %p111
      %s114 = sadd.s32 %s113, 1
      %p117 = scmp.eq.s32.totalorder %s16, 1
      %p118 = scmp.ne.s32.totalorder %s113, %s115
      %p119 = scmp.eq.s32.totalorder %s16, 0
      %p120 = por %p118, %p119
      %p121 = scmp.ne.s32.totalorder %s113, %s115
      %p122 = scmp.eq.s32.totalorder %s21, 1
      %p123 = por %p121, %p122
      %p124 = scmp.ne.s32.totalorder %s115, %s116
      %p125 = scmp.eq.s32.totalorder %s21, 0
      %p126 = por %p124, %p125
      %p127 = scmp.ne.s32.totalorder %s115, %s116
      %p128 = scmp.eq.s32.totalorder %s22, 1
      %p129 = por %p127, %p128
      %p131 = scmp.ne.s32.totalorder %s116, %s130
      %p132 = scmp.eq.s32.totalorder %s22, 0
      %p133 = por %p131, %p132
      %s135 = sadd.s32 %s134, 1
      %p138 = scmp.eq.s32.totalorder %s16, 1
      %p139 = scmp.ne.s32.totalorder %s134, %s136
      %p140 = scmp.eq.s32.totalorder %s16, 0
      %p141 = por %p139, %p140
      %p142 = scmp.ne.s32.totalorder %s134, %s136
      %p143 = scmp.eq.s32.totalorder %s21, 1
      %p144 = por %p142, %p143
      %p145 = scmp.ne.s32.totalorder %s136, %s137
      %p146 = scmp.eq.s32.totalorder %s21, 0
      %p147 = por %p145, %p146
      %p148 = scmp.ne.s32.totalorder %s136, %s137
      %p149 = scmp.eq.s32.totalorder %s22, 1
      %p150 = por %p148, %p149
      %p152 = scmp.ne.s32.totalorder %s137, %s151
      %p153 = scmp.eq.s32.totalorder %s22, 0
      %p154 = por %p152, %p153
      %s156 = sadd.s32 %s155, 1
      %p159 = scmp.eq.s32.totalorder %s16, 1
      %p160 = scmp.ne.s32.totalorder %s155, %s157
      %p161 = scmp.eq.s32.totalorder %s16, 0
      %p162 = por %p160, %p161
      %p163 = scmp.ne.s32.totalorder %s155, %s157
      %p164 = scmp.eq.s32.totalorder %s21, 1
      %p165 = por %p163, %p164
      %p166 = scmp.ne.s32.totalorder %s157, %s158
      %p167 = scmp.eq.s32.totalorder %s21, 0
      %p168 = por %p166, %p167
      %p169 = scmp.ne.s32.totalorder %s157, %s158
      %p170 = scmp.eq.s32.totalorder %s22, 1
      %p171 = por %p169, %p170
      %p173 = scmp.ne.s32.totalorder %s158, %s172
      %p174 = scmp.eq.s32.totalorder %s22, 0
      %p175 = por %p173, %p174
      %s176 = ssub.s32 %s16, %s23
      %p177 = scmp.eq.s32.totalorder %s176, 0
      %s179 = sadd.s32 %s178, 1
      %s180 = scalar_select %p177, %s178, %s179
      %p183 = pneg %p177
      %p184 = scmp.eq.s32.totalorder %s16, 1
      %p185 = por %p183, %p184
      %p186 = scmp.ne.s32.totalorder %s178, %s181
      %p187 = scmp.eq.s32.totalorder %s16, 0
      %p188 = por %p186, %p187
      %p189 = scmp.ne.s32.totalorder %s178, %s181
      %p190 = scmp.eq.s32.totalorder %s21, 1
      %p191 = por %p189, %p190
      %p192 = scmp.ne.s32.totalorder %s181, %s182
      %p193 = scmp.eq.s32.totalorder %s21, 0
      %p194 = por %p192, %p193
      %p195 = scmp.ne.s32.totalorder %s181, %s182
      %p196 = scmp.eq.s32.totalorder %s22, 1
      %p197 = por %p195, %p196
      %p199 = scmp.ne.s32.totalorder %s182, %s198
      %p200 = scmp.eq.s32.totalorder %s22, 0
      %p201 = por %p199, %p200
      %p202 = scmp.le.s32.totalorder 1, %s16
      %p203 = scmp.lt.s32.totalorder %s16, 3
      %p204 = pnand %p202, %p203
      %p205 = pneg %p204
      // Predicated region
      $region9: #{tpu_custom_call.1} parent=5 // pred_check
        _
      $region10: #{tpu_custom_call.1} parent=5 // pred_check_branch
        %207 = sbr.rel (%p204) target = $region12
      $region11: #{tpu_custom_call.1} parent=5 // pred_region
        %s208 = ssub.s32 %s16, 1
        // Predicated region
        $region13: #{tpu_custom_call.1} parent=11 // pred_check
          %p209 = pneg %p63
        $region14: #{tpu_custom_call.1} parent=11 // pred_check_branch
          %211 = sbr.rel (%p209) target = $region16
        $region15: #{tpu_custom_call.1} parent=11 // pred_region
          _
        $region16: #{tpu_custom_call.1} parent=11 // pred_fallthru
          _
        // Predicated region
        $region17: #{tpu_custom_call.1} parent=11 // pred_check
          %p212 = pneg %p84
        $region18: #{tpu_custom_call.1} parent=11 // pred_check_branch
          %214 = sbr.rel (%p212) target = $region20
        $region19: #{tpu_custom_call.1} parent=11 // pred_region
          _
        $region20: #{tpu_custom_call.1} parent=11 // pred_fallthru
          _
        // Predicated region
        $region21: #{tpu_custom_call.1} parent=11 // pred_check
          %p215 = pneg %p105
        $region22: #{tpu_custom_call.1} parent=11 // pred_check_branch
          %217 = sbr.rel (%p215) target = $region24
        $region23: #{tpu_custom_call.1} parent=11 // pred_region
          _
        $region24: #{tpu_custom_call.1} parent=11 // pred_fallthru
          _
        // Predicated region
        $region25: #{tpu_custom_call.1} parent=11 // pred_check
          %p218 = pneg %p126
        $region26: #{tpu_custom_call.1} parent=11 // pred_check_branch
          %220 = sbr.rel (%p218) target = $region28
        $region27: #{tpu_custom_call.1} parent=11 // pred_region
          _
        $region28: #{tpu_custom_call.1} parent=11 // pred_fallthru
          _
        // Predicated region
        $region29: #{tpu_custom_call.1} parent=11 // pred_check
          %p221 = pneg %p147
        $region30: #{tpu_custom_call.1} parent=11 // pred_check_branch
          %223 = sbr.rel (%p221) target = $region32
        $region31: #{tpu_custom_call.1} parent=11 // pred_region
          _
        $region32: #{tpu_custom_call.1} parent=11 // pred_fallthru
          _
        // Predicated region
        $region33: #{tpu_custom_call.1} parent=11 // pred_check
          %p224 = pneg %p168
        $region34: #{tpu_custom_call.1} parent=11 // pred_check_branch
          %226 = sbr.rel (%p224) target = $region36
        $region35: #{tpu_custom_call.1} parent=11 // pred_region
          _
        $region36: #{tpu_custom_call.1} parent=11 // pred_fallthru
          _
      $region12: #{tpu_custom_call.1} parent=5 // pred_fallthru
        _
      %p227 = scmp.lt.s32.totalorder %s16, 2
      // Predicated region
      $region37: #{tpu_custom_call.1} parent=5 // pred_check
        %p228 = pneg %p227
      $region38: #{tpu_custom_call.1} parent=5 // pred_check_branch
        %230 = sbr.rel (%p228) target = $region40
      $region39: #{tpu_custom_call.1} parent=5 // pred_region
        // Predicated region
        $region41: #{tpu_custom_call.1} parent=39 // pred_check
          %p231 = pneg %p36
        $region42: #{tpu_custom_call.1} parent=39 // pred_check_branch
          %233 = sbr.rel (%p231) target = $region44
        $region43: #{tpu_custom_call.1} parent=39 // pred_region
          %p234 = scmp.lt.s32.totalorder %s16, 1
          %s235 = scalar_select %p234, %s16, 1
          %s236 = smul.addr %s235, 2
          %s237 = smul.addr %s236, 8
          %s238 = scalar_lea.vmem %s0, %s237
        $region44: #{tpu_custom_call.1} parent=39 // pred_fallthru
          _
      $region40: #{tpu_custom_call.1} parent=5 // pred_fallthru
        _
      %p239 = scmp.le.s32.totalorder 1, %s16
      %p240 = scmp.lt.s32.totalorder %s16, 3
      %p241 = pnand %p239, %p240
      %p242 = pneg %p241
      // Predicated region
      $region45: #{tpu_custom_call.1} parent=5 // pred_check
        _
      $region46: #{tpu_custom_call.1} parent=5 // pred_check_branch
        %244 = sbr.rel (%p241) target = $region48
      $region47: #{tpu_custom_call.1} parent=5 // pred_region
        %s245 = ssub.s32 %s16, 1
        %p246 = scmp.lt.s32.totalorder %s21, 1
        %s247 = scalar_select %p246, %s21, 1
        %s248 = smul.addr %s247, 2
        %s249 = smul.addr %s248, 8
        %s250 = scalar_lea.vmem %s0, %s249
        %p251 = pneg %p42
        %p252 = pneg %p39
        %p253 = pneg %p63
        %p254 = pneg %p60
        %p255 = pneg %p84
        %p256 = pneg %p81
        %p257 = pneg %p105
        %p258 = pneg %p102
        %p259 = pneg %p126
        %p260 = pneg %p123
        %p261 = pneg %p147
        %p262 = pneg %p144
        %p263 = pneg %p168
        %p264 = pneg %p165
        %p265 = pneg %p194
        %p266 = pneg %p191
        %s267 = sand.u32 %s181, 1
        %s268 = scalar_lea.sflag [#allocation3], %s267
        %s269 = sand.u32 %s181, 1
        %s270 = smul.addr %s269, 16
        %s271 = scalar_lea.vmem [#allocation2], %s270
        %p272 = scmp.lt.s32.totalorder %s21, 1
        %s273 = scalar_select %p272, %s21, 1
        %s274 = smul.addr %s273, 2
        %s275 = smul.addr %s274, 8
        %s276 = scalar_lea.vmem %s0, %s275
        %v278 = vld [vmem:[%s276] sm:$0xff]
        %v279 = vld [vmem:[%s276 + $0x8] sm:$0xff]
        %v280 = vld [vmem:[%s4] sm:$0xff]
        %v281 = vld [vmem:[%s4 + $0x8] sm:$0xff]
        %v282 = vld [vmem:[%s6] sm:$0x1]
        %v284 = vlaneseq
        %v285 = vshrl.u32 %v284, 7
        %v286 = vsub.s32 0, %v285
        %v287 = vrot.slane %v282, %v286
        %v289 = vld [vmem:[%s1] sm:$0xff]
        %v290 = vld [vmem:[%s1 + $0x8] sm:$0xff]
        %v291 = vld [vmem:[%s1 + $0x10] sm:$0xff]
        %v292 = vld [vmem:[%s1 + $0x18] sm:$0xff]
        %v293 = vld [vmem:[%s2] sm:$0xff]
        %v294 = vld [vmem:[%s2 + $0x8] sm:$0xff]
        %v295 = vld [vmem:[%s2 + $0x10] sm:$0xff]
        %v296 = vld [vmem:[%s2 + $0x18] sm:$0xff]
        %v297 = vld [vmem:[%s3] sm:$0xff]
        %v298 = vld [vmem:[%s3 + $0x8] sm:$0xff]
        %v299 = vld [vmem:[%s3 + $0x10] sm:$0xff]
        %v300 = vld [vmem:[%s3 + $0x18] sm:$0xff]
        %v301 = vld [vmem:[%s5] sm:$0xff]
        %v302 = vld [vmem:[%s5 + $0x8] sm:$0xff]
        %v303 = vld [vmem:[%s5 + $0x10] sm:$0xff]
        %v304 = vld [vmem:[%s5 + $0x18] sm:$0xff]
        %v305 = vld [vmem:[%s5 + $0x20] sm:$0xff]
        %v306 = vld [vmem:[%s5 + $0x28] sm:$0xff]
        %v307 = vld [vmem:[%s5 + $0x30] sm:$0xff]
        %v308 = vld [vmem:[%s5 + $0x38] sm:$0xff]
        %v309 = vld [vmem:[%s5 + $0x40] sm:$0xff]
        %v310 = vld [vmem:[%s5 + $0x48] sm:$0xff]
        %v311 = vld [vmem:[%s5 + $0x50] sm:$0xff]
        %v312 = vld [vmem:[%s5 + $0x58] sm:$0xff]
        %v313 = vld [vmem:[%s5 + $0x60] sm:$0xff]
        %v314 = vld [vmem:[%s5 + $0x68] sm:$0xff]
        %v315 = vld [vmem:[%s5 + $0x70] sm:$0xff]
        %v316 = vld [vmem:[%s5 + $0x78] sm:$0xff]
        %317 = vmatprep.subr.mxu0 0.0
        %318 = vmatpush1.xpose.msra.mxu0 %v289
        %319 = vmatprep.subr.mxu0 0.0
        %320 = vmatpush1.xpose.msra.mxu0 %v290
        %321 = vmatprep.subr.mxu0 0.0
        %322 = vmatpush1.xpose.msra.mxu0 %v291
        %323 = vmatprep.subr.mxu0 0.0
        %324 = vmatpush1.xpose.msra.mxu0 %v292
        %325 = vmatprep.subr.mxu0 0.0
        %326 = vmatpush1.xpose.msra.mxu0 0.0
        %327 = vmatprep.subr.mxu0 0.0
        %328 = vmatpush1.xpose.msra.mxu0 0.0
        %329 = vmatprep.subr.mxu0 0.0
        %330 = vmatpush1.xpose.msra.mxu0 0.0
        %331 = vmatprep.subr.mxu0 0.0
        %332 = vmatpush1.xpose.msra.mxu0 0.0
        %333 = vmatprep.subr.mxu0 0.0
        %334 = vmatpush1.xpose.msra.mxu0 0.0
        %335 = vmatprep.subr.mxu0 0.0
        %336 = vmatpush1.xpose.msra.mxu0 0.0
        %337 = vmatprep.subr.mxu0 0.0
        %338 = vmatpush1.xpose.msra.mxu0 0.0
        %339 = vmatprep.subr.mxu0 0.0
        %340 = vmatpush1.xpose.msra.mxu0 0.0
        %341 = vmatprep.subr.mxu0 0.0
        %342 = vmatpush1.xpose.msra.mxu0 0.0
        %343 = vmatprep.subr.mxu0 0.0
        %344 = vmatpush1.xpose.msra.mxu0 0.0
        %345 = vmatprep.subr.mxu0 0.0
        %346 = vmatpush1.xpose.msra.mxu0 0.0
        %347 = vmatprep.subr.mxu0 0.0
        %348 = vmatpush1.xpose.msra.mxu0 0.0
        %349 = vmatprep.subr.mxu0 0.0
        %350 = vmatpush1.xpose.msra.mxu0 0.0
        %351 = vmatprep.subr.mxu0 0.0
        %352 = vmatpush1.xpose.msra.mxu0 0.0
        %353 = vmatprep.subr.mxu0 0.0
        %354 = vmatpush1.xpose.msra.mxu0 0.0
        %355 = vmatprep.subr.mxu0 0.0
        %356 = vmatpush1.xpose.msra.mxu0 0.0
        %357 = vmatprep.subr.mxu0 0.0
        %358 = vmatpush1.xpose.msra.mxu0 0.0
        %359 = vmatprep.subr.mxu0 0.0
        %360 = vmatpush1.xpose.msra.mxu0 0.0
        %361 = vmatprep.subr.mxu0 0.0
        %362 = vmatpush1.xpose.msra.mxu0 0.0
        %363 = vmatprep.subr.mxu0 0.0
        %364 = vmatpush1.xpose.msra.mxu0 0.0
        %365 = vmatprep.subr.mxu0 0.0
        %366 = vmatpush1.xpose.msra.mxu0 0.0
        %367 = vmatprep.subr.mxu0 0.0
        %368 = vmatpush1.xpose.msra.mxu0 0.0
        %369 = vmatprep.subr.mxu0 0.0
        %370 = vmatpush1.xpose.msra.mxu0 0.0
        %371 = vmatprep.subr.mxu0 0.0
        %372 = vmatpush1.xpose.msra.mxu0 0.0
        %373 = vmatprep.subr.mxu0 0.0
        %374 = vmatpush1.xpose.msra.mxu0 0.0
        %375 = vmatprep.subr.mxu0 0.0
        %376 = vmatpush1.xpose.msra.mxu0 0.0
        %377 = vmatprep.subr.mxu0 0.0
        %378 = vmatpush1.xpose.msra.mxu0 0.0
        %379 = vmatprep.subr.mxu0 0.0
        %380 = vmatpush1.xpose.msra.mxu0 0.0
        %381 = vmatprep.mubr.f32.mxu0 0.0
        %382 = vmatmul.mubr.f32.gmra.mrb[0].mxu0 %v278
        %v383 = vpop.f32.mrb[0].mxu0
        %v384 = vadd.f32 0.0, %v383
        %v385 = vpop.f32.mrb[0].mxu0
        %386 = vmatprep.mubr.f32.mxu0 0.0
        %387 = vmatmul.mubr.f32.gmra.mrb[0].mxu0 %v279
        %v388 = vpop.f32.mrb[0].mxu0
        %v389 = vadd.f32 0.0, %v388
        %v390 = vpop.f32.mrb[0].mxu0
        %391 = vdwg.mxu0
        %392 = vmatprep.subr.mxu0 0.0
        %393 = vmatpush1.xpose.msra.mxu0 %v293
        %394 = vmatprep.subr.mxu0 0.0
        %395 = vmatpush1.xpose.msra.mxu0 %v294
        %396 = vmatprep.subr.mxu0 0.0
        %397 = vmatpush1.xpose.msra.mxu0 %v295
        %398 = vmatprep.subr.mxu0 0.0
        %399 = vmatpush1.xpose.msra.mxu0 %v296
        %400 = vmatprep.subr.mxu0 0.0
        %401 = vmatpush1.xpose.msra.mxu0 0.0
        %402 = vmatprep.subr.mxu0 0.0
        %403 = vmatpush1.xpose.msra.mxu0 0.0
        %404 = vmatprep.subr.mxu0 0.0
        %405 = vmatpush1.xpose.msra.mxu0 0.0
        %406 = vmatprep.subr.mxu0 0.0
        %407 = vmatpush1.xpose.msra.mxu0 0.0
        %408 = vmatprep.subr.mxu0 0.0
        %409 = vmatpush1.xpose.msra.mxu0 0.0
        %410 = vmatprep.subr.mxu0 0.0
        %411 = vmatpush1.xpose.msra.mxu0 0.0
        %412 = vmatprep.subr.mxu0 0.0
        %413 = vmatpush1.xpose.msra.mxu0 0.0
        %414 = vmatprep.subr.mxu0 0.0
        %415 = vmatpush1.xpose.msra.mxu0 0.0
        %416 = vmatprep.subr.mxu0 0.0
        %417 = vmatpush1.xpose.msra.mxu0 0.0
        %418 = vmatprep.subr.mxu0 0.0
        %419 = vmatpush1.xpose.msra.mxu0 0.0
        %420 = vmatprep.subr.mxu0 0.0
        %421 = vmatpush1.xpose.msra.mxu0 0.0
        %422 = vmatprep.subr.mxu0 0.0
        %423 = vmatpush1.xpose.msra.mxu0 0.0
        %424 = vmatprep.subr.mxu0 0.0
        %425 = vmatpush1.xpose.msra.mxu0 0.0
        %426 = vmatprep.subr.mxu0 0.0
        %427 = vmatpush1.xpose.msra.mxu0 0.0
        %428 = vmatprep.subr.mxu0 0.0
        %429 = vmatpush1.xpose.msra.mxu0 0.0
        %430 = vmatprep.subr.mxu0 0.0
        %431 = vmatpush1.xpose.msra.mxu0 0.0
        %432 = vmatprep.subr.mxu0 0.0
        %433 = vmatpush1.xpose.msra.mxu0 0.0
        %434 = vmatprep.subr.mxu0 0.0
        %435 = vmatpush1.xpose.msra.mxu0 0.0
        %436 = vmatprep.subr.mxu0 0.0
        %437 = vmatpush1.xpose.msra.mxu0 0.0
        %438 = vmatprep.subr.mxu0 0.0
        %439 = vmatpush1.xpose.msra.mxu0 0.0
        %440 = vmatprep.subr.mxu0 0.0
        %441 = vmatpush1.xpose.msra.mxu0 0.0
        %442 = vmatprep.subr.mxu0 0.0
        %443 = vmatpush1.xpose.msra.mxu0 0.0
        %444 = vmatprep.subr.mxu0 0.0
        %445 = vmatpush1.xpose.msra.mxu0 0.0
        %446 = vmatprep.subr.mxu0 0.0
        %447 = vmatpush1.xpose.msra.mxu0 0.0
        %448 = vmatprep.subr.mxu0 0.0
        %449 = vmatpush1.xpose.msra.mxu0 0.0
        %450 = vmatprep.subr.mxu0 0.0
        %451 = vmatpush1.xpose.msra.mxu0 0.0
        %452 = vmatprep.subr.mxu0 0.0
        %453 = vmatpush1.xpose.msra.mxu0 0.0
        %454 = vmatprep.subr.mxu0 0.0
        %455 = vmatpush1.xpose.msra.mxu0 0.0
        %456 = vmatprep.mubr.f32.mxu0 0.0
        %457 = vmatmul.mubr.f32.gmra.mrb[0].mxu0 %v278
        %v458 = vpop.f32.mrb[0].mxu0
        %v459 = vadd.f32 0.0, %v458
        %v460 = vpop.f32.mrb[0].mxu0
        %461 = vmatprep.mubr.f32.mxu0 0.0
        %462 = vmatmul.mubr.f32.gmra.mrb[0].mxu0 %v279
        %v463 = vpop.f32.mrb[0].mxu0
        %v464 = vadd.f32 0.0, %v463
        %v465 = vpop.f32.mrb[0].mxu0
        %466 = vdwg.mxu0
        %467 = vmatprep.subr.mxu0 0.0
        %468 = vmatpush1.xpose.msra.mxu0 %v297
        %469 = vmatprep.subr.mxu0 0.0
        %470 = vmatpush1.xpose.msra.mxu0 %v298
        %471 = vmatprep.subr.mxu0 0.0
        %472 = vmatpush1.xpose.msra.mxu0 %v299
        %473 = vmatprep.subr.mxu0 0.0
        %474 = vmatpush1.xpose.msra.mxu0 %v300
        %475 = vmatprep.subr.mxu0 0.0
        %476 = vmatpush1.xpose.msra.mxu0 0.0
        %477 = vmatprep.subr.mxu0 0.0
        %478 = vmatpush1.xpose.msra.mxu0 0.0
        %479 = vmatprep.subr.mxu0 0.0
        %480 = vmatpush1.xpose.msra.mxu0 0.0
        %481 = vmatprep.subr.mxu0 0.0
        %482 = vmatpush1.xpose.msra.mxu0 0.0
        %483 = vmatprep.subr.mxu0 0.0
        %484 = vmatpush1.xpose.msra.mxu0 0.0
        %485 = vmatprep.subr.mxu0 0.0
        %486 = vmatpush1.xpose.msra.mxu0 0.0
        %487 = vmatprep.subr.mxu0 0.0
        %488 = vmatpush1.xpose.msra.mxu0 0.0
        %489 = vmatprep.subr.mxu0 0.0
        %490 = vmatpush1.xpose.msra.mxu0 0.0
        %491 = vmatprep.subr.mxu0 0.0
        %492 = vmatpush1.xpose.msra.mxu0 0.0
        %493 = vmatprep.subr.mxu0 0.0
        %494 = vmatpush1.xpose.msra.mxu0 0.0
        %495 = vmatprep.subr.mxu0 0.0
        %496 = vmatpush1.xpose.msra.mxu0 0.0
        %497 = vmatprep.subr.mxu0 0.0
        %498 = vmatpush1.xpose.msra.mxu0 0.0
        %499 = vmatprep.subr.mxu0 0.0
        %500 = vmatpush1.xpose.msra.mxu0 0.0
        %501 = vmatprep.subr.mxu0 0.0
        %502 = vmatpush1.xpose.msra.mxu0 0.0
        %503 = vmatprep.subr.mxu0 0.0
        %504 = vmatpush1.xpose.msra.mxu0 0.0
        %505 = vmatprep.subr.mxu0 0.0
        %506 = vmatpush1.xpose.msra.mxu0 0.0
        %507 = vmatprep.subr.mxu0 0.0
        %508 = vmatpush1.xpose.msra.mxu0 0.0
        %509 = vmatprep.subr.mxu0 0.0
        %510 = vmatpush1.xpose.msra.mxu0 0.0
        %511 = vmatprep.subr.mxu0 0.0
        %512 = vmatpush1.xpose.msra.mxu0 0.0
        %513 = vmatprep.subr.mxu0 0.0
        %514 = vmatpush1.xpose.msra.mxu0 0.0
        %515 = vmatprep.subr.mxu0 0.0
        %516 = vmatpush1.xpose.msra.mxu0 0.0
        %517 = vmatprep.subr.mxu0 0.0
        %518 = vmatpush1.xpose.msra.mxu0 0.0
        %519 = vmatprep.subr.mxu0 0.0
        %520 = vmatpush1.xpose.msra.mxu0 0.0
        %521 = vmatprep.subr.mxu0 0.0
        %522 = vmatpush1.xpose.msra.mxu0 0.0
        %523 = vmatprep.subr.mxu0 0.0
        %524 = vmatpush1.xpose.msra.mxu0 0.0
        %525 = vmatprep.subr.mxu0 0.0
        %526 = vmatpush1.xpose.msra.mxu0 0.0
        %527 = vmatprep.subr.mxu0 0.0
        %528 = vmatpush1.xpose.msra.mxu0 0.0
        %529 = vmatprep.subr.mxu0 0.0
        %530 = vmatpush1.xpose.msra.mxu0 0.0
        %531 = vmatprep.mubr.f32.mxu0 0.0
        %532 = vmatmul.mubr.f32.gmra.mrb[0].mxu0 %v278
        %v533 = vpop.f32.mrb[0].mxu0
        %v534 = vadd.f32 0.0, %v533
        %v535 = vpop.f32.mrb[0].mxu0
        %536 = vmatprep.mubr.f32.mxu0 0.0
        %537 = vmatmul.mubr.f32.gmra.mrb[0].mxu0 %v279
        %v538 = vpop.f32.mrb[0].mxu0
        %v539 = vadd.f32 0.0, %v538
        %v540 = vpop.f32.mrb[0].mxu0
        %541 = vdwg.mxu0
        %v542 = vmul.f32 %v384, 0.17677669
        %v543 = vmul.f32 %v389, 0.17677669
        %v544 = vpack.c.bf16 %v543, %v542
        %v545 = vpack.c.bf16 %v464, %v459
        %v546 = vpack.c.bf16 %v539, %v534
        %vm547 = vcmask 261120
        %v549 = vsel %vm547, %v544, 0
        %v552 = vsel %vm547, %v545, 0
        %554 = vmatprep.subr.bf16.mxu0 0
        %555 = vmatpush1.bf16.xpose.msra.mxu0 %v552
        %556 = vmatprep.subr.bf16.mxu0 0
        %557 = vmatpush1.bf16.xpose.msra.mxu0 0
        %558 = vmatprep.subr.bf16.mxu0 0
        %559 = vmatpush1.bf16.xpose.msra.mxu0 0
        %560 = vmatprep.subr.bf16.mxu0 0
        %561 = vmatpush1.bf16.xpose.msra.mxu0 0
        %562 = vmatprep.subr.bf16.mxu0 0
        %563 = vmatpush1.bf16.xpose.msra.mxu0 0
        %564 = vmatprep.subr.bf16.mxu0 0
        %565 = vmatpush1.bf16.xpose.msra.mxu0 0
        %566 = vmatprep.subr.bf16.mxu0 0
        %567 = vmatpush1.bf16.xpose.msra.mxu0 0
        %568 = vmatprep.subr.bf16.mxu0 0
        %569 = vmatpush1.bf16.xpose.msra.mxu0 0
        %570 = vmatprep.subr.bf16.mxu0 0
        %571 = vmatpush1.bf16.xpose.msra.mxu0 0
        %572 = vmatprep.subr.bf16.mxu0 0
        %573 = vmatpush1.bf16.xpose.msra.mxu0 0
        %574 = vmatprep.subr.bf16.mxu0 0
        %575 = vmatpush1.bf16.xpose.msra.mxu0 0
        %576 = vmatprep.subr.bf16.mxu0 0
        %577 = vmatpush1.bf16.xpose.msra.mxu0 0
        %578 = vmatprep.subr.bf16.mxu0 0
        %579 = vmatpush1.bf16.xpose.msra.mxu0 0
        %580 = vmatprep.subr.bf16.mxu0 0
        %581 = vmatpush1.bf16.xpose.msra.mxu0 0
        %582 = vmatprep.subr.bf16.mxu0 0
        %583 = vmatpush1.bf16.xpose.msra.mxu0 0
        %584 = vmatprep.subr.bf16.mxu0 0
        %585 = vmatpush1.bf16.xpose.msra.mxu0 0
        %586 = vmatprep.mubr.bf16.mxu0 0
        %587 = vmatmul.mubr.bf16.gmra.mrb[0].mxu0 %v549
        %v588 = vpop.f32.mrb[0].mxu0
        %v589 = vadd.f32 0.0, %v588
        %v590 = vpop.f32.mrb[0].mxu0
        %v591 = vpop.f32.mrb[0].mxu0
        %v592 = vadd.f32 0.0, %v591
        %v593 = vpop.f32.mrb[0].mxu0
        %594 = vdwg.mxu0
        %vm595 = vcmask 130048
        %v596 = vsel %vm595, %v589, -inf
        %597 = vmax.xlane.f32.xlu0 %v596
        %v598 = vpop.xlane.xlu0 %597
        %v599 = vsel %vm595, %v592, -inf
        %600 = vmax.xlane.f32.xlu0 %v599
        %v601 = vpop.xlane.xlu0 %600
        %v602 = vsub.f32 %v589, %v598
        %v603 = vsub.f32 %v592, %v601
        %v604 = vmul.f32 %v602, 1.442695
        %v605 = vpow.pop %v604
        %v606 = vmul.f32 %v603, 1.442695
        %v607 = vpow.pop %v606
        %v608 = vsel %vm595, %v605, 0.0
        %609 = vadd.xlane.f32.xlu0 %v608
        %v610 = vpop.xlane.xlu0 %609
        %v611 = vsel %vm595, %v607, 0.0
        %612 = vadd.xlane.f32.xlu0 %v611
        %v613 = vpop.xlane.xlu0 %612
        %v614 = vrcp.pop %v610
        %v615 = vrcp.pop %v613
        %v616 = vmul.f32 %v605, %v614
        %v617 = vmul.f32 %v607, %v615
        %v618 = vadd.f32 %v616, %v280
        %v619 = vadd.f32 %v617, %v281
        %v620 = vpack.c.bf16 %v619, %v618
        %v622 = vsel %vm595, %v620, 0
        %624 = vmatprep.subr.bf16.mxu0 0
        %625 = vmatpush1.bf16.msra.mxu0 %v546
        %626 = vmatprep.subr.bf16.mxu0 0
        %627 = vmatpush1.bf16.msra.mxu0 0
        %628 = vmatprep.subr.bf16.mxu0 0
        %629 = vmatpush1.bf16.msra.mxu0 0
        %630 = vmatprep.subr.bf16.mxu0 0
        %631 = vmatpush1.bf16.msra.mxu0 0
        %632 = vmatprep.subr.bf16.mxu0 0
        %633 = vmatpush1.bf16.msra.mxu0 0
        %634 = vmatprep.subr.bf16.mxu0 0
        %635 = vmatpush1.bf16.msra.mxu0 0
        %636 = vmatprep.subr.bf16.mxu0 0
        %637 = vmatpush1.bf16.msra.mxu0 0
        %638 = vmatprep.subr.bf16.mxu0 0
        %639 = vmatpush1.bf16.msra.mxu0 0
        %640 = vmatprep.subr.bf16.mxu0 0
        %641 = vmatpush1.bf16.msra.mxu0 0
        %642 = vmatprep.subr.bf16.mxu0 0
        %643 = vmatpush1.bf16.msra.mxu0 0
        %644 = vmatprep.subr.bf16.mxu0 0
        %645 = vmatpush1.bf16.msra.mxu0 0
        %646 = vmatprep.subr.bf16.mxu0 0
        %647 = vmatpush1.bf16.msra.mxu0 0
        %648 = vmatprep.subr.bf16.mxu0 0
        %649 = vmatpush1.bf16.msra.mxu0 0
        %650 = vmatprep.subr.bf16.mxu0 0
        %651 = vmatpush1.bf16.msra.mxu0 0
        %652 = vmatprep.subr.bf16.mxu0 0
        %653 = vmatpush1.bf16.msra.mxu0 0
        %654 = vmatprep.subr.bf16.mxu0 0
        %655 = vmatpush1.bf16.msra.mxu0 0
        %656 = vmatprep.mubr.bf16.mxu0 0
        %657 = vmatmul.mubr.bf16.gmra.mrb[0].mxu0 %v622
        %v658 = vpop.f32.mrb[0].mxu0
        %v659 = vadd.f32 0.0, %v658
        %v660 = vpop.f32.mrb[0].mxu0
        %v661 = vpop.f32.mrb[0].mxu0
        %v662 = vadd.f32 0.0, %v661
        %v663 = vpop.f32.mrb[0].mxu0
        %664 = vdwg.mxu0
        %v666 = vsel %vm547, %v659, 0
        %v669 = vsel %vm547, %v662, 0
        %v672 = vsel %vm547, %v301, 0
        %v675 = vsel %vm547, %v302, 0
        %v678 = vsel %vm547, %v303, 0
        %v681 = vsel %vm547, %v304, 0
        %v684 = vsel %vm547, %v305, 0
        %v687 = vsel %vm547, %v306, 0
        %v690 = vsel %vm547, %v307, 0
        %v693 = vsel %vm547, %v308, 0
        %v696 = vsel %vm547, %v309, 0
        %v699 = vsel %vm547, %v310, 0
        %v702 = vsel %vm547, %v311, 0
        %v705 = vsel %vm547, %v312, 0
        %v708 = vsel %vm547, %v313, 0
        %v711 = vsel %vm547, %v314, 0
        %v714 = vsel %vm547, %v315, 0
        %v717 = vsel %vm547, %v316, 0
        %719 = vmatprep.subr.mxu0 0.0
        %720 = vmatpush1.xpose.msra.mxu0 %v672
        %721 = vmatprep.subr.mxu0 0.0
        %722 = vmatpush1.xpose.msra.mxu0 %v675
        %723 = vmatprep.subr.mxu0 0.0
        %724 = vmatpush1.xpose.msra.mxu0 %v678
        %725 = vmatprep.subr.mxu0 0.0
        %726 = vmatpush1.xpose.msra.mxu0 %v681
        %727 = vmatprep.subr.mxu0 0.0
        %728 = vmatpush1.xpose.msra.mxu0 %v684
        %729 = vmatprep.subr.mxu0 0.0
        %730 = vmatpush1.xpose.msra.mxu0 %v687
        %731 = vmatprep.subr.mxu0 0.0
        %732 = vmatpush1.xpose.msra.mxu0 %v690
        %733 = vmatprep.subr.mxu0 0.0
        %734 = vmatpush1.xpose.msra.mxu0 %v693
        %735 = vmatprep.subr.mxu0 0.0
        %736 = vmatpush1.xpose.msra.mxu0 %v696
        %737 = vmatprep.subr.mxu0 0.0
        %738 = vmatpush1.xpose.msra.mxu0 %v699
        %739 = vmatprep.subr.mxu0 0.0
        %740 = vmatpush1.xpose.msra.mxu0 %v702
        %741 = vmatprep.subr.mxu0 0.0
        %742 = vmatpush1.xpose.msra.mxu0 %v705
        %743 = vmatprep.subr.mxu0 0.0
        %744 = vmatpush1.xpose.msra.mxu0 %v708
        %745 = vmatprep.subr.mxu0 0.0
        %746 = vmatpush1.xpose.msra.mxu0 %v711
        %747 = vmatprep.subr.mxu0 0.0
        %748 = vmatpush1.xpose.msra.mxu0 %v714
        %749 = vmatprep.subr.mxu0 0.0
        %750 = vmatpush1.xpose.msra.mxu0 %v717
        %751 = vmatprep.subr.mxu0 0.0
        %752 = vmatpush1.xpose.msra.mxu0 0.0
        %753 = vmatprep.subr.mxu0 0.0
        %754 = vmatpush1.xpose.msra.mxu0 0.0
        %755 = vmatprep.subr.mxu0 0.0
        %756 = vmatpush1.xpose.msra.mxu0 0.0
        %757 = vmatprep.subr.mxu0 0.0
        %758 = vmatpush1.xpose.msra.mxu0 0.0
        %759 = vmatprep.subr.mxu0 0.0
        %760 = vmatpush1.xpose.msra.mxu0 0.0
        %761 = vmatprep.subr.mxu0 0.0
        %762 = vmatpush1.xpose.msra.mxu0 0.0
        %763 = vmatprep.subr.mxu0 0.0
        %764 = vmatpush1.xpose.msra.mxu0 0.0
        %765 = vmatprep.subr.mxu0 0.0
        %766 = vmatpush1.xpose.msra.mxu0 0.0
        %767 = vmatprep.subr.mxu0 0.0
        %768 = vmatpush1.xpose.msra.mxu0 0.0
        %769 = vmatprep.subr.mxu0 0.0
        %770 = vmatpush1.xpose.msra.mxu0 0.0
        %771 = vmatprep.subr.mxu0 0.0
        %772 = vmatpush1.xpose.msra.mxu0 0.0
        %773 = vmatprep.subr.mxu0 0.0
        %774 = vmatpush1.xpose.msra.mxu0 0.0
        %775 = vmatprep.subr.mxu0 0.0
        %776 = vmatpush1.xpose.msra.mxu0 0.0
        %777 = vmatprep.subr.mxu0 0.0
        %778 = vmatpush1.xpose.msra.mxu0 0.0
        %779 = vmatprep.subr.mxu0 0.0
        %780 = vmatpush1.xpose.msra.mxu0 0.0
        %781 = vmatprep.subr.mxu0 0.0
        %782 = vmatpush1.xpose.msra.mxu0 0.0
        %783 = vmatprep.mubr.f32.mxu0 0.0
        %784 = vmatmul.mubr.f32.gmra.mrb[0].mxu0 %v666
        %v785 = vpop.f32.mrb[0].mxu0
        %v786 = vadd.f32 0.0, %v785
        %v787 = vpop.f32.mrb[0].mxu0
        %788 = vmatprep.mubr.f32.mxu0 0.0
        %789 = vmatmul.mubr.f32.gmra.mrb[0].mxu0 %v669
        %v790 = vpop.f32.mrb[0].mxu0
        %v791 = vadd.f32 0.0, %v790
        %v792 = vpop.f32.mrb[0].mxu0
        %793 = vdwg.mxu0
        %v794 = vadd.f32 %v287, %v786
        %v795 = vadd.f32 %v287, %v791
        %s796 = scalar_lea.vmem %s1, 32
        %v797 = vld [vmem:[%s796] sm:$0xff]
        %v798 = vld [vmem:[%s796 + $0x8] sm:$0xff]
        %v799 = vld [vmem:[%s796 + $0x10] sm:$0xff]
        %v800 = vld [vmem:[%s796 + $0x18] sm:$0xff]
        %s801 = scalar_lea.vmem %s2, 32
        %v802 = vld [vmem:[%s801] sm:$0xff]
        %v803 = vld [vmem:[%s801 + $0x8] sm:$0xff]
        %v804 = vld [vmem:[%s801 + $0x10] sm:$0xff]
        %v805 = vld [vmem:[%s801 + $0x18] sm:$0xff]
        %s806 = scalar_lea.vmem %s3, 32
        %v807 = vld [vmem:[%s806] sm:$0xff]
        %v808 = vld [vmem:[%s806 + $0x8] sm:$0xff]
        %v809 = vld [vmem:[%s806 + $0x10] sm:$0xff]
        %v810 = vld [vmem:[%s806 + $0x18] sm:$0xff]
        %s811 = scalar_lea.vmem %s5, 128
        %v812 = vld [vmem:[%s811] sm:$0xff]
        %v813 = vld [vmem:[%s811 + $0x8] sm:$0xff]
        %v814 = vld [vmem:[%s811 + $0x10] sm:$0xff]
        %v815 = vld [vmem:[%s811 + $0x18] sm:$0xff]
        %v816 = vld [vmem:[%s811 + $0x20] sm:$0xff]
        %v817 = vld [vmem:[%s811 + $0x28] sm:$0xff]
        %v818 = vld [vmem:[%s811 + $0x30] sm:$0xff]
        %v819 = vld [vmem:[%s811 + $0x38] sm:$0xff]
        %v820 = vld [vmem:[%s811 + $0x40] sm:$0xff]
        %v821 = vld [vmem:[%s811 + $0x48] sm:$0xff]
        %v822 = vld [vmem:[%s811 + $0x50] sm:$0xff]
        %v823 = vld [vmem:[%s811 + $0x58] sm:$0xff]
        %v824 = vld [vmem:[%s811 + $0x60] sm:$0xff]
        %v825 = vld [vmem:[%s811 + $0x68] sm:$0xff]
        %v826 = vld [vmem:[%s811 + $0x70] sm:$0xff]
        %v827 = vld [vmem:[%s811 + $0x78] sm:$0xff]
        %828 = vmatprep.subr.mxu0 0.0
        %829 = vmatpush1.xpose.msra.mxu0 %v797
        %830 = vmatprep.subr.mxu0 0.0
        %831 = vmatpush1.xpose.msra.mxu0 %v798
        %832 = vmatprep.subr.mxu0 0.0
        %833 = vmatpush1.xpose.msra.mxu0 %v799
        %834 = vmatprep.subr.mxu0 0.0
        %835 = vmatpush1.xpose.msra.mxu0 %v800
        %836 = vmatprep.subr.mxu0 0.0
        %837 = vmatpush1.xpose.msra.mxu0 0.0
        %838 = vmatprep.subr.mxu0 0.0
        %839 = vmatpush1.xpose.msra.mxu0 0.0
        %840 = vmatprep.subr.mxu0 0.0
        %841 = vmatpush1.xpose.msra.mxu0 0.0
        %842 = vmatprep.subr.mxu0 0.0
        %843 = vmatpush1.xpose.msra.mxu0 0.0
        %844 = vmatprep.subr.mxu0 0.0
        %845 = vmatpush1.xpose.msra.mxu0 0.0
        %846 = vmatprep.subr.mxu0 0.0
        %847 = vmatpush1.xpose.msra.mxu0 0.0
        %848 = vmatprep.subr.mxu0 0.0
        %849 = vmatpush1.xpose.msra.mxu0 0.0
        %850 = vmatprep.subr.mxu0 0.0
        %851 = vmatpush1.xpose.msra.mxu0 0.0
        %852 = vmatprep.subr.mxu0 0.0
        %853 = vmatpush1.xpose.msra.mxu0 0.0
        %854 = vmatprep.subr.mxu0 0.0
        %855 = vmatpush1.xpose.msra.mxu0 0.0
        %856 = vmatprep.subr.mxu0 0.0
        %857 = vmatpush1.xpose.msra.mxu0 0.0
        %858 = vmatprep.subr.mxu0 0.0
        %859 = vmatpush1.xpose.msra.mxu0 0.0
        %860 = vmatprep.subr.mxu0 0.0
        %861 = vmatpush1.xpose.msra.mxu0 0.0
        %862 = vmatprep.subr.mxu0 0.0
        %863 = vmatpush1.xpose.msra.mxu0 0.0
        %864 = vmatprep.subr.mxu0 0.0
        %865 = vmatpush1.xpose.msra.mxu0 0.0
        %866 = vmatprep.subr.mxu0 0.0
        %867 = vmatpush1.xpose.msra.mxu0 0.0
        %868 = vmatprep.subr.mxu0 0.0
        %869 = vmatpush1.xpose.msra.mxu0 0.0
        %870 = vmatprep.subr.mxu0 0.0
        %871 = vmatpush1.xpose.msra.mxu0 0.0
        %872 = vmatprep.subr.mxu0 0.0
        %873 = vmatpush1.xpose.msra.mxu0 0.0
        %874 = vmatprep.subr.mxu0 0.0
        %875 = vmatpush1.xpose.msra.mxu0 0.0
        %876 = vmatprep.subr.mxu0 0.0
        %877 = vmatpush1.xpose.msra.mxu0 0.0
        %878 = vmatprep.subr.mxu0 0.0
        %879 = vmatpush1.xpose.msra.mxu0 0.0
        %880 = vmatprep.subr.mxu0 0.0
        %881 = vmatpush1.xpose.msra.mxu0 0.0
        %882 = vmatprep.subr.mxu0 0.0
        %883 = vmatpush1.xpose.msra.mxu0 0.0
        %884 = vmatprep.subr.mxu0 0.0
        %885 = vmatpush1.xpose.msra.mxu0 0.0
        %886 = vmatprep.subr.mxu0 0.0
        %887 = vmatpush1.xpose.msra.mxu0 0.0
        %888 = vmatprep.subr.mxu0 0.0
        %889 = vmatpush1.xpose.msra.mxu0 0.0
        %890 = vmatprep.subr.mxu0 0.0
        %891 = vmatpush1.xpose.msra.mxu0 0.0
        %892 = vmatprep.mubr.f32.mxu0 0.0
        %893 = vmatmul.mubr.f32.gmra.mrb[0].mxu0 %v278
        %v894 = vpop.f32.mrb[0].mxu0
        %v895 = vadd.f32 0.0, %v894
        %v896 = vpop.f32.mrb[0].mxu0
        %897 = vmatprep.mubr.f32.mxu0 0.0
        %898 = vmatmul.mubr.f32.gmra.mrb[0].mxu0 %v279
        %v899 = vpop.f32.mrb[0].mxu0
        %v900 = vadd.f32 0.0, %v899
        %v901 = vpop.f32.mrb[0].mxu0
        %902 = vdwg.mxu0
        %903 = vmatprep.subr.mxu0 0.0
        %904 = vmatpush1.xpose.msra.mxu0 %v802
        %905 = vmatprep.subr.mxu0 0.0
        %906 = vmatpush1.xpose.msra.mxu0 %v803
        %907 = vmatprep.subr.mxu0 0.0
        %908 = vmatpush1.xpose.msra.mxu0 %v804
        %909 = vmatprep.subr.mxu0 0.0
        %910 = vmatpush1.xpose.msra.mxu0 %v805
        %911 = vmatprep.subr.mxu0 0.0
        %912 = vmatpush1.xpose.msra.mxu0 0.0
        %913 = vmatprep.subr.mxu0 0.0
        %914 = vmatpush1.xpose.msra.mxu0 0.0
        %915 = vmatprep.subr.mxu0 0.0
        %916 = vmatpush1.xpose.msra.mxu0 0.0
        %917 = vmatprep.subr.mxu0 0.0
        %918 = vmatpush1.xpose.msra.mxu0 0.0
        %919 = vmatprep.subr.mxu0 0.0
        %920 = vmatpush1.xpose.msra.mxu0 0.0
        %921 = vmatprep.subr.mxu0 0.0
        %922 = vmatpush1.xpose.msra.mxu0 0.0
        %923 = vmatprep.subr.mxu0 0.0
        %924 = vmatpush1.xpose.msra.mxu0 0.0
        %925 = vmatprep.subr.mxu0 0.0
        %926 = vmatpush1.xpose.msra.mxu0 0.0
        %927 = vmatprep.subr.mxu0 0.0
        %928 = vmatpush1.xpose.msra.mxu0 0.0
        %929 = vmatprep.subr.mxu0 0.0
        %930 = vmatpush1.xpose.msra.mxu0 0.0
        %931 = vmatprep.subr.mxu0 0.0
        %932 = vmatpush1.xpose.msra.mxu0 0.0
        %933 = vmatprep.subr.mxu0 0.0
        %934 = vmatpush1.xpose.msra.mxu0 0.0
        %935 = vmatprep.subr.mxu0 0.0
        %936 = vmatpush1.xpose.msra.mxu0 0.0
        %937 = vmatprep.subr.mxu0 0.0
        %938 = vmatpush1.xpose.msra.mxu0 0.0
        %939 = vmatprep.subr.mxu0 0.0
        %940 = vmatpush1.xpose.msra.mxu0 0.0
        %941 = vmatprep.subr.mxu0 0.0
        %942 = vmatpush1.xpose.msra.mxu0 0.0
        %943 = vmatprep.subr.mxu0 0.0
        %944 = vmatpush1.xpose.msra.mxu0 0.0
        %945 = vmatprep.subr.mxu0 0.0
        %946 = vmatpush1.xpose.msra.mxu0 0.0
        %947 = vmatprep.subr.mxu0 0.0
        %948 = vmatpush1.xpose.msra.mxu0 0.0
        %949 = vmatprep.subr.mxu0 0.0
        %950 = vmatpush1.xpose.msra.mxu0 0.0
        %951 = vmatprep.subr.mxu0 0.0
        %952 = vmatpush1.xpose.msra.mxu0 0.0
        %953 = vmatprep.subr.mxu0 0.0
        %954 = vmatpush1.xpose.msra.mxu0 0.0
        %955 = vmatprep.subr.mxu0 0.0
        %956 = vmatpush1.xpose.msra.mxu0 0.0
        %957 = vmatprep.subr.mxu0 0.0
        %958 = vmatpush1.xpose.msra.mxu0 0.0
        %959 = vmatprep.subr.mxu0 0.0
        %960 = vmatpush1.xpose.msra.mxu0 0.0
        %961 = vmatprep.subr.mxu0 0.0
        %962 = vmatpush1.xpose.msra.mxu0 0.0
        %963 = vmatprep.subr.mxu0 0.0
        %964 = vmatpush1.xpose.msra.mxu0 0.0
        %965 = vmatprep.subr.mxu0 0.0
        %966 = vmatpush1.xpose.msra.mxu0 0.0
        %967 = vmatprep.mubr.f32.mxu0 0.0
        %968 = vmatmul.mubr.f32.gmra.mrb[0].mxu0 %v278
        %v969 = vpop.f32.mrb[0].mxu0
        %v970 = vadd.f32 0.0, %v969
        %v971 = vpop.f32.mrb[0].mxu0
        %972 = vmatprep.mubr.f32.mxu0 0.0
        %973 = vmatmul.mubr.f32.gmra.mrb[0].mxu0 %v279
        %v974 = vpop.f32.mrb[0].mxu0
        %v975 = vadd.f32 0.0, %v974
        %v976 = vpop.f32.mrb[0].mxu0
        %977 = vdwg.mxu0
        %978 = vmatprep.subr.mxu0 0.0
        %979 = vmatpush1.xpose.msra.mxu0 %v807
        %980 = vmatprep.subr.mxu0 0.0
        %981 = vmatpush1.xpose.msra.mxu0 %v808
        %982 = vmatprep.subr.mxu0 0.0
        %983 = vmatpush1.xpose.msra.mxu0 %v809
        %984 = vmatprep.subr.mxu0 0.0
        %985 = vmatpush1.xpose.msra.mxu0 %v810
        %986 = vmatprep.subr.mxu0 0.0
        %987 = vmatpush1.xpose.msra.mxu0 0.0
        %988 = vmatprep.subr.mxu0 0.0
        %989 = vmatpush1.xpose.msra.mxu0 0.0
        %990 = vmatprep.subr.mxu0 0.0
        %991 = vmatpush1.xpose.msra.mxu0 0.0
        %992 = vmatprep.subr.mxu0 0.0
        %993 = vmatpush1.xpose.msra.mxu0 0.0
        %994 = vmatprep.subr.mxu0 0.0
        %995 = vmatpush1.xpose.msra.mxu0 0.0
        %996 = vmatprep.subr.mxu0 0.0
        %997 = vmatpush1.xpose.msra.mxu0 0.0
        %998 = vmatprep.subr.mxu0 0.0
        %999 = vmatpush1.xpose.msra.mxu0 0.0
        %1000 = vmatprep.subr.mxu0 0.0
        %1001 = vmatpush1.xpose.msra.mxu0 0.0
        %1002 = vmatprep.subr.mxu0 0.0
        %1003 = vmatpush1.xpose.msra.mxu0 0.0
        %1004 = vmatprep.subr.mxu0 0.0
        %1005 = vmatpush1.xpose.msra.mxu0 0.0
        %1006 = vmatprep.subr.mxu0 0.0
        %1007 = vmatpush1.xpose.msra.mxu0 0.0
        %1008 = vmatprep.subr.mxu0 0.0
        %1009 = vmatpush1.xpose.msra.mxu0 0.0
        %1010 = vmatprep.subr.mxu0 0.0
        %1011 = vmatpush1.xpose.msra.mxu0 0.0
        %1012 = vmatprep.subr.mxu0 0.0
        %1013 = vmatpush1.xpose.msra.mxu0 0.0
        %1014 = vmatprep.subr.mxu0 0.0
        %1015 = vmatpush1.xpose.msra.mxu0 0.0
        %1016 = vmatprep.subr.mxu0 0.0
        %1017 = vmatpush1.xpose.msra.mxu0 0.0
        %1018 = vmatprep.subr.mxu0 0.0
        %1019 = vmatpush1.xpose.msra.mxu0 0.0
        %1020 = vmatprep.subr.mxu0 0.0
        %1021 = vmatpush1.xpose.msra.mxu0 0.0
        %1022 = vmatprep.subr.mxu0 0.0
        %1023 = vmatpush1.xpose.msra.mxu0 0.0
        %1024 = vmatprep.subr.mxu0 0.0
        %1025 = vmatpush1.xpose.msra.mxu0 0.0
        %1026 = vmatprep.subr.mxu0 0.0
        %1027 = vmatpush1.xpose.msra.mxu0 0.0
        %1028 = vmatprep.subr.mxu0 0.0
        %1029 = vmatpush1.xpose.msra.mxu0 0.0
        %1030 = vmatprep.subr.mxu0 0.0
        %1031 = vmatpush1.xpose.msra.mxu0 0.0
        %1032 = vmatprep.subr.mxu0 0.0
        %1033 = vmatpush1.xpose.msra.mxu0 0.0
        %1034 = vmatprep.subr.mxu0 0.0
        %1035 = vmatpush1.xpose.msra.mxu0 0.0
        %1036 = vmatprep.subr.mxu0 0.0
        %1037 = vmatpush1.xpose.msra.mxu0 0.0
        %1038 = vmatprep.subr.mxu0 0.0
        %1039 = vmatpush1.xpose.msra.mxu0 0.0
        %1040 = vmatprep.subr.mxu0 0.0
        %1041 = vmatpush1.xpose.msra.mxu0 0.0
        %1042 = vmatprep.mubr.f32.mxu0 0.0
        %1043 = vmatmul.mubr.f32.gmra.mrb[0].mxu0 %v278
        %v1044 = vpop.f32.mrb[0].mxu0
        %v1045 = vadd.f32 0.0, %v1044
        %v1046 = vpop.f32.mrb[0].mxu0
        %1047 = vmatprep.mubr.f32.mxu0 0.0
        %1048 = vmatmul.mubr.f32.gmra.mrb[0].mxu0 %v279
        %v1049 = vpop.f32.mrb[0].mxu0
        %v1050 = vadd.f32 0.0, %v1049
        %v1051 = vpop.f32.mrb[0].mxu0
        %1052 = vdwg.mxu0
        %v1053 = vmul.f32 %v895, 0.17677669
        %v1054 = vmul.f32 %v900, 0.17677669
        %v1055 = vpack.c.bf16 %v1054, %v1053
        %v1056 = vpack.c.bf16 %v975, %v970
        %v1057 = vpack.c.bf16 %v1050, %v1045
        %v1059 = vsel %vm547, %v1055, 0
        %v1062 = vsel %vm547, %v1056, 0
        %1064 = vmatprep.subr.bf16.mxu0 0
        %1065 = vmatpush1.bf16.xpose.msra.mxu0 %v1062
        %1066 = vmatprep.subr.bf16.mxu0 0
        %1067 = vmatpush1.bf16.xpose.msra.mxu0 0
        %1068 = vmatprep.subr.bf16.mxu0 0
        %1069 = vmatpush1.bf16.xpose.msra.mxu0 0
        %1070 = vmatprep.subr.bf16.mxu0 0
        %1071 = vmatpush1.bf16.xpose.msra.mxu0 0
        %1072 = vmatprep.subr.bf16.mxu0 0
        %1073 = vmatpush1.bf16.xpose.msra.mxu0 0
        %1074 = vmatprep.subr.bf16.mxu0 0
        %1075 = vmatpush1.bf16.xpose.msra.mxu0 0
        %1076 = vmatprep.subr.bf16.mxu0 0
        %1077 = vmatpush1.bf16.xpose.msra.mxu0 0
        %1078 = vmatprep.subr.bf16.mxu0 0
        %1079 = vmatpush1.bf16.xpose.msra.mxu0 0
        %1080 = vmatprep.subr.bf16.mxu0 0
        %1081 = vmatpush1.bf16.xpose.msra.mxu0 0
        %1082 = vmatprep.subr.bf16.mxu0 0
        %1083 = vmatpush1.bf16.xpose.msra.mxu0 0
        %1084 = vmatprep.subr.bf16.mxu0 0
        %1085 = vmatpush1.bf16.xpose.msra.mxu0 0
        %1086 = vmatprep.subr.bf16.mxu0 0
        %1087 = vmatpush1.bf16.xpose.msra.mxu0 0
        %1088 = vmatprep.subr.bf16.mxu0 0
        %1089 = vmatpush1.bf16.xpose.msra.mxu0 0
        %1090 = vmatprep.subr.bf16.mxu0 0
        %1091 = vmatpush1.bf16.xpose.msra.mxu0 0
        %1092 = vmatprep.subr.bf16.mxu0 0
        %1093 = vmatpush1.bf16.xpose.msra.mxu0 0
        %1094 = vmatprep.subr.bf16.mxu0 0
        %1095 = vmatpush1.bf16.xpose.msra.mxu0 0
        %1096 = vmatprep.mubr.bf16.mxu0 0
        %1097 = vmatmul.mubr.bf16.gmra.mrb[0].mxu0 %v1059
        %v1098 = vpop.f32.mrb[0].mxu0
        %v1099 = vadd.f32 0.0, %v1098
        %v1100 = vpop.f32.mrb[0].mxu0
        %v1101 = vpop.f32.mrb[0].mxu0
        %v1102 = vadd.f32 0.0, %v1101
        %v1103 = vpop.f32.mrb[0].mxu0
        %1104 = vdwg.mxu0
        %v1105 = vsel %vm595, %v1099, -inf
        %1106 = vmax.xlane.f32.xlu0 %v1105
        %v1107 = vpop.xlane.xlu0 %1106
        %v1108 = vsel %vm595, %v1102, -inf
        %1109 = vmax.xlane.f32.xlu0 %v1108
        %v1110 = vpop.xlane.xlu0 %1109
        %v1111 = vsub.f32 %v1099, %v1107
        %v1112 = vsub.f32 %v1102, %v1110
        %v1113 = vmul.f32 %v1111, 1.442695
        %v1114 = vpow.pop %v1113
        %v1115 = vmul.f32 %v1112, 1.442695
        %v1116 = vpow.pop %v1115
        %v1117 = vsel %vm595, %v1114, 0.0
        %1118 = vadd.xlane.f32.xlu0 %v1117
        %v1119 = vpop.xlane.xlu0 %1118
        %v1120 = vsel %vm595, %v1116, 0.0
        %1121 = vadd.xlane.f32.xlu0 %v1120
        %v1122 = vpop.xlane.xlu0 %1121
        %v1123 = vrcp.pop %v1119
        %v1124 = vrcp.pop %v1122
        %v1125 = vmul.f32 %v1114, %v1123
        %v1126 = vmul.f32 %v1116, %v1124
        %v1127 = vadd.f32 %v1125, %v280
        %v1128 = vadd.f32 %v1126, %v281
        %v1129 = vpack.c.bf16 %v1128, %v1127
        %v1131 = vsel %vm595, %v1129, 0
        %1133 = vmatprep.subr.bf16.mxu0 0
        %1134 = vmatpush1.bf16.msra.mxu0 %v1057
        %1135 = vmatprep.subr.bf16.mxu0 0
        %1136 = vmatpush1.bf16.msra.mxu0 0
        %1137 = vmatprep.subr.bf16.mxu0 0
        %1138 = vmatpush1.bf16.msra.mxu0 0
        %1139 = vmatprep.subr.bf16.mxu0 0
        %1140 = vmatpush1.bf16.msra.mxu0 0
        %1141 = vmatprep.subr.bf16.mxu0 0
        %1142 = vmatpush1.bf16.msra.mxu0 0
        %1143 = vmatprep.subr.bf16.mxu0 0
        %1144 = vmatpush1.bf16.msra.mxu0 0
        %1145 = vmatprep.subr.bf16.mxu0 0
        %1146 = vmatpush1.bf16.msra.mxu0 0
        %1147 = vmatprep.subr.bf16.mxu0 0
        %1148 = vmatpush1.bf16.msra.mxu0 0
        %1149 = vmatprep.subr.bf16.mxu0 0
        %1150 = vmatpush1.bf16.msra.mxu0 0
        %1151 = vmatprep.subr.bf16.mxu0 0
        %1152 = vmatpush1.bf16.msra.mxu0 0
        %1153 = vmatprep.subr.bf16.mxu0 0
        %1154 = vmatpush1.bf16.msra.mxu0 0
        %1155 = vmatprep.subr.bf16.mxu0 0
        %1156 = vmatpush1.bf16.msra.mxu0 0
        %1157 = vmatprep.subr.bf16.mxu0 0
        %1158 = vmatpush1.bf16.msra.mxu0 0
        %1159 = vmatprep.subr.bf16.mxu0 0
        %1160 = vmatpush1.bf16.msra.mxu0 0
        %1161 = vmatprep.subr.bf16.mxu0 0
        %1162 = vmatpush1.bf16.msra.mxu0 0
        %1163 = vmatprep.subr.bf16.mxu0 0
        %1164 = vmatpush1.bf16.msra.mxu0 0
        %1165 = vmatprep.mubr.bf16.mxu0 0
        %1166 = vmatmul.mubr.bf16.gmra.mrb[0].mxu0 %v1131
        %v1167 = vpop.f32.mrb[0].mxu0
        %v1168 = vadd.f32 0.0, %v1167
        %v1169 = vpop.f32.mrb[0].mxu0
        %v1170 = vpop.f32.mrb[0].mxu0
        %v1171 = vadd.f32 0.0, %v1170
        %v1172 = vpop.f32.mrb[0].mxu0
        %1173 = vdwg.mxu0
        %v1175 = vsel %vm547, %v1168, 0
        %v1178 = vsel %vm547, %v1171, 0
        %v1181 = vsel %vm547, %v812, 0
        %v1184 = vsel %vm547, %v813, 0
        %v1187 = vsel %vm547, %v814, 0
        %v1190 = vsel %vm547, %v815, 0
        %v1193 = vsel %vm547, %v816, 0
        %v1196 = vsel %vm547, %v817, 0
        %v1199 = vsel %vm547, %v818, 0
        %v1202 = vsel %vm547, %v819, 0
        %v1205 = vsel %vm547, %v820, 0
        %v1208 = vsel %vm547, %v821, 0
        %v1211 = vsel %vm547, %v822, 0
        %v1214 = vsel %vm547, %v823, 0
        %v1217 = vsel %vm547, %v824, 0
        %v1220 = vsel %vm547, %v825, 0
        %v1223 = vsel %vm547, %v826, 0
        %v1226 = vsel %vm547, %v827, 0
        %1228 = vmatprep.subr.mxu0 0.0
        %1229 = vmatpush1.xpose.msra.mxu0 %v1181
        %1230 = vmatprep.subr.mxu0 0.0
        %1231 = vmatpush1.xpose.msra.mxu0 %v1184
        %1232 = vmatprep.subr.mxu0 0.0
        %1233 = vmatpush1.xpose.msra.mxu0 %v1187
        %1234 = vmatprep.subr.mxu0 0.0
        %1235 = vmatpush1.xpose.msra.mxu0 %v1190
        %1236 = vmatprep.subr.mxu0 0.0
        %1237 = vmatpush1.xpose.msra.mxu0 %v1193
        %1238 = vmatprep.subr.mxu0 0.0
        %1239 = vmatpush1.xpose.msra.mxu0 %v1196
        %1240 = vmatprep.subr.mxu0 0.0
        %1241 = vmatpush1.xpose.msra.mxu0 %v1199
        %1242 = vmatprep.subr.mxu0 0.0
        %1243 = vmatpush1.xpose.msra.mxu0 %v1202
        %1244 = vmatprep.subr.mxu0 0.0
        %1245 = vmatpush1.xpose.msra.mxu0 %v1205
        %1246 = vmatprep.subr.mxu0 0.0
        %1247 = vmatpush1.xpose.msra.mxu0 %v1208
        %1248 = vmatprep.subr.mxu0 0.0
        %1249 = vmatpush1.xpose.msra.mxu0 %v1211
        %1250 = vmatprep.subr.mxu0 0.0
        %1251 = vmatpush1.xpose.msra.mxu0 %v1214
        %1252 = vmatprep.subr.mxu0 0.0
        %1253 = vmatpush1.xpose.msra.mxu0 %v1217
        %1254 = vmatprep.subr.mxu0 0.0
        %1255 = vmatpush1.xpose.msra.mxu0 %v1220
        %1256 = vmatprep.subr.mxu0 0.0
        %1257 = vmatpush1.xpose.msra.mxu0 %v1223
        %1258 = vmatprep.subr.mxu0 0.0
        %1259 = vmatpush1.xpose.msra.mxu0 %v1226
        %1260 = vmatprep.subr.mxu0 0.0
        %1261 = vmatpush1.xpose.msra.mxu0 0.0
        %1262 = vmatprep.subr.mxu0 0.0
        %1263 = vmatpush1.xpose.msra.mxu0 0.0
        %1264 = vmatprep.subr.mxu0 0.0
        %1265 = vmatpush1.xpose.msra.mxu0 0.0
        %1266 = vmatprep.subr.mxu0 0.0
        %1267 = vmatpush1.xpose.msra.mxu0 0.0
        %1268 = vmatprep.subr.mxu0 0.0
        %1269 = vmatpush1.xpose.msra.mxu0 0.0
        %1270 = vmatprep.subr.mxu0 0.0
        %1271 = vmatpush1.xpose.msra.mxu0 0.0
        %1272 = vmatprep.subr.mxu0 0.0
        %1273 = vmatpush1.xpose.msra.mxu0 0.0
        %1274 = vmatprep.subr.mxu0 0.0
        %1275 = vmatpush1.xpose.msra.mxu0 0.0
        %1276 = vmatprep.subr.mxu0 0.0
        %1277 = vmatpush1.xpose.msra.mxu0 0.0
        %1278 = vmatprep.subr.mxu0 0.0
        %1279 = vmatpush1.xpose.msra.mxu0 0.0
        %1280 = vmatprep.subr.mxu0 0.0
        %1281 = vmatpush1.xpose.msra.mxu0 0.0
        %1282 = vmatprep.subr.mxu0 0.0
        %1283 = vmatpush1.xpose.msra.mxu0 0.0
        %1284 = vmatprep.subr.mxu0 0.0
        %1285 = vmatpush1.xpose.msra.mxu0 0.0
        %1286 = vmatprep.subr.mxu0 0.0
        %1287 = vmatpush1.xpose.msra.mxu0 0.0
        %1288 = vmatprep.subr.mxu0 0.0
        %1289 = vmatpush1.xpose.msra.mxu0 0.0
        %1290 = vmatprep.subr.mxu0 0.0
        %1291 = vmatpush1.xpose.msra.mxu0 0.0
        %1292 = vmatprep.mubr.f32.mxu0 0.0
        %1293 = vmatmul.mubr.f32.gmra.mrb[0].mxu0 %v1175
        %v1294 = vpop.f32.mrb[0].mxu0
        %v1295 = vadd.f32 0.0, %v1294
        %v1296 = vpop.f32.mrb[0].mxu0
        %1297 = vmatprep.mubr.f32.mxu0 0.0
        %1298 = vmatmul.mubr.f32.gmra.mrb[0].mxu0 %v1178
        %v1299 = vpop.f32.mrb[0].mxu0
        %v1300 = vadd.f32 0.0, %v1299
        %v1301 = vpop.f32.mrb[0].mxu0
        %1302 = vdwg.mxu0
        %v1303 = vadd.f32 %v794, %v1295
        %v1304 = vadd.f32 %v795, %v1300
        %s1305 = scalar_lea.vmem %s1, 64
        %v1306 = vld [vmem:[%s1305] sm:$0xff]
        %v1307 = vld [vmem:[%s1305 + $0x8] sm:$0xff]
        %v1308 = vld [vmem:[%s1305 + $0x10] sm:$0xff]
        %v1309 = vld [vmem:[%s1305 + $0x18] sm:$0xff]
        %s1310 = scalar_lea.vmem %s2, 64
        %v1311 = vld [vmem:[%s1310] sm:$0xff]
        %v1312 = vld [vmem:[%s1310 + $0x8] sm:$0xff]
        %v1313 = vld [vmem:[%s1310 + $0x10] sm:$0xff]
        %v1314 = vld [vmem:[%s1310 + $0x18] sm:$0xff]
        %s1315 = scalar_lea.vmem %s3, 64
        %v1316 = vld [vmem:[%s1315] sm:$0xff]
        %v1317 = vld [vmem:[%s1315 + $0x8] sm:$0xff]
        %v1318 = vld [vmem:[%s1315 + $0x10] sm:$0xff]
        %v1319 = vld [vmem:[%s1315 + $0x18] sm:$0xff]
        %s1320 = scalar_lea.vmem %s5, 256
        %v1321 = vld [vmem:[%s1320] sm:$0xff]
        %v1322 = vld [vmem:[%s1320 + $0x8] sm:$0xff]
        %v1323 = vld [vmem:[%s1320 + $0x10] sm:$0xff]
        %v1324 = vld [vmem:[%s1320 + $0x18] sm:$0xff]
        %v1325 = vld [vmem:[%s1320 + $0x20] sm:$0xff]
        %v1326 = vld [vmem:[%s1320 + $0x28] sm:$0xff]
        %v1327 = vld [vmem:[%s1320 + $0x30] sm:$0xff]
        %v1328 = vld [vmem:[%s1320 + $0x38] sm:$0xff]
        %v1329 = vld [vmem:[%s1320 + $0x40] sm:$0xff]
        %v1330 = vld [vmem:[%s1320 + $0x48] sm:$0xff]
        %v1331 = vld [vmem:[%s1320 + $0x50] sm:$0xff]
        %v1332 = vld [vmem:[%s1320 + $0x58] sm:$0xff]
        %v1333 = vld [vmem:[%s1320 + $0x60] sm:$0xff]
        %v1334 = vld [vmem:[%s1320 + $0x68] sm:$0xff]
        %v1335 = vld [vmem:[%s1320 + $0x70] sm:$0xff]
        %v1336 = vld [vmem:[%s1320 + $0x78] sm:$0xff]
        %1337 = vmatprep.subr.mxu0 0.0
        %1338 = vmatpush1.xpose.msra.mxu0 %v1306
        %1339 = vmatprep.subr.mxu0 0.0
        %1340 = vmatpush1.xpose.msra.mxu0 %v1307
        %1341 = vmatprep.subr.mxu0 0.0
        %1342 = vmatpush1.xpose.msra.mxu0 %v1308
        %1343 = vmatprep.subr.mxu0 0.0
        %1344 = vmatpush1.xpose.msra.mxu0 %v1309
        %1345 = vmatprep.subr.mxu0 0.0
        %1346 = vmatpush1.xpose.msra.mxu0 0.0
        %1347 = vmatprep.subr.mxu0 0.0
        %1348 = vmatpush1.xpose.msra.mxu0 0.0
        %1349 = vmatprep.subr.mxu0 0.0
        %1350 = vmatpush1.xpose.msra.mxu0 0.0
        %1351 = vmatprep.subr.mxu0 0.0
        %1352 = vmatpush1.xpose.msra.mxu0 0.0
        %1353 = vmatprep.subr.mxu0 0.0
        %1354 = vmatpush1.xpose.msra.mxu0 0.0
        %1355 = vmatprep.subr.mxu0 0.0
        %1356 = vmatpush1.xpose.msra.mxu0 0.0
        %1357 = vmatprep.subr.mxu0 0.0
        %1358 = vmatpush1.xpose.msra.mxu0 0.0
        %1359 = vmatprep.subr.mxu0 0.0
        %1360 = vmatpush1.xpose.msra.mxu0 0.0
        %1361 = vmatprep.subr.mxu0 0.0
        %1362 = vmatpush1.xpose.msra.mxu0 0.0
        %1363 = vmatprep.subr.mxu0 0.0
        %1364 = vmatpush1.xpose.msra.mxu0 0.0
        %1365 = vmatprep.subr.mxu0 0.0
        %1366 = vmatpush1.xpose.msra.mxu0 0.0
        %1367 = vmatprep.subr.mxu0 0.0
        %1368 = vmatpush1.xpose.msra.mxu0 0.0
        %1369 = vmatprep.subr.mxu0 0.0
        %1370 = vmatpush1.xpose.msra.mxu0 0.0
        %1371 = vmatprep.subr.mxu0 0.0
        %1372 = vmatpush1.xpose.msra.mxu0 0.0
        %1373 = vmatprep.subr.mxu0 0.0
        %1374 = vmatpush1.xpose.msra.mxu0 0.0
        %1375 = vmatprep.subr.mxu0 0.0
        %1376 = vmatpush1.xpose.msra.mxu0 0.0
        %1377 = vmatprep.subr.mxu0 0.0
        %1378 = vmatpush1.xpose.msra.mxu0 0.0
        %1379 = vmatprep.subr.mxu0 0.0
        %1380 = vmatpush1.xpose.msra.mxu0 0.0
        %1381 = vmatprep.subr.mxu0 0.0
        %1382 = vmatpush1.xpose.msra.mxu0 0.0
        %1383 = vmatprep.subr.mxu0 0.0
        %1384 = vmatpush1.xpose.msra.mxu0 0.0
        %1385 = vmatprep.subr.mxu0 0.0
        %1386 = vmatpush1.xpose.msra.mxu0 0.0
        %1387 = vmatprep.subr.mxu0 0.0
        %1388 = vmatpush1.xpose.msra.mxu0 0.0
        %1389 = vmatprep.subr.mxu0 0.0
        %1390 = vmatpush1.xpose.msra.mxu0 0.0
        %1391 = vmatprep.subr.mxu0 0.0
        %1392 = vmatpush1.xpose.msra.mxu0 0.0
        %1393 = vmatprep.subr.mxu0 0.0
        %1394 = vmatpush1.xpose.msra.mxu0 0.0
        %1395 = vmatprep.subr.mxu0 0.0
        %1396 = vmatpush1.xpose.msra.mxu0 0.0
        %1397 = vmatprep.subr.mxu0 0.0
        %1398 = vmatpush1.xpose.msra.mxu0 0.0
        %1399 = vmatprep.subr.mxu0 0.0
        %1400 = vmatpush1.xpose.msra.mxu0 0.0
        %1401 = vmatprep.mubr.f32.mxu0 0.0
        %1402 = vmatmul.mubr.f32.gmra.mrb[0].mxu0 %v278
        %v1403 = vpop.f32.mrb[0].mxu0
        %v1404 = vadd.f32 0.0, %v1403
        %v1405 = vpop.f32.mrb[0].mxu0
        %1406 = vmatprep.mubr.f32.mxu0 0.0
        %1407 = vmatmul.mubr.f32.gmra.mrb[0].mxu0 %v279
        %v1408 = vpop.f32.mrb[0].mxu0
        %v1409 = vadd.f32 0.0, %v1408
        %v1410 = vpop.f32.mrb[0].mxu0
        %1411 = vdwg.mxu0
        %1412 = vmatprep.subr.mxu0 0.0
        %1413 = vmatpush1.xpose.msra.mxu0 %v1311
        %1414 = vmatprep.subr.mxu0 0.0
        %1415 = vmatpush1.xpose.msra.mxu0 %v1312
        %1416 = vmatprep.subr.mxu0 0.0
        %1417 = vmatpush1.xpose.msra.mxu0 %v1313
        %1418 = vmatprep.subr.mxu0 0.0
        %1419 = vmatpush1.xpose.msra.mxu0 %v1314
        %1420 = vmatprep.subr.mxu0 0.0
        %1421 = vmatpush1.xpose.msra.mxu0 0.0
        %1422 = vmatprep.subr.mxu0 0.0
        %1423 = vmatpush1.xpose.msra.mxu0 0.0
        %1424 = vmatprep.subr.mxu0 0.0
        %1425 = vmatpush1.xpose.msra.mxu0 0.0
        %1426 = vmatprep.subr.mxu0 0.0
        %1427 = vmatpush1.xpose.msra.mxu0 0.0
        %1428 = vmatprep.subr.mxu0 0.0
        %1429 = vmatpush1.xpose.msra.mxu0 0.0
        %1430 = vmatprep.subr.mxu0 0.0
        %1431 = vmatpush1.xpose.msra.mxu0 0.0
        %1432 = vmatprep.subr.mxu0 0.0
        %1433 = vmatpush1.xpose.msra.mxu0 0.0
        %1434 = vmatprep.subr.mxu0 0.0
        %1435 = vmatpush1.xpose.msra.mxu0 0.0
        %1436 = vmatprep.subr.mxu0 0.0
        %1437 = vmatpush1.xpose.msra.mxu0 0.0
        %1438 = vmatprep.subr.mxu0 0.0
        %1439 = vmatpush1.xpose.msra.mxu0 0.0
        %1440 = vmatprep.subr.mxu0 0.0
        %1441 = vmatpush1.xpose.msra.mxu0 0.0
        %1442 = vmatprep.subr.mxu0 0.0
        %1443 = vmatpush1.xpose.msra.mxu0 0.0
        %1444 = vmatprep.subr.mxu0 0.0
        %1445 = vmatpush1.xpose.msra.mxu0 0.0
        %1446 = vmatprep.subr.mxu0 0.0
        %1447 = vmatpush1.xpose.msra.mxu0 0.0
        %1448 = vmatprep.subr.mxu0 0.0
        %1449 = vmatpush1.xpose.msra.mxu0 0.0
        %1450 = vmatprep.subr.mxu0 0.0
        %1451 = vmatpush1.xpose.msra.mxu0 0.0
        %1452 = vmatprep.subr.mxu0 0.0
        %1453 = vmatpush1.xpose.msra.mxu0 0.0
        %1454 = vmatprep.subr.mxu0 0.0
        %1455 = vmatpush1.xpose.msra.mxu0 0.0
        %1456 = vmatprep.subr.mxu0 0.0
        %1457 = vmatpush1.xpose.msra.mxu0 0.0
        %1458 = vmatprep.subr.mxu0 0.0
        %1459 = vmatpush1.xpose.msra.mxu0 0.0
        %1460 = vmatprep.subr.mxu0 0.0
        %1461 = vmatpush1.xpose.msra.mxu0 0.0
        %1462 = vmatprep.subr.mxu0 0.0
        %1463 = vmatpush1.xpose.msra.mxu0 0.0
        %1464 = vmatprep.subr.mxu0 0.0
        %1465 = vmatpush1.xpose.msra.mxu0 0.0
        %1466 = vmatprep.subr.mxu0 0.0
        %1467 = vmatpush1.xpose.msra.mxu0 0.0
        %1468 = vmatprep.subr.mxu0 0.0
        %1469 = vmatpush1.xpose.msra.mxu0 0.0
        %1470 = vmatprep.subr.mxu0 0.0
        %1471 = vmatpush1.xpose.msra.mxu0 0.0
        %1472 = vmatprep.subr.mxu0 0.0
        %1473 = vmatpush1.xpose.msra.mxu0 0.0
        %1474 = vmatprep.subr.mxu0 0.0
        %1475 = vmatpush1.xpose.msra.mxu0 0.0
        %1476 = vmatprep.mubr.f32.mxu0 0.0
        %1477 = vmatmul.mubr.f32.gmra.mrb[0].mxu0 %v278
        %v1478 = vpop.f32.mrb[0].mxu0
        %v1479 = vadd.f32 0.0, %v1478
        %v1480 = vpop.f32.mrb[0].mxu0
        %1481 = vmatprep.mubr.f32.mxu0 0.0
        %1482 = vmatmul.mubr.f32.gmra.mrb[0].mxu0 %v279
        %v1483 = vpop.f32.mrb[0].mxu0
        %v1484 = vadd.f32 0.0, %v1483
        %v1485 = vpop.f32.mrb[0].mxu0
        %1486 = vdwg.mxu0
        %1487 = vmatprep.subr.mxu0 0.0
        %1488 = vmatpush1.xpose.msra.mxu0 %v1316
        %1489 = vmatprep.subr.mxu0 0.0
        %1490 = vmatpush1.xpose.msra.mxu0 %v1317
        %1491 = vmatprep.subr.mxu0 0.0
        %1492 = vmatpush1.xpose.msra.mxu0 %v1318
        %1493 = vmatprep.subr.mxu0 0.0
        %1494 = vmatpush1.xpose.msra.mxu0 %v1319
        %1495 = vmatprep.subr.mxu0 0.0
        %1496 = vmatpush1.xpose.msra.mxu0 0.0
        %1497 = vmatprep.subr.mxu0 0.0
        %1498 = vmatpush1.xpose.msra.mxu0 0.0
        %1499 = vmatprep.subr.mxu0 0.0
        %1500 = vmatpush1.xpose.msra.mxu0 0.0
        %1501 = vmatprep.subr.mxu0 0.0
        %1502 = vmatpush1.xpose.msra.mxu0 0.0
        %1503 = vmatprep.subr.mxu0 0.0
        %1504 = vmatpush1.xpose.msra.mxu0 0.0
        %1505 = vmatprep.subr.mxu0 0.0
        %1506 = vmatpush1.xpose.msra.mxu0 0.0
        %1507 = vmatprep.subr.mxu0 0.0
        %1508 = vmatpush1.xpose.msra.mxu0 0.0
        %1509 = vmatprep.subr.mxu0 0.0
        %1510 = vmatpush1.xpose.msra.mxu0 0.0
        %1511 = vmatprep.subr.mxu0 0.0
        %1512 = vmatpush1.xpose.msra.mxu0 0.0
        %1513 = vmatprep.subr.mxu0 0.0
        %1514 = vmatpush1.xpose.msra.mxu0 0.0
        %1515 = vmatprep.subr.mxu0 0.0
        %1516 = vmatpush1.xpose.msra.mxu0 0.0
        %1517 = vmatprep.subr.mxu0 0.0
        %1518 = vmatpush1.xpose.msra.mxu0 0.0
        %1519 = vmatprep.subr.mxu0 0.0
        %1520 = vmatpush1.xpose.msra.mxu0 0.0
        %1521 = vmatprep.subr.mxu0 0.0
        %1522 = vmatpush1.xpose.msra.mxu0 0.0
        %1523 = vmatprep.subr.mxu0 0.0
        %1524 = vmatpush1.xpose.msra.mxu0 0.0
        %1525 = vmatprep.subr.mxu0 0.0
        %1526 = vmatpush1.xpose.msra.mxu0 0.0
        %1527 = vmatprep.subr.mxu0 0.0
        %1528 = vmatpush1.xpose.msra.mxu0 0.0
        %1529 = vmatprep.subr.mxu0 0.0
        %1530 = vmatpush1.xpose.msra.mxu0 0.0
        %1531 = vmatprep.subr.mxu0 0.0
        %1532 = vmatpush1.xpose.msra.mxu0 0.0
        %1533 = vmatprep.subr.mxu0 0.0
        %1534 = vmatpush1.xpose.msra.mxu0 0.0
        %1535 = vmatprep.subr.mxu0 0.0
        %1536 = vmatpush1.xpose.msra.mxu0 0.0
        %1537 = vmatprep.subr.mxu0 0.0
        %1538 = vmatpush1.xpose.msra.mxu0 0.0
        %1539 = vmatprep.subr.mxu0 0.0
        %1540 = vmatpush1.xpose.msra.mxu0 0.0
        %1541 = vmatprep.subr.mxu0 0.0
        %1542 = vmatpush1.xpose.msra.mxu0 0.0
        %1543 = vmatprep.subr.mxu0 0.0
        %1544 = vmatpush1.xpose.msra.mxu0 0.0
        %1545 = vmatprep.subr.mxu0 0.0
        %1546 = vmatpush1.xpose.msra.mxu0 0.0
        %1547 = vmatprep.subr.mxu0 0.0
        %1548 = vmatpush1.xpose.msra.mxu0 0.0
        %1549 = vmatprep.subr.mxu0 0.0
        %1550 = vmatpush1.xpose.msra.mxu0 0.0
        %1551 = vmatprep.mubr.f32.mxu0 0.0
        %1552 = vmatmul.mubr.f32.gmra.mrb[0].mxu0 %v278
        %v1553 = vpop.f32.mrb[0].mxu0
        %v1554 = vadd.f32 0.0, %v1553
        %v1555 = vpop.f32.mrb[0].mxu0
        %1556 = vmatprep.mubr.f32.mxu0 0.0
        %1557 = vmatmul.mubr.f32.gmra.mrb[0].mxu0 %v279
        %v1558 = vpop.f32.mrb[0].mxu0
        %v1559 = vadd.f32 0.0, %v1558
        %v1560 = vpop.f32.mrb[0].mxu0
        %1561 = vdwg.mxu0
        %v1562 = vmul.f32 %v1404, 0.17677669
        %v1563 = vmul.f32 %v1409, 0.17677669
        %v1564 = vpack.c.bf16 %v1563, %v1562
        %v1565 = vpack.c.bf16 %v1484, %v1479
        %v1566 = vpack.c.bf16 %v1559, %v1554
        %v1568 = vsel %vm547, %v1564, 0
        %v1571 = vsel %vm547, %v1565, 0
        %1573 = vmatprep.subr.bf16.mxu0 0
        %1574 = vmatpush1.bf16.xpose.msra.mxu0 %v1571
        %1575 = vmatprep.subr.bf16.mxu0 0
        %1576 = vmatpush1.bf16.xpose.msra.mxu0 0
        %1577 = vmatprep.subr.bf16.mxu0 0
        %1578 = vmatpush1.bf16.xpose.msra.mxu0 0
        %1579 = vmatprep.subr.bf16.mxu0 0
        %1580 = vmatpush1.bf16.xpose.msra.mxu0 0
        %1581 = vmatprep.subr.bf16.mxu0 0
        %1582 = vmatpush1.bf16.xpose.msra.mxu0 0
        %1583 = vmatprep.subr.bf16.mxu0 0
        %1584 = vmatpush1.bf16.xpose.msra.mxu0 0
        %1585 = vmatprep.subr.bf16.mxu0 0
        %1586 = vmatpush1.bf16.xpose.msra.mxu0 0
        %1587 = vmatprep.subr.bf16.mxu0 0
        %1588 = vmatpush1.bf16.xpose.msra.mxu0 0
        %1589 = vmatprep.subr.bf16.mxu0 0
        %1590 = vmatpush1.bf16.xpose.msra.mxu0 0
        %1591 = vmatprep.subr.bf16.mxu0 0
        %1592 = vmatpush1.bf16.xpose.msra.mxu0 0
        %1593 = vmatprep.subr.bf16.mxu0 0
        %1594 = vmatpush1.bf16.xpose.msra.mxu0 0
        %1595 = vmatprep.subr.bf16.mxu0 0
        %1596 = vmatpush1.bf16.xpose.msra.mxu0 0
        %1597 = vmatprep.subr.bf16.mxu0 0
        %1598 = vmatpush1.bf16.xpose.msra.mxu0 0
        %1599 = vmatprep.subr.bf16.mxu0 0
        %1600 = vmatpush1.bf16.xpose.msra.mxu0 0
        %1601 = vmatprep.subr.bf16.mxu0 0
        %1602 = vmatpush1.bf16.xpose.msra.mxu0 0
        %1603 = vmatprep.subr.bf16.mxu0 0
        %1604 = vmatpush1.bf16.xpose.msra.mxu0 0
        %1605 = vmatprep.mubr.bf16.mxu0 0
        %1606 = vmatmul.mubr.bf16.gmra.mrb[0].mxu0 %v1568
        %v1607 = vpop.f32.mrb[0].mxu0
        %v1608 = vadd.f32 0.0, %v1607
        %v1609 = vpop.f32.mrb[0].mxu0
        %v1610 = vpop.f32.mrb[0].mxu0
        %v1611 = vadd.f32 0.0, %v1610
        %v1612 = vpop.f32.mrb[0].mxu0
        %1613 = vdwg.mxu0
        %v1614 = vsel %vm595, %v1608, -inf
        %1615 = vmax.xlane.f32.xlu0 %v1614
        %v1616 = vpop.xlane.xlu0 %1615
        %v1617 = vsel %vm595, %v1611, -inf
        %1618 = vmax.xlane.f32.xlu0 %v1617
        %v1619 = vpop.xlane.xlu0 %1618
        %v1620 = vsub.f32 %v1608, %v1616
        %v1621 = vsub.f32 %v1611, %v1619
        %v1622 = vmul.f32 %v1620, 1.442695
        %v1623 = vpow.pop %v1622
        %v1624 = vmul.f32 %v1621, 1.442695
        %v1625 = vpow.pop %v1624
        %v1626 = vsel %vm595, %v1623, 0.0
        %1627 = vadd.xlane.f32.xlu0 %v1626
        %v1628 = vpop.xlane.xlu0 %1627
        %v1629 = vsel %vm595, %v1625, 0.0
        %1630 = vadd.xlane.f32.xlu0 %v1629
        %v1631 = vpop.xlane.xlu0 %1630
        %v1632 = vrcp.pop %v1628
        %v1633 = vrcp.pop %v1631
        %v1634 = vmul.f32 %v1623, %v1632
        %v1635 = vmul.f32 %v1625, %v1633
        %v1636 = vadd.f32 %v1634, %v280
        %v1637 = vadd.f32 %v1635, %v281
        %v1638 = vpack.c.bf16 %v1637, %v1636
        %v1640 = vsel %vm595, %v1638, 0
        %1642 = vmatprep.subr.bf16.mxu0 0
        %1643 = vmatpush1.bf16.msra.mxu0 %v1566
        %1644 = vmatprep.subr.bf16.mxu0 0
        %1645 = vmatpush1.bf16.msra.mxu0 0
        %1646 = vmatprep.subr.bf16.mxu0 0
        %1647 = vmatpush1.bf16.msra.mxu0 0
        %1648 = vmatprep.subr.bf16.mxu0 0
        %1649 = vmatpush1.bf16.msra.mxu0 0
        %1650 = vmatprep.subr.bf16.mxu0 0
        %1651 = vmatpush1.bf16.msra.mxu0 0
        %1652 = vmatprep.subr.bf16.mxu0 0
        %1653 = vmatpush1.bf16.msra.mxu0 0
        %1654 = vmatprep.subr.bf16.mxu0 0
        %1655 = vmatpush1.bf16.msra.mxu0 0
        %1656 = vmatprep.subr.bf16.mxu0 0
        %1657 = vmatpush1.bf16.msra.mxu0 0
        %1658 = vmatprep.subr.bf16.mxu0 0
        %1659 = vmatpush1.bf16.msra.mxu0 0
        %1660 = vmatprep.subr.bf16.mxu0 0
        %1661 = vmatpush1.bf16.msra.mxu0 0
        %1662 = vmatprep.subr.bf16.mxu0 0
        %1663 = vmatpush1.bf16.msra.mxu0 0
        %1664 = vmatprep.subr.bf16.mxu0 0
        %1665 = vmatpush1.bf16.msra.mxu0 0
        %1666 = vmatprep.subr.bf16.mxu0 0
        %1667 = vmatpush1.bf16.msra.mxu0 0
        %1668 = vmatprep.subr.bf16.mxu0 0
        %1669 = vmatpush1.bf16.msra.mxu0 0
        %1670 = vmatprep.subr.bf16.mxu0 0
        %1671 = vmatpush1.bf16.msra.mxu0 0
        %1672 = vmatprep.subr.bf16.mxu0 0
        %1673 = vmatpush1.bf16.msra.mxu0 0
        %1674 = vmatprep.mubr.bf16.mxu0 0
        %1675 = vmatmul.mubr.bf16.gmra.mrb[0].mxu0 %v1640
        %v1676 = vpop.f32.mrb[0].mxu0
        %v1677 = vadd.f32 0.0, %v1676
        %v1678 = vpop.f32.mrb[0].mxu0
        %v1679 = vpop.f32.mrb[0].mxu0
        %v1680 = vadd.f32 0.0, %v1679
        %v1681 = vpop.f32.mrb[0].mxu0
        %1682 = vdwg.mxu0
        %v1684 = vsel %vm547, %v1677, 0
        %v1687 = vsel %vm547, %v1680, 0
        %v1690 = vsel %vm547, %v1321, 0
        %v1693 = vsel %vm547, %v1322, 0
        %v1696 = vsel %vm547, %v1323, 0
        %v1699 = vsel %vm547, %v1324, 0
        %v1702 = vsel %vm547, %v1325, 0
        %v1705 = vsel %vm547, %v1326, 0
        %v1708 = vsel %vm547, %v1327, 0
        %v1711 = vsel %vm547, %v1328, 0
        %v1714 = vsel %vm547, %v1329, 0
        %v1717 = vsel %vm547, %v1330, 0
        %v1720 = vsel %vm547, %v1331, 0
        %v1723 = vsel %vm547, %v1332, 0
        %v1726 = vsel %vm547, %v1333, 0
        %v1729 = vsel %vm547, %v1334, 0
        %v1732 = vsel %vm547, %v1335, 0
        %v1735 = vsel %vm547, %v1336, 0
        %1737 = vmatprep.subr.mxu0 0.0
        %1738 = vmatpush1.xpose.msra.mxu0 %v1690
        %1739 = vmatprep.subr.mxu0 0.0
        %1740 = vmatpush1.xpose.msra.mxu0 %v1693
        %1741 = vmatprep.subr.mxu0 0.0
        %1742 = vmatpush1.xpose.msra.mxu0 %v1696
        %1743 = vmatprep.subr.mxu0 0.0
        %1744 = vmatpush1.xpose.msra.mxu0 %v1699
        %1745 = vmatprep.subr.mxu0 0.0
        %1746 = vmatpush1.xpose.msra.mxu0 %v1702
        %1747 = vmatprep.subr.mxu0 0.0
        %1748 = vmatpush1.xpose.msra.mxu0 %v1705
        %1749 = vmatprep.subr.mxu0 0.0
        %1750 = vmatpush1.xpose.msra.mxu0 %v1708
        %1751 = vmatprep.subr.mxu0 0.0
        %1752 = vmatpush1.xpose.msra.mxu0 %v1711
        %1753 = vmatprep.subr.mxu0 0.0
        %1754 = vmatpush1.xpose.msra.mxu0 %v1714
        %1755 = vmatprep.subr.mxu0 0.0
        %1756 = vmatpush1.xpose.msra.mxu0 %v1717
        %1757 = vmatprep.subr.mxu0 0.0
        %1758 = vmatpush1.xpose.msra.mxu0 %v1720
        %1759 = vmatprep.subr.mxu0 0.0
        %1760 = vmatpush1.xpose.msra.mxu0 %v1723
        %1761 = vmatprep.subr.mxu0 0.0
        %1762 = vmatpush1.xpose.msra.mxu0 %v1726
        %1763 = vmatprep.subr.mxu0 0.0
        %1764 = vmatpush1.xpose.msra.mxu0 %v1729
        %1765 = vmatprep.subr.mxu0 0.0
        %1766 = vmatpush1.xpose.msra.mxu0 %v1732
        %1767 = vmatprep.subr.mxu0 0.0
        %1768 = vmatpush1.xpose.msra.mxu0 %v1735
        %1769 = vmatprep.subr.mxu0 0.0
        %1770 = vmatpush1.xpose.msra.mxu0 0.0
        %1771 = vmatprep.subr.mxu0 0.0
        %1772 = vmatpush1.xpose.msra.mxu0 0.0
        %1773 = vmatprep.subr.mxu0 0.0
        %1774 = vmatpush1.xpose.msra.mxu0 0.0
        %1775 = vmatprep.subr.mxu0 0.0
        %1776 = vmatpush1.xpose.msra.mxu0 0.0
        %1777 = vmatprep.subr.mxu0 0.0
        %1778 = vmatpush1.xpose.msra.mxu0 0.0
        %1779 = vmatprep.subr.mxu0 0.0
        %1780 = vmatpush1.xpose.msra.mxu0 0.0
        %1781 = vmatprep.subr.mxu0 0.0
        %1782 = vmatpush1.xpose.msra.mxu0 0.0
        %1783 = vmatprep.subr.mxu0 0.0
        %1784 = vmatpush1.xpose.msra.mxu0 0.0
        %1785 = vmatprep.subr.mxu0 0.0
        %1786 = vmatpush1.xpose.msra.mxu0 0.0
        %1787 = vmatprep.subr.mxu0 0.0
        %1788 = vmatpush1.xpose.msra.mxu0 0.0
        %1789 = vmatprep.subr.mxu0 0.0
        %1790 = vmatpush1.xpose.msra.mxu0 0.0
        %1791 = vmatprep.subr.mxu0 0.0
        %1792 = vmatpush1.xpose.msra.mxu0 0.0
        %1793 = vmatprep.subr.mxu0 0.0
        %1794 = vmatpush1.xpose.msra.mxu0 0.0
        %1795 = vmatprep.subr.mxu0 0.0
        %1796 = vmatpush1.xpose.msra.mxu0 0.0
        %1797 = vmatprep.subr.mxu0 0.0
        %1798 = vmatpush1.xpose.msra.mxu0 0.0
        %1799 = vmatprep.subr.mxu0 0.0
        %1800 = vmatpush1.xpose.msra.mxu0 0.0
        %1801 = vmatprep.mubr.f32.mxu0 0.0
        %1802 = vmatmul.mubr.f32.gmra.mrb[0].mxu0 %v1684
        %v1803 = vpop.f32.mrb[0].mxu0
        %v1804 = vadd.f32 0.0, %v1803
        %v1805 = vpop.f32.mrb[0].mxu0
        %1806 = vmatprep.mubr.f32.mxu0 0.0
        %1807 = vmatmul.mubr.f32.gmra.mrb[0].mxu0 %v1687
        %v1808 = vpop.f32.mrb[0].mxu0
        %v1809 = vadd.f32 0.0, %v1808
        %v1810 = vpop.f32.mrb[0].mxu0
        %1811 = vdwg.mxu0
        %v1812 = vadd.f32 %v1303, %v1804
        %v1813 = vadd.f32 %v1304, %v1809
        %s1814 = scalar_lea.vmem %s1, 96
        %v1815 = vld [vmem:[%s1814] sm:$0xff]
        %v1816 = vld [vmem:[%s1814 + $0x8] sm:$0xff]
        %v1817 = vld [vmem:[%s1814 + $0x10] sm:$0xff]
        %v1818 = vld [vmem:[%s1814 + $0x18] sm:$0xff]
        %s1819 = scalar_lea.vmem %s2, 96
        %v1820 = vld [vmem:[%s1819] sm:$0xff]
        %v1821 = vld [vmem:[%s1819 + $0x8] sm:$0xff]
        %v1822 = vld [vmem:[%s1819 + $0x10] sm:$0xff]
        %v1823 = vld [vmem:[%s1819 + $0x18] sm:$0xff]
        %s1824 = scalar_lea.vmem %s3, 96
        %v1825 = vld [vmem:[%s1824] sm:$0xff]
        %v1826 = vld [vmem:[%s1824 + $0x8] sm:$0xff]
        %v1827 = vld [vmem:[%s1824 + $0x10] sm:$0xff]
        %v1828 = vld [vmem:[%s1824 + $0x18] sm:$0xff]
        %s1829 = scalar_lea.vmem %s5, 384
        %v1830 = vld [vmem:[%s1829] sm:$0xff]
        %v1831 = vld [vmem:[%s1829 + $0x8] sm:$0xff]
        %v1832 = vld [vmem:[%s1829 + $0x10] sm:$0xff]
        %v1833 = vld [vmem:[%s1829 + $0x18] sm:$0xff]
        %v1834 = vld [vmem:[%s1829 + $0x20] sm:$0xff]
        %v1835 = vld [vmem:[%s1829 + $0x28] sm:$0xff]
        %v1836 = vld [vmem:[%s1829 + $0x30] sm:$0xff]
        %v1837 = vld [vmem:[%s1829 + $0x38] sm:$0xff]
        %v1838 = vld [vmem:[%s1829 + $0x40] sm:$0xff]
        %v1839 = vld [vmem:[%s1829 + $0x48] sm:$0xff]
        %v1840 = vld [vmem:[%s1829 + $0x50] sm:$0xff]
        %v1841 = vld [vmem:[%s1829 + $0x58] sm:$0xff]
        %v1842 = vld [vmem:[%s1829 + $0x60] sm:$0xff]
        %v1843 = vld [vmem:[%s1829 + $0x68] sm:$0xff]
        %v1844 = vld [vmem:[%s1829 + $0x70] sm:$0xff]
        %v1845 = vld [vmem:[%s1829 + $0x78] sm:$0xff]
        %1846 = vmatprep.subr.mxu0 0.0
        %1847 = vmatpush1.xpose.msra.mxu0 %v1815
        %1848 = vmatprep.subr.mxu0 0.0
        %1849 = vmatpush1.xpose.msra.mxu0 %v1816
        %1850 = vmatprep.subr.mxu0 0.0
        %1851 = vmatpush1.xpose.msra.mxu0 %v1817
        %1852 = vmatprep.subr.mxu0 0.0
        %1853 = vmatpush1.xpose.msra.mxu0 %v1818
        %1854 = vmatprep.subr.mxu0 0.0
        %1855 = vmatpush1.xpose.msra.mxu0 0.0
        %1856 = vmatprep.subr.mxu0 0.0
        %1857 = vmatpush1.xpose.msra.mxu0 0.0
        %1858 = vmatprep.subr.mxu0 0.0
        %1859 = vmatpush1.xpose.msra.mxu0 0.0
        %1860 = vmatprep.subr.mxu0 0.0
        %1861 = vmatpush1.xpose.msra.mxu0 0.0
        %1862 = vmatprep.subr.mxu0 0.0
        %1863 = vmatpush1.xpose.msra.mxu0 0.0
        %1864 = vmatprep.subr.mxu0 0.0
        %1865 = vmatpush1.xpose.msra.mxu0 0.0
        %1866 = vmatprep.subr.mxu0 0.0
        %1867 = vmatpush1.xpose.msra.mxu0 0.0
        %1868 = vmatprep.subr.mxu0 0.0
        %1869 = vmatpush1.xpose.msra.mxu0 0.0
        %1870 = vmatprep.subr.mxu0 0.0
        %1871 = vmatpush1.xpose.msra.mxu0 0.0
        %1872 = vmatprep.subr.mxu0 0.0
        %1873 = vmatpush1.xpose.msra.mxu0 0.0
        %1874 = vmatprep.subr.mxu0 0.0
        %1875 = vmatpush1.xpose.msra.mxu0 0.0
        %1876 = vmatprep.subr.mxu0 0.0
        %1877 = vmatpush1.xpose.msra.mxu0 0.0
        %1878 = vmatprep.subr.mxu0 0.0
        %1879 = vmatpush1.xpose.msra.mxu0 0.0
        %1880 = vmatprep.subr.mxu0 0.0
        %1881 = vmatpush1.xpose.msra.mxu0 0.0
        %1882 = vmatprep.subr.mxu0 0.0
        %1883 = vmatpush1.xpose.msra.mxu0 0.0
        %1884 = vmatprep.subr.mxu0 0.0
        %1885 = vmatpush1.xpose.msra.mxu0 0.0
        %1886 = vmatprep.subr.mxu0 0.0
        %1887 = vmatpush1.xpose.msra.mxu0 0.0
        %1888 = vmatprep.subr.mxu0 0.0
        %1889 = vmatpush1.xpose.msra.mxu0 0.0
        %1890 = vmatprep.subr.mxu0 0.0
        %1891 = vmatpush1.xpose.msra.mxu0 0.0
        %1892 = vmatprep.subr.mxu0 0.0
        %1893 = vmatpush1.xpose.msra.mxu0 0.0
        %1894 = vmatprep.subr.mxu0 0.0
        %1895 = vmatpush1.xpose.msra.mxu0 0.0
        %1896 = vmatprep.subr.mxu0 0.0
        %1897 = vmatpush1.xpose.msra.mxu0 0.0
        %1898 = vmatprep.subr.mxu0 0.0
        %1899 = vmatpush1.xpose.msra.mxu0 0.0
        %1900 = vmatprep.subr.mxu0 0.0
        %1901 = vmatpush1.xpose.msra.mxu0 0.0
        %1902 = vmatprep.subr.mxu0 0.0
        %1903 = vmatpush1.xpose.msra.mxu0 0.0
        %1904 = vmatprep.subr.mxu0 0.0
        %1905 = vmatpush1.xpose.msra.mxu0 0.0
        %1906 = vmatprep.subr.mxu0 0.0
        %1907 = vmatpush1.xpose.msra.mxu0 0.0
        %1908 = vmatprep.subr.mxu0 0.0
        %1909 = vmatpush1.xpose.msra.mxu0 0.0
        %1910 = vmatprep.mubr.f32.mxu0 0.0
        %1911 = vmatmul.mubr.f32.gmra.mrb[0].mxu0 %v278
        %v1912 = vpop.f32.mrb[0].mxu0
        %v1913 = vadd.f32 0.0, %v1912
        %v1914 = vpop.f32.mrb[0].mxu0
        %1915 = vmatprep.mubr.f32.mxu0 0.0
        %1916 = vmatmul.mubr.f32.gmra.mrb[0].mxu0 %v279
        %v1917 = vpop.f32.mrb[0].mxu0
        %v1918 = vadd.f32 0.0, %v1917
        %v1919 = vpop.f32.mrb[0].mxu0
        %1920 = vdwg.mxu0
        %1921 = vmatprep.subr.mxu0 0.0
        %1922 = vmatpush1.xpose.msra.mxu0 %v1820
        %1923 = vmatprep.subr.mxu0 0.0
        %1924 = vmatpush1.xpose.msra.mxu0 %v1821
        %1925 = vmatprep.subr.mxu0 0.0
        %1926 = vmatpush1.xpose.msra.mxu0 %v1822
        %1927 = vmatprep.subr.mxu0 0.0
        %1928 = vmatpush1.xpose.msra.mxu0 %v1823
        %1929 = vmatprep.subr.mxu0 0.0
        %1930 = vmatpush1.xpose.msra.mxu0 0.0
        %1931 = vmatprep.subr.mxu0 0.0
        %1932 = vmatpush1.xpose.msra.mxu0 0.0
        %1933 = vmatprep.subr.mxu0 0.0
        %1934 = vmatpush1.xpose.msra.mxu0 0.0
        %1935 = vmatprep.subr.mxu0 0.0
        %1936 = vmatpush1.xpose.msra.mxu0 0.0
        %1937 = vmatprep.subr.mxu0 0.0
        %1938 = vmatpush1.xpose.msra.mxu0 0.0
        %1939 = vmatprep.subr.mxu0 0.0
        %1940 = vmatpush1.xpose.msra.mxu0 0.0
        %1941 = vmatprep.subr.mxu0 0.0
        %1942 = vmatpush1.xpose.msra.mxu0 0.0
        %1943 = vmatprep.subr.mxu0 0.0
        %1944 = vmatpush1.xpose.msra.mxu0 0.0
        %1945 = vmatprep.subr.mxu0 0.0
        %1946 = vmatpush1.xpose.msra.mxu0 0.0
        %1947 = vmatprep.subr.mxu0 0.0
        %1948 = vmatpush1.xpose.msra.mxu0 0.0
        %1949 = vmatprep.subr.mxu0 0.0
        %1950 = vmatpush1.xpose.msra.mxu0 0.0
        %1951 = vmatprep.subr.mxu0 0.0
        %1952 = vmatpush1.xpose.msra.mxu0 0.0
        %1953 = vmatprep.subr.mxu0 0.0
        %1954 = vmatpush1.xpose.msra.mxu0 0.0
        %1955 = vmatprep.subr.mxu0 0.0
        %1956 = vmatpush1.xpose.msra.mxu0 0.0
        %1957 = vmatprep.subr.mxu0 0.0
        %1958 = vmatpush1.xpose.msra.mxu0 0.0
        %1959 = vmatprep.subr.mxu0 0.0
        %1960 = vmatpush1.xpose.msra.mxu0 0.0
        %1961 = vmatprep.subr.mxu0 0.0
        %1962 = vmatpush1.xpose.msra.mxu0 0.0
        %1963 = vmatprep.subr.mxu0 0.0
        %1964 = vmatpush1.xpose.msra.mxu0 0.0
        %1965 = vmatprep.subr.mxu0 0.0
        %1966 = vmatpush1.xpose.msra.mxu0 0.0
        %1967 = vmatprep.subr.mxu0 0.0
        %1968 = vmatpush1.xpose.msra.mxu0 0.0
        %1969 = vmatprep.subr.mxu0 0.0
        %1970 = vmatpush1.xpose.msra.mxu0 0.0
        %1971 = vmatprep.subr.mxu0 0.0
        %1972 = vmatpush1.xpose.msra.mxu0 0.0
        %1973 = vmatprep.subr.mxu0 0.0
        %1974 = vmatpush1.xpose.msra.mxu0 0.0
        %1975 = vmatprep.subr.mxu0 0.0
        %1976 = vmatpush1.xpose.msra.mxu0 0.0
        %1977 = vmatprep.subr.mxu0 0.0
        %1978 = vmatpush1.xpose.msra.mxu0 0.0
        %1979 = vmatprep.subr.mxu0 0.0
        %1980 = vmatpush1.xpose.msra.mxu0 0.0
        %1981 = vmatprep.subr.mxu0 0.0
        %1982 = vmatpush1.xpose.msra.mxu0 0.0
        %1983 = vmatprep.subr.mxu0 0.0
        %1984 = vmatpush1.xpose.msra.mxu0 0.0
        %1985 = vmatprep.mubr.f32.mxu0 0.0
        %1986 = vmatmul.mubr.f32.gmra.mrb[0].mxu0 %v278
        %v1987 = vpop.f32.mrb[0].mxu0
        %v1988 = vadd.f32 0.0, %v1987
        %v1989 = vpop.f32.mrb[0].mxu0
        %1990 = vmatprep.mubr.f32.mxu0 0.0
        %1991 = vmatmul.mubr.f32.gmra.mrb[0].mxu0 %v279
        %v1992 = vpop.f32.mrb[0].mxu0
        %v1993 = vadd.f32 0.0, %v1992
        %v1994 = vpop.f32.mrb[0].mxu0
        %1995 = vdwg.mxu0
        %1996 = vmatprep.subr.mxu0 0.0
        %1997 = vmatpush1.xpose.msra.mxu0 %v1825
        %1998 = vmatprep.subr.mxu0 0.0
        %1999 = vmatpush1.xpose.msra.mxu0 %v1826
        %2000 = vmatprep.subr.mxu0 0.0
        %2001 = vmatpush1.xpose.msra.mxu0 %v1827
        %2002 = vmatprep.subr.mxu0 0.0
        %2003 = vmatpush1.xpose.msra.mxu0 %v1828
        %2004 = vmatprep.subr.mxu0 0.0
        %2005 = vmatpush1.xpose.msra.mxu0 0.0
        %2006 = vmatprep.subr.mxu0 0.0
        %2007 = vmatpush1.xpose.msra.mxu0 0.0
        %2008 = vmatprep.subr.mxu0 0.0
        %2009 = vmatpush1.xpose.msra.mxu0 0.0
        %2010 = vmatprep.subr.mxu0 0.0
        %2011 = vmatpush1.xpose.msra.mxu0 0.0
        %2012 = vmatprep.subr.mxu0 0.0
        %2013 = vmatpush1.xpose.msra.mxu0 0.0
        %2014 = vmatprep.subr.mxu0 0.0
        %2015 = vmatpush1.xpose.msra.mxu0 0.0
        %2016 = vmatprep.subr.mxu0 0.0
        %2017 = vmatpush1.xpose.msra.mxu0 0.0
        %2018 = vmatprep.subr.mxu0 0.0
        %2019 = vmatpush1.xpose.msra.mxu0 0.0
        %2020 = vmatprep.subr.mxu0 0.0
        %2021 = vmatpush1.xpose.msra.mxu0 0.0
        %2022 = vmatprep.subr.mxu0 0.0
        %2023 = vmatpush1.xpose.msra.mxu0 0.0
        %2024 = vmatprep.subr.mxu0 0.0
        %2025 = vmatpush1.xpose.msra.mxu0 0.0
        %2026 = vmatprep.subr.mxu0 0.0
        %2027 = vmatpush1.xpose.msra.mxu0 0.0
        %2028 = vmatprep.subr.mxu0 0.0
        %2029 = vmatpush1.xpose.msra.mxu0 0.0
        %2030 = vmatprep.subr.mxu0 0.0
        %2031 = vmatpush1.xpose.msra.mxu0 0.0
        %2032 = vmatprep.subr.mxu0 0.0
        %2033 = vmatpush1.xpose.msra.mxu0 0.0
        %2034 = vmatprep.subr.mxu0 0.0
        %2035 = vmatpush1.xpose.msra.mxu0 0.0
        %2036 = vmatprep.subr.mxu0 0.0
        %2037 = vmatpush1.xpose.msra.mxu0 0.0
        %2038 = vmatprep.subr.mxu0 0.0
        %2039 = vmatpush1.xpose.msra.mxu0 0.0
        %2040 = vmatprep.subr.mxu0 0.0
        %2041 = vmatpush1.xpose.msra.mxu0 0.0
        %2042 = vmatprep.subr.mxu0 0.0
        %2043 = vmatpush1.xpose.msra.mxu0 0.0
        %2044 = vmatprep.subr.mxu0 0.0
        %2045 = vmatpush1.xpose.msra.mxu0 0.0
        %2046 = vmatprep.subr.mxu0 0.0
        %2047 = vmatpush1.xpose.msra.mxu0 0.0
        %2048 = vmatprep.subr.mxu0 0.0
        %2049 = vmatpush1.xpose.msra.mxu0 0.0
        %2050 = vmatprep.subr.mxu0 0.0
        %2051 = vmatpush1.xpose.msra.mxu0 0.0
        %2052 = vmatprep.subr.mxu0 0.0
        %2053 = vmatpush1.xpose.msra.mxu0 0.0
        %2054 = vmatprep.subr.mxu0 0.0
        %2055 = vmatpush1.xpose.msra.mxu0 0.0
        %2056 = vmatprep.subr.mxu0 0.0
        %2057 = vmatpush1.xpose.msra.mxu0 0.0
        %2058 = vmatprep.subr.mxu0 0.0
        %2059 = vmatpush1.xpose.msra.mxu0 0.0
        %2060 = vmatprep.mubr.f32.mxu0 0.0
        %2061 = vmatmul.mubr.f32.gmra.mrb[0].mxu0 %v278
        %v2062 = vpop.f32.mrb[0].mxu0
        %v2063 = vadd.f32 0.0, %v2062
        %v2064 = vpop.f32.mrb[0].mxu0
        %2065 = vmatprep.mubr.f32.mxu0 0.0
        %2066 = vmatmul.mubr.f32.gmra.mrb[0].mxu0 %v279
        %v2067 = vpop.f32.mrb[0].mxu0
        %v2068 = vadd.f32 0.0, %v2067
        %v2069 = vpop.f32.mrb[0].mxu0
        %2070 = vdwg.mxu0
        %v2071 = vmul.f32 %v1913, 0.17677669
        %v2072 = vmul.f32 %v1918, 0.17677669
        %v2073 = vpack.c.bf16 %v2072, %v2071
        %v2074 = vpack.c.bf16 %v1993, %v1988
        %v2075 = vpack.c.bf16 %v2068, %v2063
        %v2077 = vsel %vm547, %v2073, 0
        %v2080 = vsel %vm547, %v2074, 0
        %2082 = vmatprep.subr.bf16.mxu0 0
        %2083 = vmatpush1.bf16.xpose.msra.mxu0 %v2080
        %2084 = vmatprep.subr.bf16.mxu0 0
        %2085 = vmatpush1.bf16.xpose.msra.mxu0 0
        %2086 = vmatprep.subr.bf16.mxu0 0
        %2087 = vmatpush1.bf16.xpose.msra.mxu0 0
        %2088 = vmatprep.subr.bf16.mxu0 0
        %2089 = vmatpush1.bf16.xpose.msra.mxu0 0
        %2090 = vmatprep.subr.bf16.mxu0 0
        %2091 = vmatpush1.bf16.xpose.msra.mxu0 0
        %2092 = vmatprep.subr.bf16.mxu0 0
        %2093 = vmatpush1.bf16.xpose.msra.mxu0 0
        %2094 = vmatprep.subr.bf16.mxu0 0
        %2095 = vmatpush1.bf16.xpose.msra.mxu0 0
        %2096 = vmatprep.subr.bf16.mxu0 0
        %2097 = vmatpush1.bf16.xpose.msra.mxu0 0
        %2098 = vmatprep.subr.bf16.mxu0 0
        %2099 = vmatpush1.bf16.xpose.msra.mxu0 0
        %2100 = vmatprep.subr.bf16.mxu0 0
        %2101 = vmatpush1.bf16.xpose.msra.mxu0 0
        %2102 = vmatprep.subr.bf16.mxu0 0
        %2103 = vmatpush1.bf16.xpose.msra.mxu0 0
        %2104 = vmatprep.subr.bf16.mxu0 0
        %2105 = vmatpush1.bf16.xpose.msra.mxu0 0
        %2106 = vmatprep.subr.bf16.mxu0 0
        %2107 = vmatpush1.bf16.xpose.msra.mxu0 0
        %2108 = vmatprep.subr.bf16.mxu0 0
        %2109 = vmatpush1.bf16.xpose.msra.mxu0 0
        %2110 = vmatprep.subr.bf16.mxu0 0
        %2111 = vmatpush1.bf16.xpose.msra.mxu0 0
        %2112 = vmatprep.subr.bf16.mxu0 0
        %2113 = vmatpush1.bf16.xpose.msra.mxu0 0
        %2114 = vmatprep.mubr.bf16.mxu0 0
        %2115 = vmatmul.mubr.bf16.gmra.mrb[0].mxu0 %v2077
        %v2116 = vpop.f32.mrb[0].mxu0
        %v2117 = vadd.f32 0.0, %v2116
        %v2118 = vpop.f32.mrb[0].mxu0
        %v2119 = vpop.f32.mrb[0].mxu0
        %v2120 = vadd.f32 0.0, %v2119
        %v2121 = vpop.f32.mrb[0].mxu0
        %2122 = vdwg.mxu0
        %v2123 = vsel %vm595, %v2117, -inf
        %2124 = vmax.xlane.f32.xlu0 %v2123
        %v2125 = vpop.xlane.xlu0 %2124
        %v2126 = vsel %vm595, %v2120, -inf
        %2127 = vmax.xlane.f32.xlu0 %v2126
        %v2128 = vpop.xlane.xlu0 %2127
        %v2129 = vsub.f32 %v2117, %v2125
        %v2130 = vsub.f32 %v2120, %v2128
        %v2131 = vmul.f32 %v2129, 1.442695
        %v2132 = vpow.pop %v2131
        %v2133 = vmul.f32 %v2130, 1.442695
        %v2134 = vpow.pop %v2133
        %v2135 = vsel %vm595, %v2132, 0.0
        %2136 = vadd.xlane.f32.xlu0 %v2135
        %v2137 = vpop.xlane.xlu0 %2136
        %v2138 = vsel %vm595, %v2134, 0.0
        %2139 = vadd.xlane.f32.xlu0 %v2138
        %v2140 = vpop.xlane.xlu0 %2139
        %v2141 = vrcp.pop %v2137
        %v2142 = vrcp.pop %v2140
        %v2143 = vmul.f32 %v2132, %v2141
        %v2144 = vmul.f32 %v2134, %v2142
        %v2145 = vadd.f32 %v2143, %v280
        %v2146 = vadd.f32 %v2144, %v281
        %v2147 = vpack.c.bf16 %v2146, %v2145
        %v2149 = vsel %vm595, %v2147, 0
        %2151 = vmatprep.subr.bf16.mxu0 0
        %2152 = vmatpush1.bf16.msra.mxu0 %v2075
        %2153 = vmatprep.subr.bf16.mxu0 0
        %2154 = vmatpush1.bf16.msra.mxu0 0
        %2155 = vmatprep.subr.bf16.mxu0 0
        %2156 = vmatpush1.bf16.msra.mxu0 0
        %2157 = vmatprep.subr.bf16.mxu0 0
        %2158 = vmatpush1.bf16.msra.mxu0 0
        %2159 = vmatprep.subr.bf16.mxu0 0
        %2160 = vmatpush1.bf16.msra.mxu0 0
        %2161 = vmatprep.subr.bf16.mxu0 0
        %2162 = vmatpush1.bf16.msra.mxu0 0
        %2163 = vmatprep.subr.bf16.mxu0 0
        %2164 = vmatpush1.bf16.msra.mxu0 0
        %2165 = vmatprep.subr.bf16.mxu0 0
        %2166 = vmatpush1.bf16.msra.mxu0 0
        %2167 = vmatprep.subr.bf16.mxu0 0
        %2168 = vmatpush1.bf16.msra.mxu0 0
        %2169 = vmatprep.subr.bf16.mxu0 0
        %2170 = vmatpush1.bf16.msra.mxu0 0
        %2171 = vmatprep.subr.bf16.mxu0 0
        %2172 = vmatpush1.bf16.msra.mxu0 0
        %2173 = vmatprep.subr.bf16.mxu0 0
        %2174 = vmatpush1.bf16.msra.mxu0 0
        %2175 = vmatprep.subr.bf16.mxu0 0
        %2176 = vmatpush1.bf16.msra.mxu0 0
        %2177 = vmatprep.subr.bf16.mxu0 0
        %2178 = vmatpush1.bf16.msra.mxu0 0
        %2179 = vmatprep.subr.bf16.mxu0 0
        %2180 = vmatpush1.bf16.msra.mxu0 0
        %2181 = vmatprep.subr.bf16.mxu0 0
        %2182 = vmatpush1.bf16.msra.mxu0 0
        %2183 = vmatprep.mubr.bf16.mxu0 0
        %2184 = vmatmul.mubr.bf16.gmra.mrb[0].mxu0 %v2149
        %v2185 = vpop.f32.mrb[0].mxu0
        %v2186 = vadd.f32 0.0, %v2185
        %v2187 = vpop.f32.mrb[0].mxu0
        %v2188 = vpop.f32.mrb[0].mxu0
        %v2189 = vadd.f32 0.0, %v2188
        %v2190 = vpop.f32.mrb[0].mxu0
        %2191 = vdwg.mxu0
        %v2193 = vsel %vm547, %v2186, 0
        %v2196 = vsel %vm547, %v2189, 0
        %v2199 = vsel %vm547, %v1830, 0
        %v2202 = vsel %vm547, %v1831, 0
        %v2205 = vsel %vm547, %v1832, 0
        %v2208 = vsel %vm547, %v1833, 0
        %v2211 = vsel %vm547, %v1834, 0
        %v2214 = vsel %vm547, %v1835, 0
        %v2217 = vsel %vm547, %v1836, 0
        %v2220 = vsel %vm547, %v1837, 0
        %v2223 = vsel %vm547, %v1838, 0
        %v2226 = vsel %vm547, %v1839, 0
        %v2229 = vsel %vm547, %v1840, 0
        %v2232 = vsel %vm547, %v1841, 0
        %v2235 = vsel %vm547, %v1842, 0
        %v2238 = vsel %vm547, %v1843, 0
        %v2241 = vsel %vm547, %v1844, 0
        %v2244 = vsel %vm547, %v1845, 0
        %2246 = vmatprep.subr.mxu0 0.0
        %2247 = vmatpush1.xpose.msra.mxu0 %v2199
        %2248 = vmatprep.subr.mxu0 0.0
        %2249 = vmatpush1.xpose.msra.mxu0 %v2202
        %2250 = vmatprep.subr.mxu0 0.0
        %2251 = vmatpush1.xpose.msra.mxu0 %v2205
        %2252 = vmatprep.subr.mxu0 0.0
        %2253 = vmatpush1.xpose.msra.mxu0 %v2208
        %2254 = vmatprep.subr.mxu0 0.0
        %2255 = vmatpush1.xpose.msra.mxu0 %v2211
        %2256 = vmatprep.subr.mxu0 0.0
        %2257 = vmatpush1.xpose.msra.mxu0 %v2214
        %2258 = vmatprep.subr.mxu0 0.0
        %2259 = vmatpush1.xpose.msra.mxu0 %v2217
        %2260 = vmatprep.subr.mxu0 0.0
        %2261 = vmatpush1.xpose.msra.mxu0 %v2220
        %2262 = vmatprep.subr.mxu0 0.0
        %2263 = vmatpush1.xpose.msra.mxu0 %v2223
        %2264 = vmatprep.subr.mxu0 0.0
        %2265 = vmatpush1.xpose.msra.mxu0 %v2226
        %2266 = vmatprep.subr.mxu0 0.0
        %2267 = vmatpush1.xpose.msra.mxu0 %v2229
        %2268 = vmatprep.subr.mxu0 0.0
        %2269 = vmatpush1.xpose.msra.mxu0 %v2232
        %2270 = vmatprep.subr.mxu0 0.0
        %2271 = vmatpush1.xpose.msra.mxu0 %v2235
        %2272 = vmatprep.subr.mxu0 0.0
        %2273 = vmatpush1.xpose.msra.mxu0 %v2238
        %2274 = vmatprep.subr.mxu0 0.0
        %2275 = vmatpush1.xpose.msra.mxu0 %v2241
        %2276 = vmatprep.subr.mxu0 0.0
        %2277 = vmatpush1.xpose.msra.mxu0 %v2244
        %2278 = vmatprep.subr.mxu0 0.0
        %2279 = vmatpush1.xpose.msra.mxu0 0.0
        %2280 = vmatprep.subr.mxu0 0.0
        %2281 = vmatpush1.xpose.msra.mxu0 0.0
        %2282 = vmatprep.subr.mxu0 0.0
        %2283 = vmatpush1.xpose.msra.mxu0 0.0
        %2284 = vmatprep.subr.mxu0 0.0
        %2285 = vmatpush1.xpose.msra.mxu0 0.0
        %2286 = vmatprep.subr.mxu0 0.0
        %2287 = vmatpush1.xpose.msra.mxu0 0.0
        %2288 = vmatprep.subr.mxu0 0.0
        %2289 = vmatpush1.xpose.msra.mxu0 0.0
        %2290 = vmatprep.subr.mxu0 0.0
        %2291 = vmatpush1.xpose.msra.mxu0 0.0
        %2292 = vmatprep.subr.mxu0 0.0
        %2293 = vmatpush1.xpose.msra.mxu0 0.0
        %2294 = vmatprep.subr.mxu0 0.0
        %2295 = vmatpush1.xpose.msra.mxu0 0.0
        %2296 = vmatprep.subr.mxu0 0.0
        %2297 = vmatpush1.xpose.msra.mxu0 0.0
        %2298 = vmatprep.subr.mxu0 0.0
        %2299 = vmatpush1.xpose.msra.mxu0 0.0
        %2300 = vmatprep.subr.mxu0 0.0
        %2301 = vmatpush1.xpose.msra.mxu0 0.0
        %2302 = vmatprep.subr.mxu0 0.0
        %2303 = vmatpush1.xpose.msra.mxu0 0.0
        %2304 = vmatprep.subr.mxu0 0.0
        %2305 = vmatpush1.xpose.msra.mxu0 0.0
        %2306 = vmatprep.subr.mxu0 0.0
        %2307 = vmatpush1.xpose.msra.mxu0 0.0
        %2308 = vmatprep.subr.mxu0 0.0
        %2309 = vmatpush1.xpose.msra.mxu0 0.0
        %2310 = vmatprep.mubr.f32.mxu0 0.0
        %2311 = vmatmul.mubr.f32.gmra.mrb[0].mxu0 %v2193
        %v2312 = vpop.f32.mrb[0].mxu0
        %v2313 = vadd.f32 0.0, %v2312
        %v2314 = vpop.f32.mrb[0].mxu0
        %2315 = vmatprep.mubr.f32.mxu0 0.0
        %2316 = vmatmul.mubr.f32.gmra.mrb[0].mxu0 %v2196
        %v2317 = vpop.f32.mrb[0].mxu0
        %v2318 = vadd.f32 0.0, %v2317
        %v2319 = vpop.f32.mrb[0].mxu0
        %2320 = vdwg.mxu0
        %v2321 = vadd.f32 %v1812, %v2313
        %v2322 = vadd.f32 %v1813, %v2318
        %2323 = vst [vmem:[%s271] sm:$0xff] %v2321
        %2324 = vst [vmem:[%s271 + $0x8] sm:$0xff] %v2322
        %s2325 = sand.u32 %s181, 1
        %s2326 = scalar_lea.sflag [#allocation3], %s2325
        %s2327 = sand.u32 %s181, 1
        %s2328 = smul.addr %s2327, 16
        %s2329 = scalar_lea.vmem [#allocation2], %s2328
        // Predicated region
        $region49: #{tpu_custom_call.1} parent=47 // pred_check
          %p2330 = pneg %p191
        $region50: #{tpu_custom_call.1} parent=47 // pred_check_branch
          %2332 = sbr.rel (%p2330) target = $region52
        $region51: #{tpu_custom_call.1} parent=47 // pred_region
          %s2334 = ssub.s32 256, 256
          %2335 = vsyncadd %s2326, %s2334
          %s2336 = smul.addr %s21, 2
          %s2337 = smul.addr %s2336, 128
          %s2338 = scalar_lea.hbm %s7, %s2337
          %s2339 = sshll.u32 %s2329, 4
          %s2340 = int_to_ptr.vmem [resolvable:$true] %s2339
          %2345 = dma.vmem_to_hbm [thread:$0]  %s2340, 256, %s2338, %s2326, 128, 128, 8
        $region52: #{tpu_custom_call.1} parent=47 // pred_fallthru
          _
      $region48: #{tpu_custom_call.1} parent=5 // pred_fallthru
        _
      %p2346 = scmp.le.s32.totalorder 2, %s16
      // Predicated region
      $region53: #{tpu_custom_call.1} parent=5 // pred_check
        %p2347 = pneg %p2346
      $region54: #{tpu_custom_call.1} parent=5 // pred_check_branch
        %2349 = sbr.rel (%p2347) target = $region56
      $region55: #{tpu_custom_call.1} parent=5 // pred_region
        %s2350 = ssub.s32 %s16, 2
        // Predicated region
        $region57: #{tpu_custom_call.1} parent=55 // pred_check
          %p2351 = pneg %p197
        $region58: #{tpu_custom_call.1} parent=55 // pred_check_branch
          %2353 = sbr.rel (%p2351) target = $region60
        $region59: #{tpu_custom_call.1} parent=55 // pred_region
          %s2354 = sand.u32 %s182, 1
          %s2355 = scalar_lea.sflag [#allocation3], %s2354
          %s2356 = sand.u32 %s182, 1
          %s2357 = smul.addr %s2356, 16
          %s2358 = scalar_lea.vmem [#allocation2], %s2357
          %2359 = dma.done %s2355, 256
        $region60: #{tpu_custom_call.1} parent=55 // pred_fallthru
          _
      $region56: #{tpu_custom_call.1} parent=5 // pred_fallthru
        _
    $region6: #{tpu_custom_call.1} parent=1 // loop_footer
      %s20 = sadd.s32 1, %s16
    $region7: #{tpu_custom_call.1} parent=1 // loop_footer_branch
      %15 = sbr.rel target = $region3
    $region8: #{tpu_custom_call.1} parent=1 // loop_exit
      _
    %2360 = vsyncpa [#allocation3], 1
    %s2361 = scalar_lea.sflag [#allocation3], 1
    %2362 = vsyncpa %s2361, 1

// kernel: tpu_custom_call.1
$region0: #{tpu_custom_call.1}
  #allocation0 [shape = 'u32[]', space=smem, size = 0x4, offset = 0x4, fixed_abs, tag = 'smem constant byte address 0x4 - core index']
  #allocation1 [shape = 'u32[144,128]{1,0:T(1,128)}', space=vmem, size = 0x12000, scoped, tag = 'internal scratch']
  %s0 = inlined_call_operand.vmem [shape: f32[2,16,128], index: 0, kind: input, shape index: {}]
  %s1 = inlined_call_operand.vmem [shape: f32[4,32,128], index: 1, kind: input, shape index: {}]
  %s2 = inlined_call_operand.vmem [shape: f32[4,32,128], index: 2, kind: input, shape index: {}]
  %s3 = inlined_call_operand.vmem [shape: f32[4,32,128], index: 3, kind: input, shape index: {}]
  %s4 = inlined_call_operand.vmem [shape: f32[16,16], index: 4, kind: input, shape index: {}]
  %s5 = inlined_call_operand.vmem [shape: f32[4,128,32], index: 5, kind: input, shape index: {}]
  %s6 = inlined_call_operand.vmem [shape: f32[1,128], index: 6, kind: input, shape index: {}]
  %s7 = inlined_call_operand.hbm [shape: f32[2,16,128], index: 7, kind: output, shape index: {}]
  %s8 = sld [smem:[#allocation0]]
  $region61: #{tpu_custom_call.1} parent=0
    _
  %s10 = ssub.s32 1, %s8
  %s11 = scalar_select 0, %s10, %s8
  $region1: #{tpu_custom_call.1} parent=0
    #allocation2 [shape = 'u8[16384]{0}', space=vmem, size = 0x4000, scoped, tag = 'output window, operand 0']
    #allocation3 [shape = 's32[2]{0}', space=sflag, size = 0x8, scoped, tag = 'scoped memory for tpu_custom_call.1']
    %12 = vsyncpa [#allocation3], 0
    %s13 = scalar_lea.sflag [#allocation3], 1
    %14 = vsyncpa %s13, 0
    loop: start=0, step=1, limit=4
    $region2: #{tpu_custom_call.1} parent=1 // loop_pre_header
      _
    $region3: #{tpu_custom_call.1} parent=1 // loop_header
      %s16 = sphi 0, %s20
      %p17 = scmp.ge.s32.totalorder %s16, 4
      %s26 = sphi 0, %s28
      %s29 = sphi 0, %s26
      %s30 = sphi 0, %s29
      %s46 = sphi 0, %s30
      %s50 = sphi 0, %s50
      %s52 = sphi 0, %s50
      %s53 = sphi 0, %s52
      %s67 = sphi 0, %s53
      %s71 = sphi 0, %s71
      %s73 = sphi 0, %s71
      %s74 = sphi 0, %s73
      %s88 = sphi 0, %s74
      %s92 = sphi 0, %s92
      %s94 = sphi 0, %s92
      %s95 = sphi 0, %s94
      %s109 = sphi 0, %s95
      %s113 = sphi 0, %s113
      %s115 = sphi 0, %s113
      %s116 = sphi 0, %s115
      %s130 = sphi 0, %s116
      %s134 = sphi 0, %s134
      %s136 = sphi 0, %s134
      %s137 = sphi 0, %s136
      %s151 = sphi 0, %s137
      %s155 = sphi 0, %s155
      %s157 = sphi 0, %s155
      %s158 = sphi 0, %s157
      %s172 = sphi 0, %s158
      %s178 = sphi 0, %s180
      %s181 = sphi 0, %s178
      %s182 = sphi 0, %s181
      %s198 = sphi 0, %s182
    $region4: #{tpu_custom_call.1} parent=1 // loop_header_branch
      %19 = sbr.rel (%p17) target = $region8
    $region5: #{tpu_custom_call.1} parent=1 // loop_body
      %s21 = ssub.s32 %s16, 1
      %s22 = ssub.s32 %s16, 2
      %s23 = sadd.s32 %s16, 1
      %s24 = ssub.s32 %s16, %s23
      %p25 = scmp.eq.s32.totalorder %s24, 0
      %s27 = sadd.s32 %s26, 1
      %s28 = scalar_select %p25, %s26, %s27
      %p31 = pneg %p25
      %p32 = scmp.eq.s32.totalorder %s16, 1
      %p33 = por %p31, %p32
      %p34 = scmp.ne.s32.totalorder %s26, %s29
      %p35 = scmp.eq.s32.totalorder %s16, 0
      %p36 = por %p34, %p35
      %p37 = scmp.ne.s32.totalorder %s26, %s29
      %p38 = scmp.eq.s32.totalorder %s21, 1
      %p39 = por %p37, %p38
      %p40 = scmp.ne.s32.totalorder %s29, %s30
      %p41 = scmp.eq.s32.totalorder %s21, 0
      %p42 = por %p40, %p41
      %p43 = scmp.ne.s32.totalorder %s29, %s30
      %p44 = scmp.eq.s32.totalorder %s22, 1
      %p45 = por %p43, %p44
      %p47 = scmp.ne.s32.totalorder %s30, %s46
      %p48 = scmp.eq.s32.totalorder %s22, 0
      %p49 = por %p47, %p48
      %s51 = sadd.s32 %s50, 1
      %p54 = scmp.eq.s32.totalorder %s16, 1
      %p55 = scmp.ne.s32.totalorder %s50, %s52
      %p56 = scmp.eq.s32.totalorder %s16, 0
      %p57 = por %p55, %p56
      %p58 = scmp.ne.s32.totalorder %s50, %s52
      %p59 = scmp.eq.s32.totalorder %s21, 1
      %p60 = por %p58, %p59
      %p61 = scmp.ne.s32.totalorder %s52, %s53
      %p62 = scmp.eq.s32.totalorder %s21, 0
      %p63 = por %p61, %p62
      %p64 = scmp.ne.s32.totalorder %s52, %s53
      %p65 = scmp.eq.s32.totalorder %s22, 1
      %p66 = por %p64, %p65
      %p68 = scmp.ne.s32.totalorder %s53, %s67
      %p69 = scmp.eq.s32.totalorder %s22, 0
      %p70 = por %p68, %p69
      %s72 = sadd.s32 %s71, 1
      %p75 = scmp.eq.s32.totalorder %s16, 1
      %p76 = scmp.ne.s32.totalorder %s71, %s73
      %p77 = scmp.eq.s32.totalorder %s16, 0
      %p78 = por %p76, %p77
      %p79 = scmp.ne.s32.totalorder %s71, %s73
      %p80 = scmp.eq.s32.totalorder %s21, 1
      %p81 = por %p79, %p80
      %p82 = scmp.ne.s32.totalorder %s73, %s74
      %p83 = scmp.eq.s32.totalorder %s21, 0
      %p84 = por %p82, %p83
      %p85 = scmp.ne.s32.totalorder %s73, %s74
      %p86 = scmp.eq.s32.totalorder %s22, 1
      %p87 = por %p85, %p86
      %p89 = scmp.ne.s32.totalorder %s74, %s88
      %p90 = scmp.eq.s32.totalorder %s22, 0
      %p91 = por %p89, %p90
      %s93 = sadd.s32 %s92, 1
      %p96 = scmp.eq.s32.totalorder %s16, 1
      %p97 = scmp.ne.s32.totalorder %s92, %s94
      %p98 = scmp.eq.s32.totalorder %s16, 0
      %p99 = por %p97, %p98
      %p100 = scmp.ne.s32.totalorder %s92, %s94
      %p101 = scmp.eq.s32.totalorder %s21, 1
      %p102 = por %p100, %p101
      %p103 = scmp.ne.s32.totalorder %s94, %s95
      %p104 = scmp.eq.s32.totalorder %s21, 0
      %p105 = por %p103, %p104
      %p106 = scmp.ne.s32.totalorder %s94, %s95
      %p107 = scmp.eq.s32.totalorder %s22, 1
      %p108 = por %p106, %p107
      %p110 = scmp.ne.s32.totalorder %s95, %s109
      %p111 = scmp.eq.s32.totalorder %s22, 0
      %p112 = por %p110, %p111
      %s114 = sadd.s32 %s113, 1
      %p117 = scmp.eq.s32.totalorder %s16, 1
      %p118 = scmp.ne.s32.totalorder %s113, %s115
      %p119 = scmp.eq.s32.totalorder %s16, 0
      %p120 = por %p118, %p119
      %p121 = scmp.ne.s32.totalorder %s113, %s115
      %p122 = scmp.eq.s32.totalorder %s21, 1
      %p123 = por %p121, %p122
      %p124 = scmp.ne.s32.totalorder %s115, %s116
      %p125 = scmp.eq.s32.totalorder %s21, 0
      %p126 = por %p124, %p125
      %p127 = scmp.ne.s32.totalorder %s115, %s116
      %p128 = scmp.eq.s32.totalorder %s22, 1
      %p129 = por %p127, %p128
      %p131 = scmp.ne.s32.totalorder %s116, %s130
      %p132 = scmp.eq.s32.totalorder %s22, 0
      %p133 = por %p131, %p132
      %s135 = sadd.s32 %s134, 1
      %p138 = scmp.eq.s32.totalorder %s16, 1
      %p139 = scmp.ne.s32.totalorder %s134, %s136
      %p140 = scmp.eq.s32.totalorder %s16, 0
      %p141 = por %p139, %p140
      %p142 = scmp.ne.s32.totalorder %s134, %s136
      %p143 = scmp.eq.s32.totalorder %s21, 1
      %p144 = por %p142, %p143
      %p145 = scmp.ne.s32.totalorder %s136, %s137
      %p146 = scmp.eq.s32.totalorder %s21, 0
      %p147 = por %p145, %p146
      %p148 = scmp.ne.s32.totalorder %s136, %s137
      %p149 = scmp.eq.s32.totalorder %s22, 1
      %p150 = por %p148, %p149
      %p152 = scmp.ne.s32.totalorder %s137, %s151
      %p153 = scmp.eq.s32.totalorder %s22, 0
      %p154 = por %p152, %p153
      %s156 = sadd.s32 %s155, 1
      %p159 = scmp.eq.s32.totalorder %s16, 1
      %p160 = scmp.ne.s32.totalorder %s155, %s157
      %p161 = scmp.eq.s32.totalorder %s16, 0
      %p162 = por %p160, %p161
      %p163 = scmp.ne.s32.totalorder %s155, %s157
      %p164 = scmp.eq.s32.totalorder %s21, 1
      %p165 = por %p163, %p164
      %p166 = scmp.ne.s32.totalorder %s157, %s158
      %p167 = scmp.eq.s32.totalorder %s21, 0
      %p168 = por %p166, %p167
      %p169 = scmp.ne.s32.totalorder %s157, %s158
      %p170 = scmp.eq.s32.totalorder %s22, 1
      %p171 = por %p169, %p170
      %p173 = scmp.ne.s32.totalorder %s158, %s172
      %p174 = scmp.eq.s32.totalorder %s22, 0
      %p175 = por %p173, %p174
      %s176 = ssub.s32 %s16, %s23
      %p177 = scmp.eq.s32.totalorder %s176, 0
      %s179 = sadd.s32 %s178, 1
      %s180 = scalar_select %p177, %s178, %s179
      %p183 = pneg %p177
      %p184 = scmp.eq.s32.totalorder %s16, 1
      %p185 = por %p183, %p184
      %p186 = scmp.ne.s32.totalorder %s178, %s181
      %p187 = scmp.eq.s32.totalorder %s16, 0
      %p188 = por %p186, %p187
      %p189 = scmp.ne.s32.totalorder %s178, %s181
      %p190 = scmp.eq.s32.totalorder %s21, 1
      %p191 = por %p189, %p190
      %p192 = scmp.ne.s32.totalorder %s181, %s182
      %p193 = scmp.eq.s32.totalorder %s21, 0
      %p194 = por %p192, %p193
      %p195 = scmp.ne.s32.totalorder %s181, %s182
      %p196 = scmp.eq.s32.totalorder %s22, 1
      %p197 = por %p195, %p196
      %p199 = scmp.ne.s32.totalorder %s182, %s198
      %p200 = scmp.eq.s32.totalorder %s22, 0
      %p201 = por %p199, %p200
      %p202 = scmp.le.s32.totalorder 1, %s16
      %p203 = scmp.lt.s32.totalorder %s16, 3
      %p204 = pnand %p202, %p203
      %p205 = pneg %p204
      // Predicated region
      $region9: #{tpu_custom_call.1} parent=5 // pred_check
        _
      $region10: #{tpu_custom_call.1} parent=5 // pred_check_branch
        %207 = sbr.rel (%p204) target = $region12
      $region11: #{tpu_custom_call.1} parent=5 // pred_region
        %s208 = ssub.s32 %s16, 1
        // Predicated region
        $region13: #{tpu_custom_call.1} parent=11 // pred_check
          %p209 = pneg %p63
        $region14: #{tpu_custom_call.1} parent=11 // pred_check_branch
          %211 = sbr.rel (%p209) target = $region16
        $region15: #{tpu_custom_call.1} parent=11 // pred_region
          _
        $region16: #{tpu_custom_call.1} parent=11 // pred_fallthru
          _
        // Predicated region
        $region17: #{tpu_custom_call.1} parent=11 // pred_check
          %p212 = pneg %p84
        $region18: #{tpu_custom_call.1} parent=11 // pred_check_branch
          %214 = sbr.rel (%p212) target = $region20
        $region19: #{tpu_custom_call.1} parent=11 // pred_region
          _
        $region20: #{tpu_custom_call.1} parent=11 // pred_fallthru
          _
        // Predicated region
        $region21: #{tpu_custom_call.1} parent=11 // pred_check
          %p215 = pneg %p105
        $region22: #{tpu_custom_call.1} parent=11 // pred_check_branch
          %217 = sbr.rel (%p215) target = $region24
        $region23: #{tpu_custom_call.1} parent=11 // pred_region
          _
        $region24: #{tpu_custom_call.1} parent=11 // pred_fallthru
          _
        // Predicated region
        $region25: #{tpu_custom_call.1} parent=11 // pred_check
          %p218 = pneg %p126
        $region26: #{tpu_custom_call.1} parent=11 // pred_check_branch
          %220 = sbr.rel (%p218) target = $region28
        $region27: #{tpu_custom_call.1} parent=11 // pred_region
          _
        $region28: #{tpu_custom_call.1} parent=11 // pred_fallthru
          _
        // Predicated region
        $region29: #{tpu_custom_call.1} parent=11 // pred_check
          %p221 = pneg %p147
        $region30: #{tpu_custom_call.1} parent=11 // pred_check_branch
          %223 = sbr.rel (%p221) target = $region32
        $region31: #{tpu_custom_call.1} parent=11 // pred_region
          _
        $region32: #{tpu_custom_call.1} parent=11 // pred_fallthru
          _
        // Predicated region
        $region33: #{tpu_custom_call.1} parent=11 // pred_check
          %p224 = pneg %p168
        $region34: #{tpu_custom_call.1} parent=11 // pred_check_branch
          %226 = sbr.rel (%p224) target = $region36
        $region35: #{tpu_custom_call.1} parent=11 // pred_region
          _
        $region36: #{tpu_custom_call.1} parent=11 // pred_fallthru
          _
      $region12: #{tpu_custom_call.1} parent=5 // pred_fallthru
        _
      %p227 = scmp.lt.s32.totalorder %s16, 2
      // Predicated region
      $region37: #{tpu_custom_call.1} parent=5 // pred_check
        %p228 = pneg %p227
      $region38: #{tpu_custom_call.1} parent=5 // pred_check_branch
        %230 = sbr.rel (%p228) target = $region40
      $region39: #{tpu_custom_call.1} parent=5 // pred_region
        // Predicated region
        $region41: #{tpu_custom_call.1} parent=39 // pred_check
          %p231 = pneg %p36
        $region42: #{tpu_custom_call.1} parent=39 // pred_check_branch
          %233 = sbr.rel (%p231) target = $region44
        $region43: #{tpu_custom_call.1} parent=39 // pred_region
          %p234 = scmp.lt.s32.totalorder %s16, 1
          %s235 = scalar_select %p234, %s16, 1
          %s236 = smul.addr %s235, 2
          %s237 = smul.addr %s236, 8
          %s238 = scalar_lea.vmem %s0, %s237
        $region44: #{tpu_custom_call.1} parent=39 // pred_fallthru
          _
      $region40: #{tpu_custom_call.1} parent=5 // pred_fallthru
        _
      %p239 = scmp.le.s32.totalorder 1, %s16
      %p240 = scmp.lt.s32.totalorder %s16, 3
      %p241 = pnand %p239, %p240
      %p242 = pneg %p241
      // Predicated region
      $region45: #{tpu_custom_call.1} parent=5 // pred_check
        _
      $region46: #{tpu_custom_call.1} parent=5 // pred_check_branch
        %244 = sbr.rel (%p241) target = $region48
      $region47: #{tpu_custom_call.1} parent=5 // pred_region
        %s245 = ssub.s32 %s16, 1
        %p246 = scmp.lt.s32.totalorder %s21, 1
        %s247 = scalar_select %p246, %s21, 1
        %s248 = smul.addr %s247, 2
        %s249 = smul.addr %s248, 8
        %s250 = scalar_lea.vmem %s0, %s249
        %p251 = pneg %p42
        %p252 = pneg %p39
        %p253 = pneg %p63
        %p254 = pneg %p60
        %p255 = pneg %p84
        %p256 = pneg %p81
        %p257 = pneg %p105
        %p258 = pneg %p102
        %p259 = pneg %p126
        %p260 = pneg %p123
        %p261 = pneg %p147
        %p262 = pneg %p144
        %p263 = pneg %p168
        %p264 = pneg %p165
        %p265 = pneg %p194
        %p266 = pneg %p191
        %s267 = sand.u32 %s181, 1
        %s268 = scalar_lea.sflag [#allocation3], %s267
        %s269 = sand.u32 %s181, 1
        %s270 = smul.addr %s269, 16
        %s271 = scalar_lea.vmem [#allocation2], %s270
        %p272 = scmp.lt.s32.totalorder %s21, 1
        %s273 = scalar_select %p272, %s21, 1
        %s274 = smul.addr %s273, 2
        %s275 = smul.addr %s274, 8
        %s276 = scalar_lea.vmem %s0, %s275
        %v278 = vld [vmem:[%s276] sm:$0xff]
        %v279 = vld [vmem:[%s276 + $0x8] sm:$0xff]
        %v280 = vld [vmem:[%s4] sm:$0xff]
        %v281 = vld [vmem:[%s4 + $0x8] sm:$0xff]
        %v282 = vld [vmem:[%s6] sm:$0x1]
        %v284 = vlaneseq
        %v285 = vshrl.u32 %v284, 7
        %v286 = vsub.s32 0, %v285
        %v287 = vrot.slane %v282, %v286
        %v289 = vld [vmem:[%s1] sm:$0xff]
        %v290 = vld [vmem:[%s1 + $0x8] sm:$0xff]
        %v291 = vld [vmem:[%s1 + $0x10] sm:$0xff]
        %v292 = vld [vmem:[%s1 + $0x18] sm:$0xff]
        %v293 = vld [vmem:[%s2] sm:$0xff]
        %v294 = vld [vmem:[%s2 + $0x8] sm:$0xff]
        %v295 = vld [vmem:[%s2 + $0x10] sm:$0xff]
        %v296 = vld [vmem:[%s2 + $0x18] sm:$0xff]
        %v297 = vld [vmem:[%s3] sm:$0xff]
        %v298 = vld [vmem:[%s3 + $0x8] sm:$0xff]
        %v299 = vld [vmem:[%s3 + $0x10] sm:$0xff]
        %v300 = vld [vmem:[%s3 + $0x18] sm:$0xff]
        %v301 = vld [vmem:[%s5] sm:$0xff]
        %v302 = vld [vmem:[%s5 + $0x8] sm:$0xff]
        %v303 = vld [vmem:[%s5 + $0x10] sm:$0xff]
        %v304 = vld [vmem:[%s5 + $0x18] sm:$0xff]
        %v305 = vld [vmem:[%s5 + $0x20] sm:$0xff]
        %v306 = vld [vmem:[%s5 + $0x28] sm:$0xff]
        %v307 = vld [vmem:[%s5 + $0x30] sm:$0xff]
        %v308 = vld [vmem:[%s5 + $0x38] sm:$0xff]
        %v309 = vld [vmem:[%s5 + $0x40] sm:$0xff]
        %v310 = vld [vmem:[%s5 + $0x48] sm:$0xff]
        %v311 = vld [vmem:[%s5 + $0x50] sm:$0xff]
        %v312 = vld [vmem:[%s5 + $0x58] sm:$0xff]
        %v313 = vld [vmem:[%s5 + $0x60] sm:$0xff]
        %v314 = vld [vmem:[%s5 + $0x68] sm:$0xff]
        %v315 = vld [vmem:[%s5 + $0x70] sm:$0xff]
        %v316 = vld [vmem:[%s5 + $0x78] sm:$0xff]
        %317 = vmatprep.subr.mxu0 0.0
        %318 = vmatpush1.xpose.msra.mxu0 %v289
        %319 = vmatprep.subr.mxu0 0.0
        %320 = vmatpush1.xpose.msra.mxu0 %v290
        %321 = vmatprep.subr.mxu0 0.0
        %322 = vmatpush1.xpose.msra.mxu0 %v291
        %323 = vmatprep.subr.mxu0 0.0
        %324 = vmatpush1.xpose.msra.mxu0 %v292
        %325 = vmatprep.subr.mxu0 0.0
        %326 = vmatpush1.xpose.msra.mxu0 0.0
        %327 = vmatprep.subr.mxu0 0.0
        %328 = vmatpush1.xpose.msra.mxu0 0.0
        %329 = vmatprep.subr.mxu0 0.0
        %330 = vmatpush1.xpose.msra.mxu0 0.0
        %331 = vmatprep.subr.mxu0 0.0
        %332 = vmatpush1.xpose.msra.mxu0 0.0
        %333 = vmatprep.subr.mxu0 0.0
        %334 = vmatpush1.xpose.msra.mxu0 0.0
        %335 = vmatprep.subr.mxu0 0.0
        %336 = vmatpush1.xpose.msra.mxu0 0.0
        %337 = vmatprep.subr.mxu0 0.0
        %338 = vmatpush1.xpose.msra.mxu0 0.0
        %339 = vmatprep.subr.mxu0 0.0
        %340 = vmatpush1.xpose.msra.mxu0 0.0
        %341 = vmatprep.subr.mxu0 0.0
        %342 = vmatpush1.xpose.msra.mxu0 0.0
        %343 = vmatprep.subr.mxu0 0.0
        %344 = vmatpush1.xpose.msra.mxu0 0.0
        %345 = vmatprep.subr.mxu0 0.0
        %346 = vmatpush1.xpose.msra.mxu0 0.0
        %347 = vmatprep.subr.mxu0 0.0
        %348 = vmatpush1.xpose.msra.mxu0 0.0
        %349 = vmatprep.subr.mxu0 0.0
        %350 = vmatpush1.xpose.msra.mxu0 0.0
        %351 = vmatprep.subr.mxu0 0.0
        %352 = vmatpush1.xpose.msra.mxu0 0.0
        %353 = vmatprep.subr.mxu0 0.0
        %354 = vmatpush1.xpose.msra.mxu0 0.0
        %355 = vmatprep.subr.mxu0 0.0
        %356 = vmatpush1.xpose.msra.mxu0 0.0
        %357 = vmatprep.subr.mxu0 0.0
        %358 = vmatpush1.xpose.msra.mxu0 0.0
        %359 = vmatprep.subr.mxu0 0.0
        %360 = vmatpush1.xpose.msra.mxu0 0.0
        %361 = vmatprep.subr.mxu0 0.0
        %362 = vmatpush1.xpose.msra.mxu0 0.0
        %363 = vmatprep.subr.mxu0 0.0
        %364 = vmatpush1.xpose.msra.mxu0 0.0
        %365 = vmatprep.subr.mxu0 0.0
        %366 = vmatpush1.xpose.msra.mxu0 0.0
        %367 = vmatprep.subr.mxu0 0.0
        %368 = vmatpush1.xpose.msra.mxu0 0.0
        %369 = vmatprep.subr.mxu0 0.0
        %370 = vmatpush1.xpose.msra.mxu0 0.0
        %371 = vmatprep.subr.mxu0 0.0
        %372 = vmatpush1.xpose.msra.mxu0 0.0
        %373 = vmatprep.subr.mxu0 0.0
        %374 = vmatpush1.xpose.msra.mxu0 0.0
        %375 = vmatprep.subr.mxu0 0.0
        %376 = vmatpush1.xpose.msra.mxu0 0.0
        %377 = vmatprep.subr.mxu0 0.0
        %378 = vmatpush1.xpose.msra.mxu0 0.0
        %379 = vmatprep.subr.mxu0 0.0
        %380 = vmatpush1.xpose.msra.mxu0 0.0
        %381 = vmatprep.mubr.f32.mxu0 0.0
        %382 = vmatmul.mubr.f32.gmra.mrb[0].mxu0 %v278
        %v383 = vpop.f32.mrb[0].mxu0
        %v384 = vadd.f32 0.0, %v383
        %v385 = vpop.f32.mrb[0].mxu0
        %386 = vmatprep.mubr.f32.mxu0 0.0
        %387 = vmatmul.mubr.f32.gmra.mrb[0].mxu0 %v279
        %v388 = vpop.f32.mrb[0].mxu0
        %v389 = vadd.f32 0.0, %v388
        %v390 = vpop.f32.mrb[0].mxu0
        %391 = vdwg.mxu0
        %392 = vmatprep.subr.mxu0 0.0
        %393 = vmatpush1.xpose.msra.mxu0 %v293
        %394 = vmatprep.subr.mxu0 0.0
        %395 = vmatpush1.xpose.msra.mxu0 %v294
        %396 = vmatprep.subr.mxu0 0.0
        %397 = vmatpush1.xpose.msra.mxu0 %v295
        %398 = vmatprep.subr.mxu0 0.0
        %399 = vmatpush1.xpose.msra.mxu0 %v296
        %400 = vmatprep.subr.mxu0 0.0
        %401 = vmatpush1.xpose.msra.mxu0 0.0
        %402 = vmatprep.subr.mxu0 0.0
        %403 = vmatpush1.xpose.msra.mxu0 0.0
        %404 = vmatprep.subr.mxu0 0.0
        %405 = vmatpush1.xpose.msra.mxu0 0.0
        %406 = vmatprep.subr.mxu0 0.0
        %407 = vmatpush1.xpose.msra.mxu0 0.0
        %408 = vmatprep.subr.mxu0 0.0
        %409 = vmatpush1.xpose.msra.mxu0 0.0
        %410 = vmatprep.subr.mxu0 0.0
        %411 = vmatpush1.xpose.msra.mxu0 0.0
        %412 = vmatprep.subr.mxu0 0.0
        %413 = vmatpush1.xpose.msra.mxu0 0.0
        %414 = vmatprep.subr.mxu0 0.0
        %415 = vmatpush1.xpose.msra.mxu0 0.0
        %416 = vmatprep.subr.mxu0 0.0
        %417 = vmatpush1.xpose.msra.mxu0 0.0
        %418 = vmatprep.subr.mxu0 0.0
        %419 = vmatpush1.xpose.msra.mxu0 0.0
        %420 = vmatprep.subr.mxu0 0.0
        %421 = vmatpush1.xpose.msra.mxu0 0.0
        %422 = vmatprep.subr.mxu0 0.0
        %423 = vmatpush1.xpose.msra.mxu0 0.0
        %424 = vmatprep.subr.mxu0 0.0
        %425 = vmatpush1.xpose.msra.mxu0 0.0
        %426 = vmatprep.subr.mxu0 0.0
        %427 = vmatpush1.xpose.msra.mxu0 0.0
        %428 = vmatprep.subr.mxu0 0.0
        %429 = vmatpush1.xpose.msra.mxu0 0.0
        %430 = vmatprep.subr.mxu0 0.0
        %431 = vmatpush1.xpose.msra.mxu0 0.0
        %432 = vmatprep.subr.mxu0 0.0
        %433 = vmatpush1.xpose.msra.mxu0 0.0
        %434 = vmatprep.subr.mxu0 0.0
        %435 = vmatpush1.xpose.msra.mxu0 0.0
        %436 = vmatprep.subr.mxu0 0.0
        %437 = vmatpush1.xpose.msra.mxu0 0.0
        %438 = vmatprep.subr.mxu0 0.0
        %439 = vmatpush1.xpose.msra.mxu0 0.0
        %440 = vmatprep.subr.mxu0 0.0
        %441 = vmatpush1.xpose.msra.mxu0 0.0
        %442 = vmatprep.subr.mxu0 0.0
        %443 = vmatpush1.xpose.msra.mxu0 0.0
        %444 = vmatprep.subr.mxu0 0.0
        %445 = vmatpush1.xpose.msra.mxu0 0.0
        %446 = vmatprep.subr.mxu0 0.0
        %447 = vmatpush1.xpose.msra.mxu0 0.0
        %448 = vmatprep.subr.mxu0 0.0
        %449 = vmatpush1.xpose.msra.mxu0 0.0
        %450 = vmatprep.subr.mxu0 0.0
        %451 = vmatpush1.xpose.msra.mxu0 0.0
        %452 = vmatprep.subr.mxu0 0.0
        %453 = vmatpush1.xpose.msra.mxu0 0.0
        %454 = vmatprep.subr.mxu0 0.0
        %455 = vmatpush1.xpose.msra.mxu0 0.0
        %456 = vmatprep.mubr.f32.mxu0 0.0
        %457 = vmatmul.mubr.f32.gmra.mrb[0].mxu0 %v278
        %v458 = vpop.f32.mrb[0].mxu0
        %v459 = vadd.f32 0.0, %v458
        %v460 = vpop.f32.mrb[0].mxu0
        %461 = vmatprep.mubr.f32.mxu0 0.0
        %462 = vmatmul.mubr.f32.gmra.mrb[0].mxu0 %v279
        %v463 = vpop.f32.mrb[0].mxu0
        %v464 = vadd.f32 0.0, %v463
        %v465 = vpop.f32.mrb[0].mxu0
        %466 = vdwg.mxu0
        %467 = vmatprep.subr.mxu0 0.0
        %468 = vmatpush1.xpose.msra.mxu0 %v297
        %469 = vmatprep.subr.mxu0 0.0
        %470 = vmatpush1.xpose.msra.mxu0 %v298
        %471 = vmatprep.subr.mxu0 0.0
        %472 = vmatpush1.xpose.msra.mxu0 %v299
        %473 = vmatprep.subr.mxu0 0.0
        %474 = vmatpush1.xpose.msra.mxu0 %v300
        %475 = vmatprep.subr.mxu0 0.0
        %476 = vmatpush1.xpose.msra.mxu0 0.0
        %477 = vmatprep.subr.mxu0 0.0
        %478 = vmatpush1.xpose.msra.mxu0 0.0
        %479 = vmatprep.subr.mxu0 0.0
        %480 = vmatpush1.xpose.msra.mxu0 0.0
        %481 = vmatprep.subr.mxu0 0.0
        %482 = vmatpush1.xpose.msra.mxu0 0.0
        %483 = vmatprep.subr.mxu0 0.0
        %484 = vmatpush1.xpose.msra.mxu0 0.0
        %485 = vmatprep.subr.mxu0 0.0
        %486 = vmatpush1.xpose.msra.mxu0 0.0
        %487 = vmatprep.subr.mxu0 0.0
        %488 = vmatpush1.xpose.msra.mxu0 0.0
        %489 = vmatprep.subr.mxu0 0.0
        %490 = vmatpush1.xpose.msra.mxu0 0.0
        %491 = vmatprep.subr.mxu0 0.0
        %492 = vmatpush1.xpose.msra.mxu0 0.0
        %493 = vmatprep.subr.mxu0 0.0
        %494 = vmatpush1.xpose.msra.mxu0 0.0
        %495 = vmatprep.subr.mxu0 0.0
        %496 = vmatpush1.xpose.msra.mxu0 0.0
        %497 = vmatprep.subr.mxu0 0.0
        %498 = vmatpush1.xpose.msra.mxu0 0.0
        %499 = vmatprep.subr.mxu0 0.0
        %500 = vmatpush1.xpose.msra.mxu0 0.0
        %501 = vmatprep.subr.mxu0 0.0
        %502 = vmatpush1.xpose.msra.mxu0 0.0
        %503 = vmatprep.subr.mxu0 0.0
        %504 = vmatpush1.xpose.msra.mxu0 0.0
        %505 = vmatprep.subr.mxu0 0.0
        %506 = vmatpush1.xpose.msra.mxu0 0.0
        %507 = vmatprep.subr.mxu0 0.0
        %508 = vmatpush1.xpose.msra.mxu0 0.0
        %509 = vmatprep.subr.mxu0 0.0
        %510 = vmatpush1.xpose.msra.mxu0 0.0
        %511 = vmatprep.subr.mxu0 0.0
        %512 = vmatpush1.xpose.msra.mxu0 0.0
        %513 = vmatprep.subr.mxu0 0.0
        %514 = vmatpush1.xpose.msra.mxu0 0.0
        %515 = vmatprep.subr.mxu0 0.0
        %516 = vmatpush1.xpose.msra.mxu0 0.0
        %517 = vmatprep.subr.mxu0 0.0
        %518 = vmatpush1.xpose.msra.mxu0 0.0
        %519 = vmatprep.subr.mxu0 0.0
        %520 = vmatpush1.xpose.msra.mxu0 0.0
        %521 = vmatprep.subr.mxu0 0.0
        %522 = vmatpush1.xpose.msra.mxu0 0.0
        %523 = vmatprep.subr.mxu0 0.0
        %524 = vmatpush1.xpose.msra.mxu0 0.0
        %525 = vmatprep.subr.mxu0 0.0
        %526 = vmatpush1.xpose.msra.mxu0 0.0
        %527 = vmatprep.subr.mxu0 0.0
        %528 = vmatpush1.xpose.msra.mxu0 0.0
        %529 = vmatprep.subr.mxu0 0.0
        %530 = vmatpush1.xpose.msra.mxu0 0.0
        %531 = vmatprep.mubr.f32.mxu0 0.0
        %532 = vmatmul.mubr.f32.gmra.mrb[0].mxu0 %v278
        %v533 = vpop.f32.mrb[0].mxu0
        %v534 = vadd.f32 0.0, %v533
        %v535 = vpop.f32.mrb[0].mxu0
        %536 = vmatprep.mubr.f32.mxu0 0.0
        %537 = vmatmul.mubr.f32.gmra.mrb[0].mxu0 %v279
        %v538 = vpop.f32.mrb[0].mxu0
        %v539 = vadd.f32 0.0, %v538
        %v540 = vpop.f32.mrb[0].mxu0
        %541 = vdwg.mxu0
        %v542 = vmul.f32 %v384, 0.17677669
        %v543 = vmul.f32 %v389, 0.17677669
        %v544 = vpack.c.bf16 %v543, %v542
        %v545 = vpack.c.bf16 %v464, %v459
        %v546 = vpack.c.bf16 %v539, %v534
        %vm547 = vcmask 261120
        %v549 = vsel %vm547, %v544, 0
        %v552 = vsel %vm547, %v545, 0
        %554 = vmatprep.subr.bf16.mxu0 0
        %555 = vmatpush1.bf16.xpose.msra.mxu0 %v552
        %556 = vmatprep.subr.bf16.mxu0 0
        %557 = vmatpush1.bf16.xpose.msra.mxu0 0
        %558 = vmatprep.subr.bf16.mxu0 0
        %559 = vmatpush1.bf16.xpose.msra.mxu0 0
        %560 = vmatprep.subr.bf16.mxu0 0
        %561 = vmatpush1.bf16.xpose.msra.mxu0 0
        %562 = vmatprep.subr.bf16.mxu0 0
        %563 = vmatpush1.bf16.xpose.msra.mxu0 0
        %564 = vmatprep.subr.bf16.mxu0 0
        %565 = vmatpush1.bf16.xpose.msra.mxu0 0
        %566 = vmatprep.subr.bf16.mxu0 0
        %567 = vmatpush1.bf16.xpose.msra.mxu0 0
        %568 = vmatprep.subr.bf16.mxu0 0
        %569 = vmatpush1.bf16.xpose.msra.mxu0 0
        %570 = vmatprep.subr.bf16.mxu0 0
        %571 = vmatpush1.bf16.xpose.msra.mxu0 0
        %572 = vmatprep.subr.bf16.mxu0 0
        %573 = vmatpush1.bf16.xpose.msra.mxu0 0
        %574 = vmatprep.subr.bf16.mxu0 0
        %575 = vmatpush1.bf16.xpose.msra.mxu0 0
        %576 = vmatprep.subr.bf16.mxu0 0
        %577 = vmatpush1.bf16.xpose.msra.mxu0 0
        %578 = vmatprep.subr.bf16.mxu0 0
        %579 = vmatpush1.bf16.xpose.msra.mxu0 0
        %580 = vmatprep.subr.bf16.mxu0 0
        %581 = vmatpush1.bf16.xpose.msra.mxu0 0
        %582 = vmatprep.subr.bf16.mxu0 0
        %583 = vmatpush1.bf16.xpose.msra.mxu0 0
        %584 = vmatprep.subr.bf16.mxu0 0
        %585 = vmatpush1.bf16.xpose.msra.mxu0 0
        %586 = vmatprep.mubr.bf16.mxu0 0
        %587 = vmatmul.mubr.bf16.gmra.mrb[0].mxu0 %v549
        %v588 = vpop.f32.mrb[0].mxu0
        %v589 = vadd.f32 0.0, %v588
        %v590 = vpop.f32.mrb[0].mxu0
        %v591 = vpop.f32.mrb[0].mxu0
        %v592 = vadd.f32 0.0, %v591
        %v593 = vpop.f32.mrb[0].mxu0
        %594 = vdwg.mxu0
        %vm595 = vcmask 130048
        %v596 = vsel %vm595, %v589, -inf
        %597 = vmax.xlane.f32.xlu0 %v596
        %v598 = vpop.xlane.xlu0 %597
        %v599 = vsel %vm595, %v592, -inf
        %600 = vmax.xlane.f32.xlu0 %v599
        %v601 = vpop.xlane.xlu0 %600
        %v602 = vsub.f32 %v589, %v598
        %v603 = vsub.f32 %v592, %v601
        %v604 = vmul.f32 %v602, 1.442695
        %v605 = vpow.pop %v604
        %v606 = vmul.f32 %v603, 1.442695
        %v607 = vpow.pop %v606
        %v608 = vsel %vm595, %v605, 0.0
        %609 = vadd.xlane.f32.xlu0 %v608
        %v610 = vpop.xlane.xlu0 %609
        %v611 = vsel %vm595, %v607, 0.0
        %612 = vadd.xlane.f32.xlu0 %v611
        %v613 = vpop.xlane.xlu0 %612
        %v614 = vrcp.pop %v610
        %v615 = vrcp.pop %v613
        %v616 = vmul.f32 %v605, %v614
        %v617 = vmul.f32 %v607, %v615
        %v618 = vadd.f32 %v616, %v280
        %v619 = vadd.f32 %v617, %v281
        %v620 = vpack.c.bf16 %v619, %v618
        %v622 = vsel %vm595, %v620, 0
        %624 = vmatprep.subr.bf16.mxu0 0
        %625 = vmatpush1.bf16.msra.mxu0 %v546
        %626 = vmatprep.subr.bf16.mxu0 0
        %627 = vmatpush1.bf16.msra.mxu0 0
        %628 = vmatprep.subr.bf16.mxu0 0
        %629 = vmatpush1.bf16.msra.mxu0 0
        %630 = vmatprep.subr.bf16.mxu0 0
        %631 = vmatpush1.bf16.msra.mxu0 0
        %632 = vmatprep.subr.bf16.mxu0 0
        %633 = vmatpush1.bf16.msra.mxu0 0
        %634 = vmatprep.subr.bf16.mxu0 0
        %635 = vmatpush1.bf16.msra.mxu0 0
        %636 = vmatprep.subr.bf16.mxu0 0
        %637 = vmatpush1.bf16.msra.mxu0 0
        %638 = vmatprep.subr.bf16.mxu0 0
        %639 = vmatpush1.bf16.msra.mxu0 0
        %640 = vmatprep.subr.bf16.mxu0 0
        %641 = vmatpush1.bf16.msra.mxu0 0
        %642 = vmatprep.subr.bf16.mxu0 0
        %643 = vmatpush1.bf16.msra.mxu0 0
        %644 = vmatprep.subr.bf16.mxu0 0
        %645 = vmatpush1.bf16.msra.mxu0 0
        %646 = vmatprep.subr.bf16.mxu0 0
        %647 = vmatpush1.bf16.msra.mxu0 0
        %648 = vmatprep.subr.bf16.mxu0 0
        %649 = vmatpush1.bf16.msra.mxu0 0
        %650 = vmatprep.subr.bf16.mxu0 0
        %651 = vmatpush1.bf16.msra.mxu0 0
        %652 = vmatprep.subr.bf16.mxu0 0
        %653 = vmatpush1.bf16.msra.mxu0 0
        %654 = vmatprep.subr.bf16.mxu0 0
        %655 = vmatpush1.bf16.msra.mxu0 0
        %656 = vmatprep.mubr.bf16.mxu0 0
        %657 = vmatmul.mubr.bf16.gmra.mrb[0].mxu0 %v622
        %v658 = vpop.f32.mrb[0].mxu0
        %v659 = vadd.f32 0.0, %v658
        %v660 = vpop.f32.mrb[0].mxu0
        %v661 = vpop.f32.mrb[0].mxu0
        %v662 = vadd.f32 0.0, %v661
        %v663 = vpop.f32.mrb[0].mxu0
        %664 = vdwg.mxu0
        %v666 = vsel %vm547, %v659, 0
        %v669 = vsel %vm547, %v662, 0
        %v672 = vsel %vm547, %v301, 0
        %v675 = vsel %vm547, %v302, 0
        %v678 = vsel %vm547, %v303, 0
        %v681 = vsel %vm547, %v304, 0
        %v684 = vsel %vm547, %v305, 0
        %v687 = vsel %vm547, %v306, 0
        %v690 = vsel %vm547, %v307, 0
        %v693 = vsel %vm547, %v308, 0
        %v696 = vsel %vm547, %v309, 0
        %v699 = vsel %vm547, %v310, 0
        %v702 = vsel %vm547, %v311, 0
        %v705 = vsel %vm547, %v312, 0
        %v708 = vsel %vm547, %v313, 0
        %v711 = vsel %vm547, %v314, 0
        %v714 = vsel %vm547, %v315, 0
        %v717 = vsel %vm547, %v316, 0
        %719 = vmatprep.subr.mxu0 0.0
        %720 = vmatpush1.xpose.msra.mxu0 %v672
        %721 = vmatprep.subr.mxu0 0.0
        %722 = vmatpush1.xpose.msra.mxu0 %v675
        %723 = vmatprep.subr.mxu0 0.0
        %724 = vmatpush1.xpose.msra.mxu0 %v678
        %725 = vmatprep.subr.mxu0 0.0
        %726 = vmatpush1.xpose.msra.mxu0 %v681
        %727 = vmatprep.subr.mxu0 0.0
        %728 = vmatpush1.xpose.msra.mxu0 %v684
        %729 = vmatprep.subr.mxu0 0.0
        %730 = vmatpush1.xpose.msra.mxu0 %v687
        %731 = vmatprep.subr.mxu0 0.0
        %732 = vmatpush1.xpose.msra.mxu0 %v690
        %733 = vmatprep.subr.mxu0 0.0
        %734 = vmatpush1.xpose.msra.mxu0 %v693
        %735 = vmatprep.subr.mxu0 0.0
        %736 = vmatpush1.xpose.msra.mxu0 %v696
        %737 = vmatprep.subr.mxu0 0.0
        %738 = vmatpush1.xpose.msra.mxu0 %v699
        %739 = vmatprep.subr.mxu0 0.0
        %740 = vmatpush1.xpose.msra.mxu0 %v702
        %741 = vmatprep.subr.mxu0 0.0
        %742 = vmatpush1.xpose.msra.mxu0 %v705
        %743 = vmatprep.subr.mxu0 0.0
        %744 = vmatpush1.xpose.msra.mxu0 %v708
        %745 = vmatprep.subr.mxu0 0.0
        %746 = vmatpush1.xpose.msra.mxu0 %v711
        %747 = vmatprep.subr.mxu0 0.0
        %748 = vmatpush1.xpose.msra.mxu0 %v714
        %749 = vmatprep.subr.mxu0 0.0
        %750 = vmatpush1.xpose.msra.mxu0 %v717
        %751 = vmatprep.subr.mxu0 0.0
        %752 = vmatpush1.xpose.msra.mxu0 0.0
        %753 = vmatprep.subr.mxu0 0.0
        %754 = vmatpush1.xpose.msra.mxu0 0.0
        %755 = vmatprep.subr.mxu0 0.0
        %756 = vmatpush1.xpose.msra.mxu0 0.0
        %757 = vmatprep.subr.mxu0 0.0
        %758 = vmatpush1.xpose.msra.mxu0 0.0
        %759 = vmatprep.subr.mxu0 0.0
        %760 = vmatpush1.xpose.msra.mxu0 0.0
        %761 = vmatprep.subr.mxu0 0.0
        %762 = vmatpush1.xpose.msra.mxu0 0.0
        %763 = vmatprep.subr.mxu0 0.0
        %764 = vmatpush1.xpose.msra.mxu0 0.0
        %765 = vmatprep.subr.mxu0 0.0
        %766 = vmatpush1.xpose.msra.mxu0 0.0
        %767 = vmatprep.subr.mxu0 0.0
        %768 = vmatpush1.xpose.msra.mxu0 0.0
        %769 = vmatprep.subr.mxu0 0.0
        %770 = vmatpush1.xpose.msra.mxu0 0.0
        %771 = vmatprep.subr.mxu0 0.0
        %772 = vmatpush1.xpose.msra.mxu0 0.0
        %773 = vmatprep.subr.mxu0 0.0
        %774 = vmatpush1.xpose.msra.mxu0 0.0
        %775 = vmatprep.subr.mxu0 0.0
        %776 = vmatpush1.xpose.msra.mxu0 0.0
        %777 = vmatprep.subr.mxu0 0.0
        %778 = vmatpush1.xpose.msra.mxu0 0.0
        %779 = vmatprep.subr.mxu0 0.0
        %780 = vmatpush1.xpose.msra.mxu0 0.0
        %781 = vmatprep.subr.mxu0 0.0
        %782 = vmatpush1.xpose.msra.mxu0 0.0
        %783 = vmatprep.mubr.f32.mxu0 0.0
        %784 = vmatmul.mubr.f32.gmra.mrb[0].mxu0 %v666
        %v785 = vpop.f32.mrb[0].mxu0
        %v786 = vadd.f32 0.0, %v785
        %v787 = vpop.f32.mrb[0].mxu0
        %788 = vmatprep.mubr.f32.mxu0 0.0
        %789 = vmatmul.mubr.f32.gmra.mrb[0].mxu0 %v669
        %v790 = vpop.f32.mrb[0].mxu0
        %v791 = vadd.f32 0.0, %v790
        %v792 = vpop.f32.mrb[0].mxu0
        %793 = vdwg.mxu0
        %v794 = vadd.f32 %v287, %v786
        %v795 = vadd.f32 %v287, %v791
        %s796 = scalar_lea.vmem %s1, 32
        %v797 = vld [vmem:[%s796] sm:$0xff]
        %v798 = vld [vmem:[%s796 + $0x8] sm:$0xff]
        %v799 = vld [vmem:[%s796 + $0x10] sm:$0xff]
        %v800 = vld [vmem:[%s796 + $0x18] sm:$0xff]
        %s801 = scalar_lea.vmem %s2, 32
        %v802 = vld [vmem:[%s801] sm:$0xff]
        %v803 = vld [vmem:[%s801 + $0x8] sm:$0xff]
        %v804 = vld [vmem:[%s801 + $0x10] sm:$0xff]
        %v805 = vld [vmem:[%s801 + $0x18] sm:$0xff]
        %s806 = scalar_lea.vmem %s3, 32
        %v807 = vld [vmem:[%s806] sm:$0xff]
        %v808 = vld [vmem:[%s806 + $0x8] sm:$0xff]
        %v809 = vld [vmem:[%s806 + $0x10] sm:$0xff]
        %v810 = vld [vmem:[%s806 + $0x18] sm:$0xff]
        %s811 = scalar_lea.vmem %s5, 128
        %v812 = vld [vmem:[%s811] sm:$0xff]
        %v813 = vld [vmem:[%s811 + $0x8] sm:$0xff]
        %v814 = vld [vmem:[%s811 + $0x10] sm:$0xff]
        %v815 = vld [vmem:[%s811 + $0x18] sm:$0xff]
        %v816 = vld [vmem:[%s811 + $0x20] sm:$0xff]
        %v817 = vld [vmem:[%s811 + $0x28] sm:$0xff]
        %v818 = vld [vmem:[%s811 + $0x30] sm:$0xff]
        %v819 = vld [vmem:[%s811 + $0x38] sm:$0xff]
        %v820 = vld [vmem:[%s811 + $0x40] sm:$0xff]
        %v821 = vld [vmem:[%s811 + $0x48] sm:$0xff]
        %v822 = vld [vmem:[%s811 + $0x50] sm:$0xff]
        %v823 = vld [vmem:[%s811 + $0x58] sm:$0xff]
        %v824 = vld [vmem:[%s811 + $0x60] sm:$0xff]
        %v825 = vld [vmem:[%s811 + $0x68] sm:$0xff]
        %v826 = vld [vmem:[%s811 + $0x70] sm:$0xff]
        %v827 = vld [vmem:[%s811 + $0x78] sm:$0xff]
        %828 = vmatprep.subr.mxu0 0.0
        %829 = vmatpush1.xpose.msra.mxu0 %v797
        %830 = vmatprep.subr.mxu0 0.0
        %831 = vmatpush1.xpose.msra.mxu0 %v798
        %832 = vmatprep.subr.mxu0 0.0
        %833 = vmatpush1.xpose.msra.mxu0 %v799
        %834 = vmatprep.subr.mxu0 0.0
        %835 = vmatpush1.xpose.msra.mxu0 %v800
        %836 = vmatprep.subr.mxu0 0.0
        %837 = vmatpush1.xpose.msra.mxu0 0.0
        %838 = vmatprep.subr.mxu0 0.0
        %839 = vmatpush1.xpose.msra.mxu0 0.0
        %840 = vmatprep.subr.mxu0 0.0
        %841 = vmatpush1.xpose.msra.mxu0 0.0
        %842 = vmatprep.subr.mxu0 0.0
        %843 = vmatpush1.xpose.msra.mxu0 0.0
        %844 = vmatprep.subr.mxu0 0.0
        %845 = vmatpush1.xpose.msra.mxu0 0.0
        %846 = vmatprep.subr.mxu0 0.0
        %847 = vmatpush1.xpose.msra.mxu0 0.0
        %848 = vmatprep.subr.mxu0 0.0
        %849 = vmatpush1.xpose.msra.mxu0 0.0
        %850 = vmatprep.subr.mxu0 0.0
        %851 = vmatpush1.xpose.msra.mxu0 0.0
        %852 = vmatprep.subr.mxu0 0.0
        %853 = vmatpush1.xpose.msra.mxu0 0.0
        %854 = vmatprep.subr.mxu0 0.0
        %855 = vmatpush1.xpose.msra.mxu0 0.0
        %856 = vmatprep.subr.mxu0 0.0
        %857 = vmatpush1.xpose.msra.mxu0 0.0
        %858 = vmatprep.subr.mxu0 0.0
        %859 = vmatpush1.xpose.msra.mxu0 0.0
        %860 = vmatprep.subr.mxu0 0.0
        %861 = vmatpush1.xpose.msra.mxu0 0.0
        %862 = vmatprep.subr.mxu0 0.0
        %863 = vmatpush1.xpose.msra.mxu0 0.0
        %864 = vmatprep.subr.mxu0 0.0
        %865 = vmatpush1.xpose.msra.mxu0 0.0
        %866 = vmatprep.subr.mxu0 0.0
        %867 = vmatpush1.xpose.msra.mxu0 0.0
        %868 = vmatprep.subr.mxu0 0.0
        %869 = vmatpush1.xpose.msra.mxu0 0.0
        %870 = vmatprep.subr.mxu0 0.0
        %871 = vmatpush1.xpose.msra.mxu0 0.0
        %872 = vmatprep.subr.mxu0 0.0
        %873 = vmatpush1.xpose.msra.mxu0 0.0
        %874 = vmatprep.subr.mxu0 0.0
        %875 = vmatpush1.xpose.msra.mxu0 0.0
        %876 = vmatprep.subr.mxu0 0.0
        %877 = vmatpush1.xpose.msra.mxu0 0.0
        %878 = vmatprep.subr.mxu0 0.0
        %879 = vmatpush1.xpose.msra.mxu0 0.0
        %880 = vmatprep.subr.mxu0 0.0
        %881 = vmatpush1.xpose.msra.mxu0 0.0
        %882 = vmatprep.subr.mxu0 0.0
        %883 = vmatpush1.xpose.msra.mxu0 0.0
        %884 = vmatprep.subr.mxu0 0.0
        %885 = vmatpush1.xpose.msra.mxu0 0.0
        %886 = vmatprep.subr.mxu0 0.0
        %887 = vmatpush1.xpose.msra.mxu0 0.0
        %888 = vmatprep.subr.mxu0 0.0
        %889 = vmatpush1.xpose.msra.mxu0 0.0
        %890 = vmatprep.subr.mxu0 0.0
        %891 = vmatpush1.xpose.msra.mxu0 0.0
        %892 = vmatprep.mubr.f32.mxu0 0.0
        %893 = vmatmul.mubr.f32.gmra.mrb[0].mxu0 %v278
        %v894 = vpop.f32.mrb[0].mxu0
        %v895 = vadd.f32 0.0, %v894
        %v896 = vpop.f32.mrb[0].mxu0
        %897 = vmatprep.mubr.f32.mxu0 0.0
        %898 = vmatmul.mubr.f32.gmra.mrb[0].mxu0 %v279
        %v899 = vpop.f32.mrb[0].mxu0
        %v900 = vadd.f32 0.0, %v899
        %v901 = vpop.f32.mrb[0].mxu0
        %902 = vdwg.mxu0
        %903 = vmatprep.subr.mxu0 0.0
        %904 = vmatpush1.xpose.msra.mxu0 %v802
        %905 = vmatprep.subr.mxu0 0.0
        %906 = vmatpush1.xpose.msra.mxu0 %v803
        %907 = vmatprep.subr.mxu0 0.0
        %908 = vmatpush1.xpose.msra.mxu0 %v804
        %909 = vmatprep.subr.mxu0 0.0
        %910 = vmatpush1.xpose.msra.mxu0 %v805
        %911 = vmatprep.subr.mxu0 0.0
        %912 = vmatpush1.xpose.msra.mxu0 0.0
        %913 = vmatprep.subr.mxu0 0.0
        %914 = vmatpush1.xpose.msra.mxu0 0.0
        %915 = vmatprep.subr.mxu0 0.0
        %916 = vmatpush1.xpose.msra.mxu0 0.0
        %917 = vmatprep.subr.mxu0 0.0
        %918 = vmatpush1.xpose.msra.mxu0 0.0
        %919 = vmatprep.subr.mxu0 0.0
        %920 = vmatpush1.xpose.msra.mxu0 0.0
        %921 = vmatprep.subr.mxu0 0.0
        %922 = vmatpush1.xpose.msra.mxu0 0.0
        %923 = vmatprep.subr.mxu0 0.0
        %924 = vmatpush1.xpose.msra.mxu0 0.0
        %925 = vmatprep.subr.mxu0 0.0
        %926 = vmatpush1.xpose.msra.mxu0 0.0
        %927 = vmatprep.subr.mxu0 0.0
        %928 = vmatpush1.xpose.msra.mxu0 0.0
        %929 = vmatprep.subr.mxu0 0.0
        %930 = vmatpush1.xpose.msra.mxu0 0.0
        %931 = vmatprep.subr.mxu0 0.0
        %932 = vmatpush1.xpose.msra.mxu0 0.0
        %933 = vmatprep.subr.mxu0 0.0
        %934 = vmatpush1.xpose.msra.mxu0 0.0
        %935 = vmatprep.subr.mxu0 0.0
        %936 = vmatpush1.xpose.msra.mxu0 0.0
        %937 = vmatprep.subr.mxu0 0.0
        %938 = vmatpush1.xpose.msra.mxu0 0.0
        %939 = vmatprep.subr.mxu0 0.0
        %940 = vmatpush1.xpose.msra.mxu0 0.0
        %941 = vmatprep.subr.mxu0 0.0
        %942 = vmatpush1.xpose.msra.mxu0 0.0
        %943 = vmatprep.subr.mxu0 0.0
        %944 = vmatpush1.xpose.msra.mxu0 0.0
        %945 = vmatprep.subr.mxu0 0.0
        %946 = vmatpush1.xpose.msra.mxu0 0.0
        %947 = vmatprep.subr.mxu0 0.0
        %948 = vmatpush1.xpose.msra.mxu0 0.0
        %949 = vmatprep.subr.mxu0 0.0
        %950 = vmatpush1.xpose.msra.mxu0 0.0
        %951 = vmatprep.subr.mxu0 0.0
        %952 = vmatpush1.xpose.msra.mxu0 0.0
        %953 = vmatprep.subr.mxu0 0.0
        %954 = vmatpush1.xpose.msra.mxu0 0.0
        %955 = vmatprep.subr.mxu0 0.0
        %956 = vmatpush1.xpose.msra.mxu0 0.0
        %957 = vmatprep.subr.mxu0 0.0
        %958 = vmatpush1.xpose.msra.mxu0 0.0
        %959 = vmatprep.subr.mxu0 0.0
        %960 = vmatpush1.xpose.msra.mxu0 0.0
        %961 = vmatprep.subr.mxu0 0.0
        %962 = vmatpush1.xpose.msra.mxu0 0.0
        %963 = vmatprep.subr.mxu0 0.0
        %964 = vmatpush1.xpose.msra.mxu0 0.0
        %965 = vmatprep.subr.mxu0 0.0
        %966 = vmatpush1.xpose.msra.mxu0 0.0
        %967 = vmatprep.mubr.f32.mxu0 0.0
        %968 = vmatmul.mubr.f32.gmra.mrb[0].mxu0 %v278
        %v969 = vpop.f32.mrb[0].mxu0
        %v970 = vadd.f32 0.0, %v969
        %v971 = vpop.f32.mrb[0].mxu0
        %972 = vmatprep.mubr.f32.mxu0 0.0
        %973 = vmatmul.mubr.f32.gmra.mrb[0].mxu0 %v279
        %v974 = vpop.f32.mrb[0].mxu0
        %v975 = vadd.f32 0.0, %v974
        %v976 = vpop.f32.mrb[0].mxu0
        %977 = vdwg.mxu0
        %978 = vmatprep.subr.mxu0 0.0
        %979 = vmatpush1.xpose.msra.mxu0 %v807
        %980 = vmatprep.subr.mxu0 0.0
        %981 = vmatpush1.xpose.msra.mxu0 %v808
        %982 = vmatprep.subr.mxu0 0.0
        %983 = vmatpush1.xpose.msra.mxu0 %v809
        %984 = vmatprep.subr.mxu0 0.0
        %985 = vmatpush1.xpose.msra.mxu0 %v810
        %986 = vmatprep.subr.mxu0 0.0
        %987 = vmatpush1.xpose.msra.mxu0 0.0
        %988 = vmatprep.subr.mxu0 0.0
        %989 = vmatpush1.xpose.msra.mxu0 0.0
        %990 = vmatprep.subr.mxu0 0.0
        %991 = vmatpush1.xpose.msra.mxu0 0.0
        %992 = vmatprep.subr.mxu0 0.0
        %993 = vmatpush1.xpose.msra.mxu0 0.0
        %994 = vmatprep.subr.mxu0 0.0
        %995 = vmatpush1.xpose.msra.mxu0 0.0
        %996 = vmatprep.subr.mxu0 0.0
        %997 = vmatpush1.xpose.msra.mxu0 0.0
        %998 = vmatprep.subr.mxu0 0.0
        %999 = vmatpush1.xpose.msra.mxu0 0.0
        %1000 = vmatprep.subr.mxu0 0.0
        %1001 = vmatpush1.xpose.msra.mxu0 0.0
        %1002 = vmatprep.subr.mxu0 0.0
        %1003 = vmatpush1.xpose.msra.mxu0 0.0
        %1004 = vmatprep.subr.mxu0 0.0
        %1005 = vmatpush1.xpose.msra.mxu0 0.0
        %1006 = vmatprep.subr.mxu0 0.0
        %1007 = vmatpush1.xpose.msra.mxu0 0.0
        %1008 = vmatprep.subr.mxu0 0.0
        %1009 = vmatpush1.xpose.msra.mxu0 0.0
        %1010 = vmatprep.subr.mxu0 0.0
        %1011 = vmatpush1.xpose.msra.mxu0 0.0
        %1012 = vmatprep.subr.mxu0 0.0
        %1013 = vmatpush1.xpose.msra.mxu0 0.0
        %1014 = vmatprep.subr.mxu0 0.0
        %1015 = vmatpush1.xpose.msra.mxu0 0.0
        %1016 = vmatprep.subr.mxu0 0.0
        %1017 = vmatpush1.xpose.msra.mxu0 0.0
        %1018 = vmatprep.subr.mxu0 0.0
        %1019 = vmatpush1.xpose.msra.mxu0 0.0
        %1020 = vmatprep.subr.mxu0 0.0
        %1021 = vmatpush1.xpose.msra.mxu0 0.0
        %1022 = vmatprep.subr.mxu0 0.0
        %1023 = vmatpush1.xpose.msra.mxu0 0.0
        %1024 = vmatprep.subr.mxu0 0.0
        %1025 = vmatpush1.xpose.msra.mxu0 0.0
        %1026 = vmatprep.subr.mxu0 0.0
        %1027 = vmatpush1.xpose.msra.mxu0 0.0
        %1028 = vmatprep.subr.mxu0 0.0
        %1029 = vmatpush1.xpose.msra.mxu0 0.0
        %1030 = vmatprep.subr.mxu0 0.0
        %1031 = vmatpush1.xpose.msra.mxu0 0.0
        %1032 = vmatprep.subr.mxu0 0.0
        %1033 = vmatpush1.xpose.msra.mxu0 0.0
        %1034 = vmatprep.subr.mxu0 0.0
        %1035 = vmatpush1.xpose.msra.mxu0 0.0
        %1036 = vmatprep.subr.mxu0 0.0
        %1037 = vmatpush1.xpose.msra.mxu0 0.0
        %1038 = vmatprep.subr.mxu0 0.0
        %1039 = vmatpush1.xpose.msra.mxu0 0.0
        %1040 = vmatprep.subr.mxu0 0.0
        %1041 = vmatpush1.xpose.msra.mxu0 0.0
        %1042 = vmatprep.mubr.f32.mxu0 0.0
        %1043 = vmatmul.mubr.f32.gmra.mrb[0].mxu0 %v278
        %v1044 = vpop.f32.mrb[0].mxu0
        %v1045 = vadd.f32 0.0, %v1044
        %v1046 = vpop.f32.mrb[0].mxu0
        %1047 = vmatprep.mubr.f32.mxu0 0.0
        %1048 = vmatmul.mubr.f32.gmra.mrb[0].mxu0 %v279
        %v1049 = vpop.f32.mrb[0].mxu0
        %v1050 = vadd.f32 0.0, %v1049
        %v1051 = vpop.f32.mrb[0].mxu0
        %1052 = vdwg.mxu0
        %v1053 = vmul.f32 %v895, 0.17677669
        %v1054 = vmul.f32 %v900, 0.17677669
        %v1055 = vpack.c.bf16 %v1054, %v1053
        %v1056 = vpack.c.bf16 %v975, %v970
        %v1057 = vpack.c.bf16 %v1050, %v1045
        %v1059 = vsel %vm547, %v1055, 0
        %v1062 = vsel %vm547, %v1056, 0
        %1064 = vmatprep.subr.bf16.mxu0 0
        %1065 = vmatpush1.bf16.xpose.msra.mxu0 %v1062
        %1066 = vmatprep.subr.bf16.mxu0 0
        %1067 = vmatpush1.bf16.xpose.msra.mxu0 0
        %1068 = vmatprep.subr.bf16.mxu0 0
        %1069 = vmatpush1.bf16.xpose.msra.mxu0 0
        %1070 = vmatprep.subr.bf16.mxu0 0
        %1071 = vmatpush1.bf16.xpose.msra.mxu0 0
        %1072 = vmatprep.subr.bf16.mxu0 0
        %1073 = vmatpush1.bf16.xpose.msra.mxu0 0
        %1074 = vmatprep.subr.bf16.mxu0 0
        %1075 = vmatpush1.bf16.xpose.msra.mxu0 0
        %1076 = vmatprep.subr.bf16.mxu0 0
        %1077 = vmatpush1.bf16.xpose.msra.mxu0 0
        %1078 = vmatprep.subr.bf16.mxu0 0
        %1079 = vmatpush1.bf16.xpose.msra.mxu0 0
        %1080 = vmatprep.subr.bf16.mxu0 0
        %1081 = vmatpush1.bf16.xpose.msra.mxu0 0
        %1082 = vmatprep.subr.bf16.mxu0 0
        %1083 = vmatpush1.bf16.xpose.msra.mxu0 0
        %1084 = vmatprep.subr.bf16.mxu0 0
        %1085 = vmatpush1.bf16.xpose.msra.mxu0 0
        %1086 = vmatprep.subr.bf16.mxu0 0
        %1087 = vmatpush1.bf16.xpose.msra.mxu0 0
        %1088 = vmatprep.subr.bf16.mxu0 0
        %1089 = vmatpush1.bf16.xpose.msra.mxu0 0
        %1090 = vmatprep.subr.bf16.mxu0 0
        %1091 = vmatpush1.bf16.xpose.msra.mxu0 0
        %1092 = vmatprep.subr.bf16.mxu0 0
        %1093 = vmatpush1.bf16.xpose.msra.mxu0 0
        %1094 = vmatprep.subr.bf16.mxu0 0
        %1095 = vmatpush1.bf16.xpose.msra.mxu0 0
        %1096 = vmatprep.mubr.bf16.mxu0 0
        %1097 = vmatmul.mubr.bf16.gmra.mrb[0].mxu0 %v1059
        %v1098 = vpop.f32.mrb[0].mxu0
        %v1099 = vadd.f32 0.0, %v1098
        %v1100 = vpop.f32.mrb[0].mxu0
        %v1101 = vpop.f32.mrb[0].mxu0
        %v1102 = vadd.f32 0.0, %v1101
        %v1103 = vpop.f32.mrb[0].mxu0
        %1104 = vdwg.mxu0
        %v1105 = vsel %vm595, %v1099, -inf
        %1106 = vmax.xlane.f32.xlu0 %v1105
        %v1107 = vpop.xlane.xlu0 %1106
        %v1108 = vsel %vm595, %v1102, -inf
        %1109 = vmax.xlane.f32.xlu0 %v1108
        %v1110 = vpop.xlane.xlu0 %1109
        %v1111 = vsub.f32 %v1099, %v1107
        %v1112 = vsub.f32 %v1102, %v1110
        %v1113 = vmul.f32 %v1111, 1.442695
        %v1114 = vpow.pop %v1113
        %v1115 = vmul.f32 %v1112, 1.442695
        %v1116 = vpow.pop %v1115
        %v1117 = vsel %vm595, %v1114, 0.0
        %1118 = vadd.xlane.f32.xlu0 %v1117
        %v1119 = vpop.xlane.xlu0 %1118
        %v1120 = vsel %vm595, %v1116, 0.0
        %1121 = vadd.xlane.f32.xlu0 %v1120
        %v1122 = vpop.xlane.xlu0 %1121
        %v1123 = vrcp.pop %v1119
        %v1124 = vrcp.pop %v1122
        %v1125 = vmul.f32 %v1114, %v1123
        %v1126 = vmul.f32 %v1116, %v1124
        %v1127 = vadd.f32 %v1125, %v280
        %v1128 = vadd.f32 %v1126, %v281
        %v1129 = vpack.c.bf16 %v1128, %v1127
        %v1131 = vsel %vm595, %v1129, 0
        %1133 = vmatprep.subr.bf16.mxu0 0
        %1134 = vmatpush1.bf16.msra.mxu0 %v1057
        %1135 = vmatprep.subr.bf16.mxu0 0
        %1136 = vmatpush1.bf16.msra.mxu0 0
        %1137 = vmatprep.subr.bf16.mxu0 0
        %1138 = vmatpush1.bf16.msra.mxu0 0
        %1139 = vmatprep.subr.bf16.mxu0 0
        %1140 = vmatpush1.bf16.msra.mxu0 0
        %1141 = vmatprep.subr.bf16.mxu0 0
        %1142 = vmatpush1.bf16.msra.mxu0 0
        %1143 = vmatprep.subr.bf16.mxu0 0
        %1144 = vmatpush1.bf16.msra.mxu0 0
        %1145 = vmatprep.subr.bf16.mxu0 0
        %1146 = vmatpush1.bf16.msra.mxu0 0
        %1147 = vmatprep.subr.bf16.mxu0 0
        %1148 = vmatpush1.bf16.msra.mxu0 0
        %1149 = vmatprep.subr.bf16.mxu0 0
        %1150 = vmatpush1.bf16.msra.mxu0 0
        %1151 = vmatprep.subr.bf16.mxu0 0
        %1152 = vmatpush1.bf16.msra.mxu0 0
        %1153 = vmatprep.subr.bf16.mxu0 0
        %1154 = vmatpush1.bf16.msra.mxu0 0
        %1155 = vmatprep.subr.bf16.mxu0 0
        %1156 = vmatpush1.bf16.msra.mxu0 0
        %1157 = vmatprep.subr.bf16.mxu0 0
        %1158 = vmatpush1.bf16.msra.mxu0 0
        %1159 = vmatprep.subr.bf16.mxu0 0
        %1160 = vmatpush1.bf16.msra.mxu0 0
        %1161 = vmatprep.subr.bf16.mxu0 0
        %1162 = vmatpush1.bf16.msra.mxu0 0
        %1163 = vmatprep.subr.bf16.mxu0 0
        %1164 = vmatpush1.bf16.msra.mxu0 0
        %1165 = vmatprep.mubr.bf16.mxu0 0
        %1166 = vmatmul.mubr.bf16.gmra.mrb[0].mxu0 %v1131
        %v1167 = vpop.f32.mrb[0].mxu0
        %v1168 = vadd.f32 0.0, %v1167
        %v1169 = vpop.f32.mrb[0].mxu0
        %v1170 = vpop.f32.mrb[0].mxu0
        %v1171 = vadd.f32 0.0, %v1170
        %v1172 = vpop.f32.mrb[0].mxu0
        %1173 = vdwg.mxu0
        %v1175 = vsel %vm547, %v1168, 0
        %v1178 = vsel %vm547, %v1171, 0
        %v1181 = vsel %vm547, %v812, 0
        %v1184 = vsel %vm547, %v813, 0
        %v1187 = vsel %vm547, %v814, 0
        %v1190 = vsel %vm547, %v815, 0
        %v1193 = vsel %vm547, %v816, 0
        %v1196 = vsel %vm547, %v817, 0
        %v1199 = vsel %vm547, %v818, 0
        %v1202 = vsel %vm547, %v819, 0
        %v1205 = vsel %vm547, %v820, 0
        %v1208 = vsel %vm547, %v821, 0
        %v1211 = vsel %vm547, %v822, 0
        %v1214 = vsel %vm547, %v823, 0
        %v1217 = vsel %vm547, %v824, 0
        %v1220 = vsel %vm547, %v825, 0
        %v1223 = vsel %vm547, %v826, 0
        %v1226 = vsel %vm547, %v827, 0
        %1228 = vmatprep.subr.mxu0 0.0
        %1229 = vmatpush1.xpose.msra.mxu0 %v1181
        %1230 = vmatprep.subr.mxu0 0.0
        %1231 = vmatpush1.xpose.msra.mxu0 %v1184
        %1232 = vmatprep.subr.mxu0 0.0
        %1233 = vmatpush1.xpose.msra.mxu0 %v1187
        %1234 = vmatprep.subr.mxu0 0.0
        %1235 = vmatpush1.xpose.msra.mxu0 %v1190
        %1236 = vmatprep.subr.mxu0 0.0
        %1237 = vmatpush1.xpose.msra.mxu0 %v1193
        %1238 = vmatprep.subr.mxu0 0.0
        %1239 = vmatpush1.xpose.msra.mxu0 %v1196
        %1240 = vmatprep.subr.mxu0 0.0
        %1241 = vmatpush1.xpose.msra.mxu0 %v1199
        %1242 = vmatprep.subr.mxu0 0.0
        %1243 = vmatpush1.xpose.msra.mxu0 %v1202
        %1244 = vmatprep.subr.mxu0 0.0
        %1245 = vmatpush1.xpose.msra.mxu0 %v1205
        %1246 = vmatprep.subr.mxu0 0.0
        %1247 = vmatpush1.xpose.msra.mxu0 %v1208
        %1248 = vmatprep.subr.mxu0 0.0
        %1249 = vmatpush1.xpose.msra.mxu0 %v1211
        %1250 = vmatprep.subr.mxu0 0.0
        %1251 = vmatpush1.xpose.msra.mxu0 %v1214
        %1252 = vmatprep.subr.mxu0 0.0
        %1253 = vmatpush1.xpose.msra.mxu0 %v1217
        %1254 = vmatprep.subr.mxu0 0.0
        %1255 = vmatpush1.xpose.msra.mxu0 %v1220
        %1256 = vmatprep.subr.mxu0 0.0
        %1257 = vmatpush1.xpose.msra.mxu0 %v1223
        %1258 = vmatprep.subr.mxu0 0.0
        %1259 = vmatpush1.xpose.msra.mxu0 %v1226
        %1260 = vmatprep.subr.mxu0 0.0
        %1261 = vmatpush1.xpose.msra.mxu0 0.0
        %1262 = vmatprep.subr.mxu0 0.0
        %1263 = vmatpush1.xpose.msra.mxu0 0.0
        %1264 = vmatprep.subr.mxu0 0.0
        %1265 = vmatpush1.xpose.msra.mxu0 0.0
        %1266 = vmatprep.subr.mxu0 0.0
        %1267 = vmatpush1.xpose.msra.mxu0 0.0
        %1268 = vmatprep.subr.mxu0 0.0
        %1269 = vmatpush1.xpose.msra.mxu0 0.0
        %1270 = vmatprep.subr.mxu0 0.0
        %1271 = vmatpush1.xpose.msra.mxu0 0.0
        %1272 = vmatprep.subr.mxu0 0.0
        %1273 = vmatpush1.xpose.msra.mxu0 0.0
        %1274 = vmatprep.subr.mxu0 0.0
        %1275 = vmatpush1.xpose.msra.mxu0 0.0
        %1276 = vmatprep.subr.mxu0 0.0
        %1277 = vmatpush1.xpose.msra.mxu0 0.0
        %1278 = vmatprep.subr.mxu0 0.0
        %1279 = vmatpush1.xpose.msra.mxu0 0.0
        %1280 = vmatprep.subr.mxu0 0.0
        %1281 = vmatpush1.xpose.msra.mxu0 0.0
        %1282 = vmatprep.subr.mxu0 0.0
        %1283 = vmatpush1.xpose.msra.mxu0 0.0
        %1284 = vmatprep.subr.mxu0 0.0
        %1285 = vmatpush1.xpose.msra.mxu0 0.0
        %1286 = vmatprep.subr.mxu0 0.0
        %1287 = vmatpush1.xpose.msra.mxu0 0.0
        %1288 = vmatprep.subr.mxu0 0.0
        %1289 = vmatpush1.xpose.msra.mxu0 0.0
        %1290 = vmatprep.subr.mxu0 0.0
        %1291 = vmatpush1.xpose.msra.mxu0 0.0
        %1292 = vmatprep.mubr.f32.mxu0 0.0
        %1293 = vmatmul.mubr.f32.gmra.mrb[0].mxu0 %v1175
        %v1294 = vpop.f32.mrb[0].mxu0
        %v1295 = vadd.f32 0.0, %v1294
        %v1296 = vpop.f32.mrb[0].mxu0
        %1297 = vmatprep.mubr.f32.mxu0 0.0
        %1298 = vmatmul.mubr.f32.gmra.mrb[0].mxu0 %v1178
        %v1299 = vpop.f32.mrb[0].mxu0
        %v1300 = vadd.f32 0.0, %v1299
        %v1301 = vpop.f32.mrb[0].mxu0
        %1302 = vdwg.mxu0
        %v1303 = vadd.f32 %v794, %v1295
        %v1304 = vadd.f32 %v795, %v1300
        %s1305 = scalar_lea.vmem %s1, 64
        %v1306 = vld [vmem:[%s1305] sm:$0xff]
        %v1307 = vld [vmem:[%s1305 + $0x8] sm:$0xff]
        %v1308 = vld [vmem:[%s1305 + $0x10] sm:$0xff]
        %v1309 = vld [vmem:[%s1305 + $0x18] sm:$0xff]
        %s1310 = scalar_lea.vmem %s2, 64
        %v1311 = vld [vmem:[%s1310] sm:$0xff]
        %v1312 = vld [vmem:[%s1310 + $0x8] sm:$0xff]
        %v1313 = vld [vmem:[%s1310 + $0x10] sm:$0xff]
        %v1314 = vld [vmem:[%s1310 + $0x18] sm:$0xff]
        %s1315 = scalar_lea.vmem %s3, 64
        %v1316 = vld [vmem:[%s1315] sm:$0xff]
        %v1317 = vld [vmem:[%s1315 + $0x8] sm:$0xff]
        %v1318 = vld [vmem:[%s1315 + $0x10] sm:$0xff]
        %v1319 = vld [vmem:[%s1315 + $0x18] sm:$0xff]
        %s1320 = scalar_lea.vmem %s5, 256
        %v1321 = vld [vmem:[%s1320] sm:$0xff]
        %v1322 = vld [vmem:[%s1320 + $0x8] sm:$0xff]
        %v1323 = vld [vmem:[%s1320 + $0x10] sm:$0xff]
        %v1324 = vld [vmem:[%s1320 + $0x18] sm:$0xff]
        %v1325 = vld [vmem:[%s1320 + $0x20] sm:$0xff]
        %v1326 = vld [vmem:[%s1320 + $0x28] sm:$0xff]
        %v1327 = vld [vmem:[%s1320 + $0x30] sm:$0xff]
        %v1328 = vld [vmem:[%s1320 + $0x38] sm:$0xff]
        %v1329 = vld [vmem:[%s1320 + $0x40] sm:$0xff]
        %v1330 = vld [vmem:[%s1320 + $0x48] sm:$0xff]
        %v1331 = vld [vmem:[%s1320 + $0x50] sm:$0xff]
        %v1332 = vld [vmem:[%s1320 + $0x58] sm:$0xff]
        %v1333 = vld [vmem:[%s1320 + $0x60] sm:$0xff]
        %v1334 = vld [vmem:[%s1320 + $0x68] sm:$0xff]
        %v1335 = vld [vmem:[%s1320 + $0x70] sm:$0xff]
        %v1336 = vld [vmem:[%s1320 + $0x78] sm:$0xff]
        %1337 = vmatprep.subr.mxu0 0.0
        %1338 = vmatpush1.xpose.msra.mxu0 %v1306
        %1339 = vmatprep.subr.mxu0 0.0
        %1340 = vmatpush1.xpose.msra.mxu0 %v1307
        %1341 = vmatprep.subr.mxu0 0.0
        %1342 = vmatpush1.xpose.msra.mxu0 %v1308
        %1343 = vmatprep.subr.mxu0 0.0
        %1344 = vmatpush1.xpose.msra.mxu0 %v1309
        %1345 = vmatprep.subr.mxu0 0.0
        %1346 = vmatpush1.xpose.msra.mxu0 0.0
        %1347 = vmatprep.subr.mxu0 0.0
        %1348 = vmatpush1.xpose.msra.mxu0 0.0
        %1349 = vmatprep.subr.mxu0 0.0
        %1350 = vmatpush1.xpose.msra.mxu0 0.0
        %1351 = vmatprep.subr.mxu0 0.0
        %1352 = vmatpush1.xpose.msra.mxu0 0.0
        %1353 = vmatprep.subr.mxu0 0.0
        %1354 = vmatpush1.xpose.msra.mxu0 0.0
        %1355 = vmatprep.subr.mxu0 0.0
        %1356 = vmatpush1.xpose.msra.mxu0 0.0
        %1357 = vmatprep.subr.mxu0 0.0
        %1358 = vmatpush1.xpose.msra.mxu0 0.0
        %1359 = vmatprep.subr.mxu0 0.0
        %1360 = vmatpush1.xpose.msra.mxu0 0.0
        %1361 = vmatprep.subr.mxu0 0.0
        %1362 = vmatpush1.xpose.msra.mxu0 0.0
        %1363 = vmatprep.subr.mxu0 0.0
        %1364 = vmatpush1.xpose.msra.mxu0 0.0
        %1365 = vmatprep.subr.mxu0 0.0
        %1366 = vmatpush1.xpose.msra.mxu0 0.0
        %1367 = vmatprep.subr.mxu0 0.0
        %1368 = vmatpush1.xpose.msra.mxu0 0.0
        %1369 = vmatprep.subr.mxu0 0.0
        %1370 = vmatpush1.xpose.msra.mxu0 0.0
        %1371 = vmatprep.subr.mxu0 0.0
        %1372 = vmatpush1.xpose.msra.mxu0 0.0
        %1373 = vmatprep.subr.mxu0 0.0
        %1374 = vmatpush1.xpose.msra.mxu0 0.0
        %1375 = vmatprep.subr.mxu0 0.0
        %1376 = vmatpush1.xpose.msra.mxu0 0.0
        %1377 = vmatprep.subr.mxu0 0.0
        %1378 = vmatpush1.xpose.msra.mxu0 0.0
        %1379 = vmatprep.subr.mxu0 0.0
        %1380 = vmatpush1.xpose.msra.mxu0 0.0
        %1381 = vmatprep.subr.mxu0 0.0
        %1382 = vmatpush1.xpose.msra.mxu0 0.0
        %1383 = vmatprep.subr.mxu0 0.0
        %1384 = vmatpush1.xpose.msra.mxu0 0.0
        %1385 = vmatprep.subr.mxu0 0.0
        %1386 = vmatpush1.xpose.msra.mxu0 0.0
        %1387 = vmatprep.subr.mxu0 0.0
        %1388 = vmatpush1.xpose.msra.mxu0 0.0
        %1389 = vmatprep.subr.mxu0 0.0
        %1390 = vmatpush1.xpose.msra.mxu0 0.0
        %1391 = vmatprep.subr.mxu0 0.0
        %1392 = vmatpush1.xpose.msra.mxu0 0.0
        %1393 = vmatprep.subr.mxu0 0.0
        %1394 = vmatpush1.xpose.msra.mxu0 0.0
        %1395 = vmatprep.subr.mxu0 0.0
        %1396 = vmatpush1.xpose.msra.mxu0 0.0
        %1397 = vmatprep.subr.mxu0 0.0
        %1398 = vmatpush1.xpose.msra.mxu0 0.0
        %1399 = vmatprep.subr.mxu0 0.0
        %1400 = vmatpush1.xpose.msra.mxu0 0.0
        %1401 = vmatprep.mubr.f32.mxu0 0.0
        %1402 = vmatmul.mubr.f32.gmra.mrb[0].mxu0 %v278
        %v1403 = vpop.f32.mrb[0].mxu0
        %v1404 = vadd.f32 0.0, %v1403
        %v1405 = vpop.f32.mrb[0].mxu0
        %1406 = vmatprep.mubr.f32.mxu0 0.0
        %1407 = vmatmul.mubr.f32.gmra.mrb[0].mxu0 %v279
        %v1408 = vpop.f32.mrb[0].mxu0
        %v1409 = vadd.f32 0.0, %v1408
        %v1410 = vpop.f32.mrb[0].mxu0
        %1411 = vdwg.mxu0
        %1412 = vmatprep.subr.mxu0 0.0
        %1413 = vmatpush1.xpose.msra.mxu0 %v1311
        %1414 = vmatprep.subr.mxu0 0.0
        %1415 = vmatpush1.xpose.msra.mxu0 %v1312
        %1416 = vmatprep.subr.mxu0 0.0
        %1417 = vmatpush1.xpose.msra.mxu0 %v1313
        %1418 = vmatprep.subr.mxu0 0.0
        %1419 = vmatpush1.xpose.msra.mxu0 %v1314
        %1420 = vmatprep.subr.mxu0 0.0
        %1421 = vmatpush1.xpose.msra.mxu0 0.0
        %1422 = vmatprep.subr.mxu0 0.0
        %1423 = vmatpush1.xpose.msra.mxu0 0.0
        %1424 = vmatprep.subr.mxu0 0.0
        %1425 = vmatpush1.xpose.msra.mxu0 0.0
        %1426 = vmatprep.subr.mxu0 0.0
        %1427 = vmatpush1.xpose.msra.mxu0 0.0
        %1428 = vmatprep.subr.mxu0 0.0
        %1429 = vmatpush1.xpose.msra.mxu0 0.0
        %1430 = vmatprep.subr.mxu0 0.0
        %1431 = vmatpush1.xpose.msra.mxu0 0.0
        %1432 = vmatprep.subr.mxu0 0.0
        %1433 = vmatpush1.xpose.msra.mxu0 0.0
        %1434 = vmatprep.subr.mxu0 0.0
        %1435 = vmatpush1.xpose.msra.mxu0 0.0
        %1436 = vmatprep.subr.mxu0 0.0
        %1437 = vmatpush1.xpose.msra.mxu0 0.0
        %1438 = vmatprep.subr.mxu0 0.0
        %1439 = vmatpush1.xpose.msra.mxu0 0.0
        %1440 = vmatprep.subr.mxu0 0.0
        %1441 = vmatpush1.xpose.msra.mxu0 0.0
        %1442 = vmatprep.subr.mxu0 0.0
        %1443 = vmatpush1.xpose.msra.mxu0 0.0
        %1444 = vmatprep.subr.mxu0 0.0
        %1445 = vmatpush1.xpose.msra.mxu0 0.0
        %1446 = vmatprep.subr.mxu0 0.0
        %1447 = vmatpush1.xpose.msra.mxu0 0.0
        %1448 = vmatprep.subr.mxu0 0.0
        %1449 = vmatpush1.xpose.msra.mxu0 0.0
        %1450 = vmatprep.subr.mxu0 0.0
        %1451 = vmatpush1.xpose.msra.mxu0 0.0
        %1452 = vmatprep.subr.mxu0 0.0
        %1453 = vmatpush1.xpose.msra.mxu0 0.0
        %1454 = vmatprep.subr.mxu0 0.0
        %1455 = vmatpush1.xpose.msra.mxu0 0.0
        %1456 = vmatprep.subr.mxu0 0.0
        %1457 = vmatpush1.xpose.msra.mxu0 0.0
        %1458 = vmatprep.subr.mxu0 0.0
        %1459 = vmatpush1.xpose.msra.mxu0 0.0
        %1460 = vmatprep.subr.mxu0 0.0
        %1461 = vmatpush1.xpose.msra.mxu0 0.0
        %1462 = vmatprep.subr.mxu0 0.0
        %1463 = vmatpush1.xpose.msra.mxu0 0.0
        %1464 = vmatprep.subr.mxu0 0.0
        %1465 = vmatpush1.xpose.msra.mxu0 0.0
        %1466 = vmatprep.subr.mxu0 0.0
        %1467 = vmatpush1.xpose.msra.mxu0 0.0
        %1468 = vmatprep.subr.mxu0 0.0
        %1469 = vmatpush1.xpose.msra.mxu0 0.0
        %1470 = vmatprep.subr.mxu0 0.0
        %1471 = vmatpush1.xpose.msra.mxu0 0.0
        %1472 = vmatprep.subr.mxu0 0.0
        %1473 = vmatpush1.xpose.msra.mxu0 0.0
        %1474 = vmatprep.subr.mxu0 0.0
        %1475 = vmatpush1.xpose.msra.mxu0 0.0
        %1476 = vmatprep.mubr.f32.mxu0 0.0
        %1477 = vmatmul.mubr.f32.gmra.mrb[0].mxu0 %v278
        %v1478 = vpop.f32.mrb[0].mxu0
        %v1479 = vadd.f32 0.0, %v1478
        %v1480 = vpop.f32.mrb[0].mxu0
        %1481 = vmatprep.mubr.f32.mxu0 0.0
        %1482 = vmatmul.mubr.f32.gmra.mrb[0].mxu0 %v279
        %v1483 = vpop.f32.mrb[0].mxu0
        %v1484 = vadd.f32 0.0, %v1483
        %v1485 = vpop.f32.mrb[0].mxu0
        %1486 = vdwg.mxu0
        %1487 = vmatprep.subr.mxu0 0.0
        %1488 = vmatpush1.xpose.msra.mxu0 %v1316
        %1489 = vmatprep.subr.mxu0 0.0
        %1490 = vmatpush1.xpose.msra.mxu0 %v1317
        %1491 = vmatprep.subr.mxu0 0.0
        %1492 = vmatpush1.xpose.msra.mxu0 %v1318
        %1493 = vmatprep.subr.mxu0 0.0
        %1494 = vmatpush1.xpose.msra.mxu0 %v1319
        %1495 = vmatprep.subr.mxu0 0.0
        %1496 = vmatpush1.xpose.msra.mxu0 0.0
        %1497 = vmatprep.subr.mxu0 0.0
        %1498 = vmatpush1.xpose.msra.mxu0 0.0
        %1499 = vmatprep.subr.mxu0 0.0
        %1500 = vmatpush1.xpose.msra.mxu0 0.0
        %1501 = vmatprep.subr.mxu0 0.0
        %1502 = vmatpush1.xpose.msra.mxu0 0.0
        %1503 = vmatprep.subr.mxu0 0.0
        %1504 = vmatpush1.xpose.msra.mxu0 0.0
        %1505 = vmatprep.subr.mxu0 0.0
        %1506 = vmatpush1.xpose.msra.mxu0 0.0
        %1507 = vmatprep.subr.mxu0 0.0
        %1508 = vmatpush1.xpose.msra.mxu0 0.0
        %1509 = vmatprep.subr.mxu0 0.0
        %1510 = vmatpush1.xpose.msra.mxu0 0.0
        %1511 = vmatprep.subr.mxu0 0.0
        %1512 = vmatpush1.xpose.msra.mxu0 0.0
        %1513 = vmatprep.subr.mxu0 0.0
        %1514 = vmatpush1.xpose.msra.mxu0 0.0
        %1515 = vmatprep.subr.mxu0 0.0
        %1516 = vmatpush1.xpose.msra.mxu0 0.0
        %1517 = vmatprep.subr.mxu0 0.0
        %1518 = vmatpush1.xpose.msra.mxu0 0.0
        %1519 = vmatprep.subr.mxu0 0.0
        %1520 = vmatpush1.xpose.msra.mxu0 0.0
        %1521 = vmatprep.subr.mxu0 0.0
        %1522 = vmatpush1.xpose.msra.mxu0 0.0
        %1523 = vmatprep.subr.mxu0 0.0
        %1524 = vmatpush1.xpose.msra.mxu0 0.0
        %1525 = vmatprep.subr.mxu0 0.0
        %1526 = vmatpush1.xpose.msra.mxu0 0.0
        %1527 = vmatprep.subr.mxu0 0.0
        %1528 = vmatpush1.xpose.msra.mxu0 0.0
        %1529 = vmatprep.subr.mxu0 0.0
        %1530 = vmatpush1.xpose.msra.mxu0 0.0
        %1531 = vmatprep.subr.mxu0 0.0
        %1532 = vmatpush1.xpose.msra.mxu0 0.0
        %1533 = vmatprep.subr.mxu0 0.0
        %1534 = vmatpush1.xpose.msra.mxu0 0.0
        %1535 = vmatprep.subr.mxu0 0.0
        %1536 = vmatpush1.xpose.msra.mxu0 0.0
        %1537 = vmatprep.subr.mxu0 0.0
        %1538 = vmatpush1.xpose.msra.mxu0 0.0
        %1539 = vmatprep.subr.mxu0 0.0
        %1540 = vmatpush1.xpose.msra.mxu0 0.0
        %1541 = vmatprep.subr.mxu0 0.0
        %1542 = vmatpush1.xpose.msra.mxu0 0.0
        %1543 = vmatprep.subr.mxu0 0.0
        %1544 = vmatpush1.xpose.msra.mxu0 0.0
        %1545 = vmatprep.subr.mxu0 0.0
        %1546 = vmatpush1.xpose.msra.mxu0 0.0
        %1547 = vmatprep.subr.mxu0 0.0
        %1548 = vmatpush1.xpose.msra.mxu0 0.0
        %1549 = vmatprep.subr.mxu0 0.0
        %1550 = vmatpush1.xpose.msra.mxu0 0.0
        %1551 = vmatprep.mubr.f32.mxu0 0.0
        %1552 = vmatmul.mubr.f32.gmra.mrb[0].mxu0 %v278
        %v1553 = vpop.f32.mrb[0].mxu0
        %v1554 = vadd.f32 0.0, %v1553
        %v1555 = vpop.f32.mrb[0].mxu0
        %1556 = vmatprep.mubr.f32.mxu0 0.0
        %1557 = vmatmul.mubr.f32.gmra.mrb[0].mxu0 %v279
        %v1558 = vpop.f32.mrb[0].mxu0
        %v1559 = vadd.f32 0.0, %v1558
        %v1560 = vpop.f32.mrb[0].mxu0
        %1561 = vdwg.mxu0
        %v1562 = vmul.f32 %v1404, 0.17677669
        %v1563 = vmul.f32 %v1409, 0.17677669
        %v1564 = vpack.c.bf16 %v1563, %v1562
        %v1565 = vpack.c.bf16 %v1484, %v1479
        %v1566 = vpack.c.bf16 %v1559, %v1554
        %v1568 = vsel %vm547, %v1564, 0
        %v1571 = vsel %vm547, %v1565, 0
        %1573 = vmatprep.subr.bf16.mxu0 0
        %1574 = vmatpush1.bf16.xpose.msra.mxu0 %v1571
        %1575 = vmatprep.subr.bf16.mxu0 0
        %1576 = vmatpush1.bf16.xpose.msra.mxu0 0
        %1577 = vmatprep.subr.bf16.mxu0 0
        %1578 = vmatpush1.bf16.xpose.msra.mxu0 0
        %1579 = vmatprep.subr.bf16.mxu0 0
        %1580 = vmatpush1.bf16.xpose.msra.mxu0 0
        %1581 = vmatprep.subr.bf16.mxu0 0
        %1582 = vmatpush1.bf16.xpose.msra.mxu0 0
        %1583 = vmatprep.subr.bf16.mxu0 0
        %1584 = vmatpush1.bf16.xpose.msra.mxu0 0
        %1585 = vmatprep.subr.bf16.mxu0 0
        %1586 = vmatpush1.bf16.xpose.msra.mxu0 0
        %1587 = vmatprep.subr.bf16.mxu0 0
        %1588 = vmatpush1.bf16.xpose.msra.mxu0 0
        %1589 = vmatprep.subr.bf16.mxu0 0
        %1590 = vmatpush1.bf16.xpose.msra.mxu0 0
        %1591 = vmatprep.subr.bf16.mxu0 0
        %1592 = vmatpush1.bf16.xpose.msra.mxu0 0
        %1593 = vmatprep.subr.bf16.mxu0 0
        %1594 = vmatpush1.bf16.xpose.msra.mxu0 0
        %1595 = vmatprep.subr.bf16.mxu0 0
        %1596 = vmatpush1.bf16.xpose.msra.mxu0 0
        %1597 = vmatprep.subr.bf16.mxu0 0
        %1598 = vmatpush1.bf16.xpose.msra.mxu0 0
        %1599 = vmatprep.subr.bf16.mxu0 0
        %1600 = vmatpush1.bf16.xpose.msra.mxu0 0
        %1601 = vmatprep.subr.bf16.mxu0 0
        %1602 = vmatpush1.bf16.xpose.msra.mxu0 0
        %1603 = vmatprep.subr.bf16.mxu0 0
        %1604 = vmatpush1.bf16.xpose.msra.mxu0 0
        %1605 = vmatprep.mubr.bf16.mxu0 0
        %1606 = vmatmul.mubr.bf16.gmra.mrb[0].mxu0 %v1568
        %v1607 = vpop.f32.mrb[0].mxu0
        %v1608 = vadd.f32 0.0, %v1607
        %v1609 = vpop.f32.mrb[0].mxu0
        %v1610 = vpop.f32.mrb[0].mxu0
        %v1611 = vadd.f32 0.0, %v1610
        %v1612 = vpop.f32.mrb[0].mxu0
        %1613 = vdwg.mxu0
        %v1614 = vsel %vm595, %v1608, -inf
        %1615 = vmax.xlane.f32.xlu0 %v1614
        %v1616 = vpop.xlane.xlu0 %1615
        %v1617 = vsel %vm595, %v1611, -inf
        %1618 = vmax.xlane.f32.xlu0 %v1617
        %v1619 = vpop.xlane.xlu0 %1618
        %v1620 = vsub.f32 %v1608, %v1616
        %v1621 = vsub.f32 %v1611, %v1619
        %v1622 = vmul.f32 %v1620, 1.442695
        %v1623 = vpow.pop %v1622
        %v1624 = vmul.f32 %v1621, 1.442695
        %v1625 = vpow.pop %v1624
        %v1626 = vsel %vm595, %v1623, 0.0
        %1627 = vadd.xlane.f32.xlu0 %v1626
        %v1628 = vpop.xlane.xlu0 %1627
        %v1629 = vsel %vm595, %v1625, 0.0
        %1630 = vadd.xlane.f32.xlu0 %v1629
        %v1631 = vpop.xlane.xlu0 %1630
        %v1632 = vrcp.pop %v1628
        %v1633 = vrcp.pop %v1631
        %v1634 = vmul.f32 %v1623, %v1632
        %v1635 = vmul.f32 %v1625, %v1633
        %v1636 = vadd.f32 %v1634, %v280
        %v1637 = vadd.f32 %v1635, %v281
        %v1638 = vpack.c.bf16 %v1637, %v1636
        %v1640 = vsel %vm595, %v1638, 0
        %1642 = vmatprep.subr.bf16.mxu0 0
        %1643 = vmatpush1.bf16.msra.mxu0 %v1566
        %1644 = vmatprep.subr.bf16.mxu0 0
        %1645 = vmatpush1.bf16.msra.mxu0 0
        %1646 = vmatprep.subr.bf16.mxu0 0
        %1647 = vmatpush1.bf16.msra.mxu0 0
        %1648 = vmatprep.subr.bf16.mxu0 0
        %1649 = vmatpush1.bf16.msra.mxu0 0
        %1650 = vmatprep.subr.bf16.mxu0 0
        %1651 = vmatpush1.bf16.msra.mxu0 0
        %1652 = vmatprep.subr.bf16.mxu0 0
        %1653 = vmatpush1.bf16.msra.mxu0 0
        %1654 = vmatprep.subr.bf16.mxu0 0
        %1655 = vmatpush1.bf16.msra.mxu0 0
        %1656 = vmatprep.subr.bf16.mxu0 0
        %1657 = vmatpush1.bf16.msra.mxu0 0
        %1658 = vmatprep.subr.bf16.mxu0 0
        %1659 = vmatpush1.bf16.msra.mxu0 0
        %1660 = vmatprep.subr.bf16.mxu0 0
        %1661 = vmatpush1.bf16.msra.mxu0 0
        %1662 = vmatprep.subr.bf16.mxu0 0
        %1663 = vmatpush1.bf16.msra.mxu0 0
        %1664 = vmatprep.subr.bf16.mxu0 0
        %1665 = vmatpush1.bf16.msra.mxu0 0
        %1666 = vmatprep.subr.bf16.mxu0 0
        %1667 = vmatpush1.bf16.msra.mxu0 0
        %1668 = vmatprep.subr.bf16.mxu0 0
        %1669 = vmatpush1.bf16.msra.mxu0 0
        %1670 = vmatprep.subr.bf16.mxu0 0
        %1671 = vmatpush1.bf16.msra.mxu0 0
        %1672 = vmatprep.subr.bf16.mxu0 0
        %1673 = vmatpush1.bf16.msra.mxu0 0
        %1674 = vmatprep.mubr.bf16.mxu0 0
        %1675 = vmatmul.mubr.bf16.gmra.mrb[0].mxu0 %v1640
        %v1676 = vpop.f32.mrb[0].mxu0
        %v1677 = vadd.f32 0.0, %v1676
        %v1678 = vpop.f32.mrb[0].mxu0
        %v1679 = vpop.f32.mrb[0].mxu0
        %v1680 = vadd.f32 0.0, %v1679
        %v1681 = vpop.f32.mrb[0].mxu0
        %1682 = vdwg.mxu0
        %v1684 = vsel %vm547, %v1677, 0
        %v1687 = vsel %vm547, %v1680, 0
        %v1690 = vsel %vm547, %v1321, 0
        %v1693 = vsel %vm547, %v1322, 0
        %v1696 = vsel %vm547, %v1323, 0
        %v1699 = vsel %vm547, %v1324, 0
        %v1702 = vsel %vm547, %v1325, 0
        %v1705 = vsel %vm547, %v1326, 0
        %v1708 = vsel %vm547, %v1327, 0
        %v1711 = vsel %vm547, %v1328, 0
        %v1714 = vsel %vm547, %v1329, 0
        %v1717 = vsel %vm547, %v1330, 0
        %v1720 = vsel %vm547, %v1331, 0
        %v1723 = vsel %vm547, %v1332, 0
        %v1726 = vsel %vm547, %v1333, 0
        %v1729 = vsel %vm547, %v1334, 0
        %v1732 = vsel %vm547, %v1335, 0
        %v1735 = vsel %vm547, %v1336, 0
        %1737 = vmatprep.subr.mxu0 0.0
        %1738 = vmatpush1.xpose.msra.mxu0 %v1690
        %1739 = vmatprep.subr.mxu0 0.0
        %1740 = vmatpush1.xpose.msra.mxu0 %v1693
        %1741 = vmatprep.subr.mxu0 0.0
        %1742 = vmatpush1.xpose.msra.mxu0 %v1696
        %1743 = vmatprep.subr.mxu0 0.0
        %1744 = vmatpush1.xpose.msra.mxu0 %v1699
        %1745 = vmatprep.subr.mxu0 0.0
        %1746 = vmatpush1.xpose.msra.mxu0 %v1702
        %1747 = vmatprep.subr.mxu0 0.0
        %1748 = vmatpush1.xpose.msra.mxu0 %v1705
        %1749 = vmatprep.subr.mxu0 0.0
        %1750 = vmatpush1.xpose.msra.mxu0 %v1708
        %1751 = vmatprep.subr.mxu0 0.0
        %1752 = vmatpush1.xpose.msra.mxu0 %v1711
        %1753 = vmatprep.subr.mxu0 0.0
        %1754 = vmatpush1.xpose.msra.mxu0 %v1714
        %1755 = vmatprep.subr.mxu0 0.0
        %1756 = vmatpush1.xpose.msra.mxu0 %v1717
        %1757 = vmatprep.subr.mxu0 0.0
        %1758 = vmatpush1.xpose.msra.mxu0 %v1720
        %1759 = vmatprep.subr.mxu0 0.0
        %1760 = vmatpush1.xpose.msra.mxu0 %v1723
        %1761 = vmatprep.subr.mxu0 0.0
        %1762 = vmatpush1.xpose.msra.mxu0 %v1726
        %1763 = vmatprep.subr.mxu0 0.0
        %1764 = vmatpush1.xpose.msra.mxu0 %v1729
        %1765 = vmatprep.subr.mxu0 0.0
        %1766 = vmatpush1.xpose.msra.mxu0 %v1732
        %1767 = vmatprep.subr.mxu0 0.0
        %1768 = vmatpush1.xpose.msra.mxu0 %v1735
        %1769 = vmatprep.subr.mxu0 0.0
        %1770 = vmatpush1.xpose.msra.mxu0 0.0
        %1771 = vmatprep.subr.mxu0 0.0
        %1772 = vmatpush1.xpose.msra.mxu0 0.0
        %1773 = vmatprep.subr.mxu0 0.0
        %1774 = vmatpush1.xpose.msra.mxu0 0.0
        %1775 = vmatprep.subr.mxu0 0.0
        %1776 = vmatpush1.xpose.msra.mxu0 0.0
        %1777 = vmatprep.subr.mxu0 0.0
        %1778 = vmatpush1.xpose.msra.mxu0 0.0
        %1779 = vmatprep.subr.mxu0 0.0
        %1780 = vmatpush1.xpose.msra.mxu0 0.0
        %1781 = vmatprep.subr.mxu0 0.0
        %1782 = vmatpush1.xpose.msra.mxu0 0.0
        %1783 = vmatprep.subr.mxu0 0.0
        %1784 = vmatpush1.xpose.msra.mxu0 0.0
        %1785 = vmatprep.subr.mxu0 0.0
        %1786 = vmatpush1.xpose.msra.mxu0 0.0
        %1787 = vmatprep.subr.mxu0 0.0
        %1788 = vmatpush1.xpose.msra.mxu0 0.0
        %1789 = vmatprep.subr.mxu0 0.0
        %1790 = vmatpush1.xpose.msra.mxu0 0.0
        %1791 = vmatprep.subr.mxu0 0.0
        %1792 = vmatpush1.xpose.msra.mxu0 0.0
        %1793 = vmatprep.subr.mxu0 0.0
        %1794 = vmatpush1.xpose.msra.mxu0 0.0
        %1795 = vmatprep.subr.mxu0 0.0
        %1796 = vmatpush1.xpose.msra.mxu0 0.0
        %1797 = vmatprep.subr.mxu0 0.0
        %1798 = vmatpush1.xpose.msra.mxu0 0.0
        %1799 = vmatprep.subr.mxu0 0.0
        %1800 = vmatpush1.xpose.msra.mxu0 0.0
        %1801 = vmatprep.mubr.f32.mxu0 0.0
        %1802 = vmatmul.mubr.f32.gmra.mrb[0].mxu0 %v1684
        %v1803 = vpop.f32.mrb[0].mxu0
        %v1804 = vadd.f32 0.0, %v1803
        %v1805 = vpop.f32.mrb[0].mxu0
        %1806 = vmatprep.mubr.f32.mxu0 0.0
        %1807 = vmatmul.mubr.f32.gmra.mrb[0].mxu0 %v1687
        %v1808 = vpop.f32.mrb[0].mxu0
        %v1809 = vadd.f32 0.0, %v1808
        %v1810 = vpop.f32.mrb[0].mxu0
        %1811 = vdwg.mxu0
        %v1812 = vadd.f32 %v1303, %v1804
        %v1813 = vadd.f32 %v1304, %v1809
        %s1814 = scalar_lea.vmem %s1, 96
        %v1815 = vld [vmem:[%s1814] sm:$0xff]
        %v1816 = vld [vmem:[%s1814 + $0x8] sm:$0xff]
        %v1817 = vld [vmem:[%s1814 + $0x10] sm:$0xff]
        %v1818 = vld [vmem:[%s1814 + $0x18] sm:$0xff]
        %s1819 = scalar_lea.vmem %s2, 96
        %v1820 = vld [vmem:[%s1819] sm:$0xff]
        %v1821 = vld [vmem:[%s1819 + $0x8] sm:$0xff]
        %v1822 = vld [vmem:[%s1819 + $0x10] sm:$0xff]
        %v1823 = vld [vmem:[%s1819 + $0x18] sm:$0xff]
        %s1824 = scalar_lea.vmem %s3, 96
        %v1825 = vld [vmem:[%s1824] sm:$0xff]
        %v1826 = vld [vmem:[%s1824 + $0x8] sm:$0xff]
        %v1827 = vld [vmem:[%s1824 + $0x10] sm:$0xff]
        %v1828 = vld [vmem:[%s1824 + $0x18] sm:$0xff]
        %s1829 = scalar_lea.vmem %s5, 384
        %v1830 = vld [vmem:[%s1829] sm:$0xff]
        %v1831 = vld [vmem:[%s1829 + $0x8] sm:$0xff]
        %v1832 = vld [vmem:[%s1829 + $0x10] sm:$0xff]
        %v1833 = vld [vmem:[%s1829 + $0x18] sm:$0xff]
        %v1834 = vld [vmem:[%s1829 + $0x20] sm:$0xff]
        %v1835 = vld [vmem:[%s1829 + $0x28] sm:$0xff]
        %v1836 = vld [vmem:[%s1829 + $0x30] sm:$0xff]
        %v1837 = vld [vmem:[%s1829 + $0x38] sm:$0xff]
        %v1838 = vld [vmem:[%s1829 + $0x40] sm:$0xff]
        %v1839 = vld [vmem:[%s1829 + $0x48] sm:$0xff]
        %v1840 = vld [vmem:[%s1829 + $0x50] sm:$0xff]
        %v1841 = vld [vmem:[%s1829 + $0x58] sm:$0xff]
        %v1842 = vld [vmem:[%s1829 + $0x60] sm:$0xff]
        %v1843 = vld [vmem:[%s1829 + $0x68] sm:$0xff]
        %v1844 = vld [vmem:[%s1829 + $0x70] sm:$0xff]
        %v1845 = vld [vmem:[%s1829 + $0x78] sm:$0xff]
        %1846 = vmatprep.subr.mxu0 0.0
        %1847 = vmatpush1.xpose.msra.mxu0 %v1815
        %1848 = vmatprep.subr.mxu0 0.0
        %1849 = vmatpush1.xpose.msra.mxu0 %v1816
        %1850 = vmatprep.subr.mxu0 0.0
        %1851 = vmatpush1.xpose.msra.mxu0 %v1817
        %1852 = vmatprep.subr.mxu0 0.0
        %1853 = vmatpush1.xpose.msra.mxu0 %v1818
        %1854 = vmatprep.subr.mxu0 0.0
        %1855 = vmatpush1.xpose.msra.mxu0 0.0
        %1856 = vmatprep.subr.mxu0 0.0
        %1857 = vmatpush1.xpose.msra.mxu0 0.0
        %1858 = vmatprep.subr.mxu0 0.0
        %1859 = vmatpush1.xpose.msra.mxu0 0.0
        %1860 = vmatprep.subr.mxu0 0.0
        %1861 = vmatpush1.xpose.msra.mxu0 0.0
        %1862 = vmatprep.subr.mxu0 0.0
        %1863 = vmatpush1.xpose.msra.mxu0 0.0
        %1864 = vmatprep.subr.mxu0 0.0
        %1865 = vmatpush1.xpose.msra.mxu0 0.0
        %1866 = vmatprep.subr.mxu0 0.0
        %1867 = vmatpush1.xpose.msra.mxu0 0.0
        %1868 = vmatprep.subr.mxu0 0.0
        %1869 = vmatpush1.xpose.msra.mxu0 0.0
        %1870 = vmatprep.subr.mxu0 0.0
        %1871 = vmatpush1.xpose.msra.mxu0 0.0
        %1872 = vmatprep.subr.mxu0 0.0
        %1873 = vmatpush1.xpose.msra.mxu0 0.0
        %1874 = vmatprep.subr.mxu0 0.0
        %1875 = vmatpush1.xpose.msra.mxu0 0.0
        %1876 = vmatprep.subr.mxu0 0.0
        %1877 = vmatpush1.xpose.msra.mxu0 0.0
        %1878 = vmatprep.subr.mxu0 0.0
        %1879 = vmatpush1.xpose.msra.mxu0 0.0
        %1880 = vmatprep.subr.mxu0 0.0
        %1881 = vmatpush1.xpose.msra.mxu0 0.0
        %1882 = vmatprep.subr.mxu0 0.0
        %1883 = vmatpush1.xpose.msra.mxu0 0.0
        %1884 = vmatprep.subr.mxu0 0.0
        %1885 = vmatpush1.xpose.msra.mxu0 0.0
        %1886 = vmatprep.subr.mxu0 0.0
        %1887 = vmatpush1.xpose.msra.mxu0 0.0
        %1888 = vmatprep.subr.mxu0 0.0
        %1889 = vmatpush1.xpose.msra.mxu0 0.0
        %1890 = vmatprep.subr.mxu0 0.0
        %1891 = vmatpush1.xpose.msra.mxu0 0.0
        %1892 = vmatprep.subr.mxu0 0.0
        %1893 = vmatpush1.xpose.msra.mxu0 0.0
        %1894 = vmatprep.subr.mxu0 0.0
        %1895 = vmatpush1.xpose.msra.mxu0 0.0
        %1896 = vmatprep.subr.mxu0 0.0
        %1897 = vmatpush1.xpose.msra.mxu0 0.0
        %1898 = vmatprep.subr.mxu0 0.0
        %1899 = vmatpush1.xpose.msra.mxu0 0.0
        %1900 = vmatprep.subr.mxu0 0.0
        %1901 = vmatpush1.xpose.msra.mxu0 0.0
        %1902 = vmatprep.subr.mxu0 0.0
        %1903 = vmatpush1.xpose.msra.mxu0 0.0
        %1904 = vmatprep.subr.mxu0 0.0
        %1905 = vmatpush1.xpose.msra.mxu0 0.0
        %1906 = vmatprep.subr.mxu0 0.0
        %1907 = vmatpush1.xpose.msra.mxu0 0.0
        %1908 = vmatprep.subr.mxu0 0.0
        %1909 = vmatpush1.xpose.msra.mxu0 0.0
        %1910 = vmatprep.mubr.f32.mxu0 0.0
        %1911 = vmatmul.mubr.f32.gmra.mrb[0].mxu0 %v278
        %v1912 = vpop.f32.mrb[0].mxu0
        %v1913 = vadd.f32 0.0, %v1912
        %v1914 = vpop.f32.mrb[0].mxu0
        %1915 = vmatprep.mubr.f32.mxu0 0.0
        %1916 = vmatmul.mubr.f32.gmra.mrb[0].mxu0 %v279
        %v1917 = vpop.f32.mrb[0].mxu0
        %v1918 = vadd.f32 0.0, %v1917
        %v1919 = vpop.f32.mrb[0].mxu0
        %1920 = vdwg.mxu0
        %1921 = vmatprep.subr.mxu0 0.0
        %1922 = vmatpush1.xpose.msra.mxu0 %v1820
        %1923 = vmatprep.subr.mxu0 0.0
        %1924 = vmatpush1.xpose.msra.mxu0 %v1821
        %1925 = vmatprep.subr.mxu0 0.0
        %1926 = vmatpush1.xpose.msra.mxu0 %v1822
        %1927 = vmatprep.subr.mxu0 0.0
        %1928 = vmatpush1.xpose.msra.mxu0 %v1823
        %1929 = vmatprep.subr.mxu0 0.0
        %1930 = vmatpush1.xpose.msra.mxu0 0.0
        %1931 = vmatprep.subr.mxu0 0.0
        %1932 = vmatpush1.xpose.msra.mxu0 0.0
        %1933 = vmatprep.subr.mxu0 0.0
        %1934 = vmatpush1.xpose.msra.mxu0 0.0
        %1935 = vmatprep.subr.mxu0 0.0
        %1936 = vmatpush1.xpose.msra.mxu0 0.0
        %1937 = vmatprep.subr.mxu0 0.0
        %1938 = vmatpush1.xpose.msra.mxu0 0.0
        %1939 = vmatprep.subr.mxu0 0.0
        %1940 = vmatpush1.xpose.msra.mxu0 0.0
        %1941 = vmatprep.subr.mxu0 0.0
        %1942 = vmatpush1.xpose.msra.mxu0 0.0
        %1943 = vmatprep.subr.mxu0 0.0
        %1944 = vmatpush1.xpose.msra.mxu0 0.0
        %1945 = vmatprep.subr.mxu0 0.0
        %1946 = vmatpush1.xpose.msra.mxu0 0.0
        %1947 = vmatprep.subr.mxu0 0.0
        %1948 = vmatpush1.xpose.msra.mxu0 0.0
        %1949 = vmatprep.subr.mxu0 0.0
        %1950 = vmatpush1.xpose.msra.mxu0 0.0
        %1951 = vmatprep.subr.mxu0 0.0
        %1952 = vmatpush1.xpose.msra.mxu0 0.0
        %1953 = vmatprep.subr.mxu0 0.0
        %1954 = vmatpush1.xpose.msra.mxu0 0.0
        %1955 = vmatprep.subr.mxu0 0.0
        %1956 = vmatpush1.xpose.msra.mxu0 0.0
        %1957 = vmatprep.subr.mxu0 0.0
        %1958 = vmatpush1.xpose.msra.mxu0 0.0
        %1959 = vmatprep.subr.mxu0 0.0
        %1960 = vmatpush1.xpose.msra.mxu0 0.0
        %1961 = vmatprep.subr.mxu0 0.0
        %1962 = vmatpush1.xpose.msra.mxu0 0.0
        %1963 = vmatprep.subr.mxu0 0.0
        %1964 = vmatpush1.xpose.msra.mxu0 0.0
        %1965 = vmatprep.subr.mxu0 0.0
        %1966 = vmatpush1.xpose.msra.mxu0 0.0
        %1967 = vmatprep.subr.mxu0 0.0
        %1968 = vmatpush1.xpose.msra.mxu0 0.0
        %1969 = vmatprep.subr.mxu0 0.0
        %1970 = vmatpush1.xpose.msra.mxu0 0.0
        %1971 = vmatprep.subr.mxu0 0.0
        %1972 = vmatpush1.xpose.msra.mxu0 0.0
        %1973 = vmatprep.subr.mxu0 0.0
        %1974 = vmatpush1.xpose.msra.mxu0 0.0
        %1975 = vmatprep.subr.mxu0 0.0
        %1976 = vmatpush1.xpose.msra.mxu0 0.0
        %1977 = vmatprep.subr.mxu0 0.0
        %1978 = vmatpush1.xpose.msra.mxu0 0.0
        %1979 = vmatprep.subr.mxu0 0.0
        %1980 = vmatpush1.xpose.msra.mxu0 0.0
        %1981 = vmatprep.subr.mxu0 0.0
        %1982 = vmatpush1.xpose.msra.mxu0 0.0
        %1983 = vmatprep.subr.mxu0 0.0
        %1984 = vmatpush1.xpose.msra.mxu0 0.0
        %1985 = vmatprep.mubr.f32.mxu0 0.0
        %1986 = vmatmul.mubr.f32.gmra.mrb[0].mxu0 %v278
        %v1987 = vpop.f32.mrb[0].mxu0
        %v1988 = vadd.f32 0.0, %v1987
        %v1989 = vpop.f32.mrb[0].mxu0
        %1990 = vmatprep.mubr.f32.mxu0 0.0
        %1991 = vmatmul.mubr.f32.gmra.mrb[0].mxu0 %v279
        %v1992 = vpop.f32.mrb[0].mxu0
        %v1993 = vadd.f32 0.0, %v1992
        %v1994 = vpop.f32.mrb[0].mxu0
        %1995 = vdwg.mxu0
        %1996 = vmatprep.subr.mxu0 0.0
        %1997 = vmatpush1.xpose.msra.mxu0 %v1825
        %1998 = vmatprep.subr.mxu0 0.0
        %1999 = vmatpush1.xpose.msra.mxu0 %v1826
        %2000 = vmatprep.subr.mxu0 0.0
        %2001 = vmatpush1.xpose.msra.mxu0 %v1827
        %2002 = vmatprep.subr.mxu0 0.0
        %2003 = vmatpush1.xpose.msra.mxu0 %v1828
        %2004 = vmatprep.subr.mxu0 0.0
        %2005 = vmatpush1.xpose.msra.mxu0 0.0
        %2006 = vmatprep.subr.mxu0 0.0
        %2007 = vmatpush1.xpose.msra.mxu0 0.0
        %2008 = vmatprep.subr.mxu0 0.0
        %2009 = vmatpush1.xpose.msra.mxu0 0.0
        %2010 = vmatprep.subr.mxu0 0.0
        %2011 = vmatpush1.xpose.msra.mxu0 0.0
        %2012 = vmatprep.subr.mxu0 0.0
        %2013 = vmatpush1.xpose.msra.mxu0 0.0
        %2014 = vmatprep.subr.mxu0 0.0
        %2015 = vmatpush1.xpose.msra.mxu0 0.0
        %2016 = vmatprep.subr.mxu0 0.0
        %2017 = vmatpush1.xpose.msra.mxu0 0.0
        %2018 = vmatprep.subr.mxu0 0.0
        %2019 = vmatpush1.xpose.msra.mxu0 0.0
        %2020 = vmatprep.subr.mxu0 0.0
        %2021 = vmatpush1.xpose.msra.mxu0 0.0
        %2022 = vmatprep.subr.mxu0 0.0
        %2023 = vmatpush1.xpose.msra.mxu0 0.0
        %2024 = vmatprep.subr.mxu0 0.0
        %2025 = vmatpush1.xpose.msra.mxu0 0.0
        %2026 = vmatprep.subr.mxu0 0.0
        %2027 = vmatpush1.xpose.msra.mxu0 0.0
        %2028 = vmatprep.subr.mxu0 0.0
        %2029 = vmatpush1.xpose.msra.mxu0 0.0
        %2030 = vmatprep.subr.mxu0 0.0
        %2031 = vmatpush1.xpose.msra.mxu0 0.0
        %2032 = vmatprep.subr.mxu0 0.0
        %2033 = vmatpush1.xpose.msra.mxu0 0.0
        %2034 = vmatprep.subr.mxu0 0.0
        %2035 = vmatpush1.xpose.msra.mxu0 0.0
        %2036 = vmatprep.subr.mxu0 0.0
        %2037 = vmatpush1.xpose.msra.mxu0 0.0
        %2038 = vmatprep.subr.mxu0 0.0
        %2039 = vmatpush1.xpose.msra.mxu0 0.0
        %2040 = vmatprep.subr.mxu0 0.0
        %2041 = vmatpush1.xpose.msra.mxu0 0.0
        %2042 = vmatprep.subr.mxu0 0.0
        %2043 = vmatpush1.xpose.msra.mxu0 0.0
        %2044 = vmatprep.subr.mxu0 0.0
        %2045 = vmatpush1.xpose.msra.mxu0 0.0
        %2046 = vmatprep.subr.mxu0 0.0
        %2047 = vmatpush1.xpose.msra.mxu0 0.0
        %2048 = vmatprep.subr.mxu0 0.0
        %2049 = vmatpush1.xpose.msra.mxu0 0.0
        %2050 = vmatprep.subr.mxu0 0.0
        %2051 = vmatpush1.xpose.msra.mxu0 0.0
        %2052 = vmatprep.subr.mxu0 0.0
        %2053 = vmatpush1.xpose.msra.mxu0 0.0
        %2054 = vmatprep.subr.mxu0 0.0
        %2055 = vmatpush1.xpose.msra.mxu0 0.0
        %2056 = vmatprep.subr.mxu0 0.0
        %2057 = vmatpush1.xpose.msra.mxu0 0.0
        %2058 = vmatprep.subr.mxu0 0.0
        %2059 = vmatpush1.xpose.msra.mxu0 0.0
        %2060 = vmatprep.mubr.f32.mxu0 0.0
        %2061 = vmatmul.mubr.f32.gmra.mrb[0].mxu0 %v278
        %v2062 = vpop.f32.mrb[0].mxu0
        %v2063 = vadd.f32 0.0, %v2062
        %v2064 = vpop.f32.mrb[0].mxu0
        %2065 = vmatprep.mubr.f32.mxu0 0.0
        %2066 = vmatmul.mubr.f32.gmra.mrb[0].mxu0 %v279
        %v2067 = vpop.f32.mrb[0].mxu0
        %v2068 = vadd.f32 0.0, %v2067
        %v2069 = vpop.f32.mrb[0].mxu0
        %2070 = vdwg.mxu0
        %v2071 = vmul.f32 %v1913, 0.17677669
        %v2072 = vmul.f32 %v1918, 0.17677669
        %v2073 = vpack.c.bf16 %v2072, %v2071
        %v2074 = vpack.c.bf16 %v1993, %v1988
        %v2075 = vpack.c.bf16 %v2068, %v2063
        %v2077 = vsel %vm547, %v2073, 0
        %v2080 = vsel %vm547, %v2074, 0
        %2082 = vmatprep.subr.bf16.mxu0 0
        %2083 = vmatpush1.bf16.xpose.msra.mxu0 %v2080
        %2084 = vmatprep.subr.bf16.mxu0 0
        %2085 = vmatpush1.bf16.xpose.msra.mxu0 0
        %2086 = vmatprep.subr.bf16.mxu0 0
        %2087 = vmatpush1.bf16.xpose.msra.mxu0 0
        %2088 = vmatprep.subr.bf16.mxu0 0
        %2089 = vmatpush1.bf16.xpose.msra.mxu0 0
        %2090 = vmatprep.subr.bf16.mxu0 0
        %2091 = vmatpush1.bf16.xpose.msra.mxu0 0
        %2092 = vmatprep.subr.bf16.mxu0 0
        %2093 = vmatpush1.bf16.xpose.msra.mxu0 0
        %2094 = vmatprep.subr.bf16.mxu0 0
        %2095 = vmatpush1.bf16.xpose.msra.mxu0 0
        %2096 = vmatprep.subr.bf16.mxu0 0
        %2097 = vmatpush1.bf16.xpose.msra.mxu0 0
        %2098 = vmatprep.subr.bf16.mxu0 0
        %2099 = vmatpush1.bf16.xpose.msra.mxu0 0
        %2100 = vmatprep.subr.bf16.mxu0 0
        %2101 = vmatpush1.bf16.xpose.msra.mxu0 0
        %2102 = vmatprep.subr.bf16.mxu0 0
        %2103 = vmatpush1.bf16.xpose.msra.mxu0 0
        %2104 = vmatprep.subr.bf16.mxu0 0
        %2105 = vmatpush1.bf16.xpose.msra.mxu0 0
        %2106 = vmatprep.subr.bf16.mxu0 0
        %2107 = vmatpush1.bf16.xpose.msra.mxu0 0
        %2108 = vmatprep.subr.bf16.mxu0 0
        %2109 = vmatpush1.bf16.xpose.msra.mxu0 0
        %2110 = vmatprep.subr.bf16.mxu0 0
        %2111 = vmatpush1.bf16.xpose.msra.mxu0 0
        %2112 = vmatprep.subr.bf16.mxu0 0
        %2113 = vmatpush1.bf16.xpose.msra.mxu0 0
        %2114 = vmatprep.mubr.bf16.mxu0 0
        %2115 = vmatmul.mubr.bf16.gmra.mrb[0].mxu0 %v2077
        %v2116 = vpop.f32.mrb[0].mxu0
        %v2117 = vadd.f32 0.0, %v2116
        %v2118 = vpop.f32.mrb[0].mxu0
        %v2119 = vpop.f32.mrb[0].mxu0
        %v2120 = vadd.f32 0.0, %v2119
        %v2121 = vpop.f32.mrb[0].mxu0
        %2122 = vdwg.mxu0
        %v2123 = vsel %vm595, %v2117, -inf
        %2124 = vmax.xlane.f32.xlu0 %v2123
        %v2125 = vpop.xlane.xlu0 %2124
        %v2126 = vsel %vm595, %v2120, -inf
        %2127 = vmax.xlane.f32.xlu0 %v2126
        %v2128 = vpop.xlane.xlu0 %2127
        %v2129 = vsub.f32 %v2117, %v2125
        %v2130 = vsub.f32 %v2120, %v2128
        %v2131 = vmul.f32 %v2129, 1.442695
        %v2132 = vpow.pop %v2131
        %v2133 = vmul.f32 %v2130, 1.442695
        %v2134 = vpow.pop %v2133
        %v2135 = vsel %vm595, %v2132, 0.0
        %2136 = vadd.xlane.f32.xlu0 %v2135
        %v2137 = vpop.xlane.xlu0 %2136
        %v2138 = vsel %vm595, %v2134, 0.0
        %2139 = vadd.xlane.f32.xlu0 %v2138
        %v2140 = vpop.xlane.xlu0 %2139
        %v2141 = vrcp.pop %v2137
        %v2142 = vrcp.pop %v2140
        %v2143 = vmul.f32 %v2132, %v2141
        %v2144 = vmul.f32 %v2134, %v2142
        %v2145 = vadd.f32 %v2143, %v280
        %v2146 = vadd.f32 %v2144, %v281
        %v2147 = vpack.c.bf16 %v2146, %v2145
        %v2149 = vsel %vm595, %v2147, 0
        %2151 = vmatprep.subr.bf16.mxu0 0
        %2152 = vmatpush1.bf16.msra.mxu0 %v2075
        %2153 = vmatprep.subr.bf16.mxu0 0
        %2154 = vmatpush1.bf16.msra.mxu0 0
        %2155 = vmatprep.subr.bf16.mxu0 0
        %2156 = vmatpush1.bf16.msra.mxu0 0
        %2157 = vmatprep.subr.bf16.mxu0 0
        %2158 = vmatpush1.bf16.msra.mxu0 0
        %2159 = vmatprep.subr.bf16.mxu0 0
        %2160 = vmatpush1.bf16.msra.mxu0 0
        %2161 = vmatprep.subr.bf16.mxu0 0
        %2162 = vmatpush1.bf16.msra.mxu0 0
        %2163 = vmatprep.subr.bf16.mxu0 0
        %2164 = vmatpush1.bf16.msra.mxu0 0
        %2165 = vmatprep.subr.bf16.mxu0 0
        %2166 = vmatpush1.bf16.msra.mxu0 0
        %2167 = vmatprep.subr.bf16.mxu0 0
        %2168 = vmatpush1.bf16.msra.mxu0 0
        %2169 = vmatprep.subr.bf16.mxu0 0
        %2170 = vmatpush1.bf16.msra.mxu0 0
        %2171 = vmatprep.subr.bf16.mxu0 0
        %2172 = vmatpush1.bf16.msra.mxu0 0
        %2173 = vmatprep.subr.bf16.mxu0 0
        %2174 = vmatpush1.bf16.msra.mxu0 0
        %2175 = vmatprep.subr.bf16.mxu0 0
        %2176 = vmatpush1.bf16.msra.mxu0 0
        %2177 = vmatprep.subr.bf16.mxu0 0
        %2178 = vmatpush1.bf16.msra.mxu0 0
        %2179 = vmatprep.subr.bf16.mxu0 0
        %2180 = vmatpush1.bf16.msra.mxu0 0
        %2181 = vmatprep.subr.bf16.mxu0 0
        %2182 = vmatpush1.bf16.msra.mxu0 0
        %2183 = vmatprep.mubr.bf16.mxu0 0
        %2184 = vmatmul.mubr.bf16.gmra.mrb[0].mxu0 %v2149
        %v2185 = vpop.f32.mrb[0].mxu0
        %v2186 = vadd.f32 0.0, %v2185
        %v2187 = vpop.f32.mrb[0].mxu0
        %v2188 = vpop.f32.mrb[0].mxu0
        %v2189 = vadd.f32 0.0, %v2188
        %v2190 = vpop.f32.mrb[0].mxu0
        %2191 = vdwg.mxu0
        %v2193 = vsel %vm547, %v2186, 0
        %v2196 = vsel %vm547, %v2189, 0
        %v2199 = vsel %vm547, %v1830, 0
        %v2202 = vsel %vm547, %v1831, 0
        %v2205 = vsel %vm547, %v1832, 0
        %v2208 = vsel %vm547, %v1833, 0
        %v2211 = vsel %vm547, %v1834, 0
        %v2214 = vsel %vm547, %v1835, 0
        %v2217 = vsel %vm547, %v1836, 0
        %v2220 = vsel %vm547, %v1837, 0
        %v2223 = vsel %vm547, %v1838, 0
        %v2226 = vsel %vm547, %v1839, 0
        %v2229 = vsel %vm547, %v1840, 0
        %v2232 = vsel %vm547, %v1841, 0
        %v2235 = vsel %vm547, %v1842, 0
        %v2238 = vsel %vm547, %v1843, 0
        %v2241 = vsel %vm547, %v1844, 0
        %v2244 = vsel %vm547, %v1845, 0
        %2246 = vmatprep.subr.mxu0 0.0
        %2247 = vmatpush1.xpose.msra.mxu0 %v2199
        %2248 = vmatprep.subr.mxu0 0.0
        %2249 = vmatpush1.xpose.msra.mxu0 %v2202
        %2250 = vmatprep.subr.mxu0 0.0
        %2251 = vmatpush1.xpose.msra.mxu0 %v2205
        %2252 = vmatprep.subr.mxu0 0.0
        %2253 = vmatpush1.xpose.msra.mxu0 %v2208
        %2254 = vmatprep.subr.mxu0 0.0
        %2255 = vmatpush1.xpose.msra.mxu0 %v2211
        %2256 = vmatprep.subr.mxu0 0.0
        %2257 = vmatpush1.xpose.msra.mxu0 %v2214
        %2258 = vmatprep.subr.mxu0 0.0
        %2259 = vmatpush1.xpose.msra.mxu0 %v2217
        %2260 = vmatprep.subr.mxu0 0.0
        %2261 = vmatpush1.xpose.msra.mxu0 %v2220
        %2262 = vmatprep.subr.mxu0 0.0
        %2263 = vmatpush1.xpose.msra.mxu0 %v2223
        %2264 = vmatprep.subr.mxu0 0.0
        %2265 = vmatpush1.xpose.msra.mxu0 %v2226
        %2266 = vmatprep.subr.mxu0 0.0
        %2267 = vmatpush1.xpose.msra.mxu0 %v2229
        %2268 = vmatprep.subr.mxu0 0.0
        %2269 = vmatpush1.xpose.msra.mxu0 %v2232
        %2270 = vmatprep.subr.mxu0 0.0
        %2271 = vmatpush1.xpose.msra.mxu0 %v2235
        %2272 = vmatprep.subr.mxu0 0.0
        %2273 = vmatpush1.xpose.msra.mxu0 %v2238
        %2274 = vmatprep.subr.mxu0 0.0
        %2275 = vmatpush1.xpose.msra.mxu0 %v2241
        %2276 = vmatprep.subr.mxu0 0.0
        %2277 = vmatpush1.xpose.msra.mxu0 %v2244
        %2278 = vmatprep.subr.mxu0 0.0
        %2279 = vmatpush1.xpose.msra.mxu0 0.0
        %2280 = vmatprep.subr.mxu0 0.0
        %2281 = vmatpush1.xpose.msra.mxu0 0.0
        %2282 = vmatprep.subr.mxu0 0.0
        %2283 = vmatpush1.xpose.msra.mxu0 0.0
        %2284 = vmatprep.subr.mxu0 0.0
        %2285 = vmatpush1.xpose.msra.mxu0 0.0
        %2286 = vmatprep.subr.mxu0 0.0
        %2287 = vmatpush1.xpose.msra.mxu0 0.0
        %2288 = vmatprep.subr.mxu0 0.0
        %2289 = vmatpush1.xpose.msra.mxu0 0.0
        %2290 = vmatprep.subr.mxu0 0.0
        %2291 = vmatpush1.xpose.msra.mxu0 0.0
        %2292 = vmatprep.subr.mxu0 0.0
        %2293 = vmatpush1.xpose.msra.mxu0 0.0
        %2294 = vmatprep.subr.mxu0 0.0
        %2295 = vmatpush1.xpose.msra.mxu0 0.0
        %2296 = vmatprep.subr.mxu0 0.0
        %2297 = vmatpush1.xpose.msra.mxu0 0.0
        %2298 = vmatprep.subr.mxu0 0.0
        %2299 = vmatpush1.xpose.msra.mxu0 0.0
        %2300 = vmatprep.subr.mxu0 0.0
        %2301 = vmatpush1.xpose.msra.mxu0 0.0
        %2302 = vmatprep.subr.mxu0 0.0
        %2303 = vmatpush1.xpose.msra.mxu0 0.0
        %2304 = vmatprep.subr.mxu0 0.0
        %2305 = vmatpush1.xpose.msra.mxu0 0.0
        %2306 = vmatprep.subr.mxu0 0.0
        %2307 = vmatpush1.xpose.msra.mxu0 0.0
        %2308 = vmatprep.subr.mxu0 0.0
        %2309 = vmatpush1.xpose.msra.mxu0 0.0
        %2310 = vmatprep.mubr.f32.mxu0 0.0
        %2311 = vmatmul.mubr.f32.gmra.mrb[0].mxu0 %v2193
        %v2312 = vpop.f32.mrb[0].mxu0
        %v2313 = vadd.f32 0.0, %v2312
        %v2314 = vpop.f32.mrb[0].mxu0
        %2315 = vmatprep.mubr.f32.mxu0 0.0
        %2316 = vmatmul.mubr.f32.gmra.mrb[0].mxu0 %v2196
        %v2317 = vpop.f32.mrb[0].mxu0
        %v2318 = vadd.f32 0.0, %v2317
        %v2319 = vpop.f32.mrb[0].mxu0
        %2320 = vdwg.mxu0
        %v2321 = vadd.f32 %v1812, %v2313
        %v2322 = vadd.f32 %v1813, %v2318
        %2323 = vst [vmem:[%s271] sm:$0xff] %v2321
        %2324 = vst [vmem:[%s271 + $0x8] sm:$0xff] %v2322
        %s2325 = sand.u32 %s181, 1
        %s2326 = scalar_lea.sflag [#allocation3], %s2325
        %s2327 = sand.u32 %s181, 1
        %s2328 = smul.addr %s2327, 16
        %s2329 = scalar_lea.vmem [#allocation2], %s2328
        // Predicated region
        $region49: #{tpu_custom_call.1} parent=47 // pred_check
          %p2330 = pneg %p191
        $region50: #{tpu_custom_call.1} parent=47 // pred_check_branch
          %2332 = sbr.rel (%p2330) target = $region52
        $region51: #{tpu_custom_call.1} parent=47 // pred_region
          %s2334 = ssub.s32 256, 256
          %2335 = vsyncadd %s2326, %s2334
          %s2336 = smul.addr %s21, 2
          %s2337 = smul.addr %s2336, 128
          %s2338 = scalar_lea.hbm %s7, %s2337
          %s2339 = sshll.u32 %s2329, 4
          %s2340 = int_to_ptr.vmem [resolvable:$true] %s2339
          %2345 = dma.vmem_to_hbm [thread:$0]  %s2340, 256, %s2338, %s2326, 128, 128, 8
        $region52: #{tpu_custom_call.1} parent=47 // pred_fallthru
          _
      $region48: #{tpu_custom_call.1} parent=5 // pred_fallthru
        _
      %p2346 = scmp.le.s32.totalorder 2, %s16
      // Predicated region
      $region53: #{tpu_custom_call.1} parent=5 // pred_check
        %p2347 = pneg %p2346
      $region54: #{tpu_custom_call.1} parent=5 // pred_check_branch
        %2349 = sbr.rel (%p2347) target = $region56
      $region55: #{tpu_custom_call.1} parent=5 // pred_region
        %s2350 = ssub.s32 %s16, 2
        // Predicated region
        $region57: #{tpu_custom_call.1} parent=55 // pred_check
          %p2351 = pneg %p197
        $region58: #{tpu_custom_call.1} parent=55 // pred_check_branch
          %2353 = sbr.rel (%p2351) target = $region60
        $region59: #{tpu_custom_call.1} parent=55 // pred_region
          %s2354 = sand.u32 %s182, 1
          %s2355 = scalar_lea.sflag [#allocation3], %s2354
          %s2356 = sand.u32 %s182, 1
          %s2357 = smul.addr %s2356, 16
          %s2358 = scalar_lea.vmem [#allocation2], %s2357
          %2359 = dma.done %s2355, 256
        $region60: #{tpu_custom_call.1} parent=55 // pred_fallthru
          _
      $region56: #{tpu_custom_call.1} parent=5 // pred_fallthru
        _
    $region6: #{tpu_custom_call.1} parent=1 // loop_footer
      %s20 = sadd.s32 1, %s16
    $region7: #{tpu_custom_call.1} parent=1 // loop_footer_branch
      %15 = sbr.rel target = $region3
    $region8: #{tpu_custom_call.1} parent=1 // loop_exit
      _
    %2360 = vsyncpa [#allocation3], 1
    %s2361 = scalar_lea.sflag [#allocation3], 1
    %2362 = vsyncpa %s2361, 1

</llo_original>
